<compile_context>
chip_gen: v7x
topology: tpu7x:2x2x1
jax: 0.10.0
libtpu: 0.0.40
codegen_flags: <defaults>
</compile_context>

<pallas_src>
import functools

import jax
import jax.numpy as jnp
import numpy as np
from jax import lax
from jax.experimental import pallas as pl
from jax.experimental.pallas import tpu as pltpu

_LANE = 128
_COL_MULT = 256   # pad the patch M axis to this multiple: lane-dense stores
                  # and evenly divisible by a 2-step parallel grid.


# ----------------------------------------------------------------------------
# Pallas kernels
# ----------------------------------------------------------------------------
def _convbn_relu_kernel(p_ref, w_ref, m_ref, g_ref, b_ref, o_ref, *,
                        eps, inv_count, cout, n_phase):
    """(n_phase*Cout, K) @ (K, M) matmul -> masked batch-stats BN -> ReLU.

    p_ref : (K, M)             bf16 shared im2col patches (M lane-dense)
    w_ref : (n_phase*Cout, K)  bf16 weights, rows ordered (phase, cout)
    m_ref : (n_phase, M)       f32 {0,1} validity mask per phase/column
    g_ref, b_ref : (Cout, 1)   f32 BatchNorm gamma / beta
    o_ref : (n_phase*Cout, M)  bf16 output
    """
    acc = jnp.dot(w_ref[...], p_ref[...], preferred_element_type=jnp.float32)
    mask = m_ref[...]
    s = jnp.zeros((cout, 1), jnp.float32)
    ss = jnp.zeros((cout, 1), jnp.float32)
    for p in range(n_phase):                       # static unroll over phases
        a = acc[p * cout:(p + 1) * cout, :]
        am = a * mask[p:p + 1, :]
        s = s + jnp.sum(am, axis=1, keepdims=True)
        ss = ss + jnp.sum(am * a, axis=1, keepdims=True)
    mean = s * inv_count
    var = jnp.maximum(ss * inv_count - mean * mean, 0.0)
    scale = lax.rsqrt(var + eps) * g_ref[...]      # rsqrt -> EUP slot
    shift = b_ref[...] - mean * scale
    for p in range(n_phase):
        a = acc[p * cout:(p + 1) * cout, :]
        o_ref[p * cout:(p + 1) * cout, :] = jnp.maximum(
            a * scale + shift, 0.0).astype(o_ref.dtype)


def convbn_relu(patches, w_mat, gamma, beta, mask, count, *, eps=1e-5):
    """Fused ConvTranspose-as-matmul + BatchNorm(batch stats) + ReLU.

    Single block: every layer here is at most a few hundred KiB of VMEM.
    TODO(synk): tile over M (accumulate sum/sum^2 in scratch, finalize pass)
    before scaling batch/features_g.
    """
    K, Mp = patches.shape
    rows = w_mat.shape[0]
    cout = int(gamma.shape[0])
    n_phase = rows // cout
    kernel = functools.partial(_convbn_relu_kernel, eps=eps,
                               inv_count=1.0 / count, cout=cout,
                               n_phase=n_phase)
    return pl.pallas_call(
        kernel,
        out_shape=jax.ShapeDtypeStruct((rows, Mp), jnp.bfloat16),
    )(patches.astype(jnp.bfloat16), w_mat.astype(jnp.bfloat16),
      mask,
      gamma.reshape(cout, 1).astype(jnp.float32),
      beta.reshape(cout, 1).astype(jnp.float32))


def _conv_bias_tanh_kernel(p_ref, w_ref, b_ref, o_ref):
    acc = jnp.dot(w_ref[...], p_ref[...], preferred_element_type=jnp.float32)
    o_ref[...] = jnp.tanh(acc + b_ref[...])


def _multi_tensorcore():
    try:
        kind = jax.devices()[0].device_kind.lower()
    except Exception:
        return False
    return any(t in kind for t in ("v7", "7x", "v4", "v5p"))


def conv_bias_tanh(patches, w_mat, bias):
    """Final layer: matmul + bias + tanh, tiled over M with lane-dense blocks."""
    K, Mp = patches.shape
    rows = w_mat.shape[0]
    n_phase = rows // int(bias.shape[0])
    # 1 grid step on single-TC chips (v5e/v6e); 2 parallel steps on multi-TC.
    grid_m = 2 if (_multi_tensorcore() and Mp % (2 * _LANE) == 0) else 1
    tm = Mp // grid_m
    b_full = jnp.tile(bias.astype(jnp.float32), n_phase).reshape(rows, 1)
    return pl.pallas_call(
        _conv_bias_tanh_kernel,
        out_shape=jax.ShapeDtypeStruct((rows, Mp), jnp.float32),
        grid=(grid_m,),
        in_specs=[
            pl.BlockSpec((K, tm), lambda i: (0, i)),       # patch tile
            pl.BlockSpec((rows, K), lambda i: (0, 0)),     # full weight
            pl.BlockSpec((rows, 1), lambda i: (0, 0)),     # bias column
        ],
        out_specs=pl.BlockSpec((rows, tm), lambda i: (0, i)),
        compiler_params=pltpu.CompilerParams(dimension_semantics=("parallel",)),
    )(patches.astype(jnp.bfloat16), w_mat.astype(jnp.bfloat16), b_full)


# ----------------------------------------------------------------------------
# Patch / weight / mask builders (channel-major activations, no transposes)
# ----------------------------------------------------------------------------
def _pad_cols(a, mult=_COL_MULT):
    m = a.shape[-1]
    mp = -(-m // mult) * mult
    if mp != m:
        a = jnp.pad(a, ((0, 0), (0, mp - m)))
    return a


def _convT_s1_patches(h_cm, k, p):
    """Stride-1 ConvTranspose im2col on a channel-major (Cin, N, H, W) input.

    Returns (Cin*k*k, M_pad) patches; K ordered (ci, dy, dx), M ordered
    (n, ho, wo).  Only used for layer 1 (1x1 spatial input)."""
    Cin, N, H, W = h_cm.shape
    pad = k - 1 - p
    Ho, Wo = H + k - 2 * p - 1, W + k - 2 * p - 1
    hp = jnp.pad(h_cm, ((0, 0), (0, 0), (pad, pad), (pad, pad)))
    taps = [hp[:, :, dy:dy + Ho, dx:dx + Wo]
            for dy in range(k) for dx in range(k)]
    pt = jnp.stack(taps, axis=1).reshape(Cin * k * k, N * Ho * Wo)
    return _pad_cols(pt), (N, Ho, Wo)


def _convT_s1_weight_matrix(w):
    """(Cin, Cout, k, k) ConvTranspose weight -> (Cout, Cin*k*k) direct-conv
    matrix matching the (ci, dy, dx) patch column order."""
    Cin, Cout, k, _ = w.shape
    return w[:, :, ::-1, ::-1].transpose(1, 0, 2, 3).reshape(Cout, Cin * k * k)


def _subpix_patches(h_cm):
    """Shared sub-pixel patches for ConvTranspose(k=4, s=2, p=1).

    All four output phases read the same 2x2 windows of the 1-padded input,
    so one (Cin*4, M') slab serves a single (4*Cout, Cin*4) matmul.
    M' = N*(H+1)*(W+1) window positions ordered (n, wy, wx); K ordered
    (ci, dy, dx) with dy, dx in {0, 1}.
    TODO(synk): form these taps in-kernel from a VMEM-resident activation."""
    Cin, N, H, W = h_cm.shape
    hp = jnp.pad(h_cm, ((0, 0), (0, 0), (1, 1), (1, 1)))
    taps = [hp[:, :, dy:dy + H + 1, dx:dx + W + 1]
            for dy in range(2) for dx in range(2)]
    pt = jnp.stack(taps, axis=1).reshape(Cin * 4, N * (H + 1) * (W + 1))
    return _pad_cols(pt), (N, H, W)


def _subpix_weight_matrix(w):
    """(Cin, Cout, 4, 4) ConvTranspose weight -> (4*Cout, Cin*4) sub-pixel
    matrix.  Row blocks ordered by phase (py, px); phase (py, px) / tap
    (dy, dx) picks kernel element (3 - py - 2*dy, 3 - px - 2*dx)."""
    Cin, Cout = w.shape[0], w.shape[1]
    blocks = []
    for py in range(2):
        for px in range(2):
            cols = []
            for dy in range(2):
                for dx in range(2):
                    cols.append(w[:, :, 3 - py - 2 * dy, 3 - px - 2 * dx])
            blocks.append(jnp.stack(cols, axis=1).reshape(Cin * 4, Cout).T)
    return jnp.concatenate(blocks, axis=0)


def _subpix_mask(N, H, W, m_pad):
    """(4, m_pad) {0,1} mask of the window positions that are real outputs for
    each phase (py==0 drops wy==H, py==1 drops wy==0; same along x).
    Columns beyond N*(H+1)*(W+1) (M padding) are always masked out."""
    wy, wx = np.arange(H + 1), np.arange(W + 1)
    rows = []
    for py in range(2):
        my = (wy < H) if py == 0 else (wy >= 1)
        for px in range(2):
            mx = (wx < W) if px == 0 else (wx >= 1)
            m = np.outer(my, mx).astype(np.float32)
            rows.append(np.broadcast_to(m[None], (N, H + 1, W + 1)).reshape(-1))
    m = np.stack(rows, axis=0)
    out = np.zeros((4, m_pad), np.float32)
    out[:, :m.shape[1]] = m
    return jnp.asarray(out)


def _ones_mask(m_real, m_pad):
    m = np.zeros((1, m_pad), np.float32)
    m[:, :m_real] = 1.0
    return jnp.asarray(m)


def _pixel_shuffle(y, cout, N, H, W):
    """(4*Cout, M_pad) phase-major kernel output -> channel-major
    (Cout, N, 2H, 2W): crop each phase's valid window range and interleave."""
    Mp = N * (H + 1) * (W + 1)
    y4 = y[:, :Mp].reshape(2, 2, cout, N, H + 1, W + 1)
    phases = []
    for py in range(2):
        sy = slice(0, H) if py == 0 else slice(1, H + 1)
        for px in range(2):
            sx = slice(0, W) if px == 0 else slice(1, W + 1)
            phases.append(y4[py, px][:, :, sy, sx])
    s = jnp.stack(phases, axis=0).reshape(2, 2, cout, N, H, W)
    return s.transpose(2, 3, 4, 0, 5, 1).reshape(cout, N, 2 * H, 2 * W)


# ----------------------------------------------------------------------------
# Generator forward
# ----------------------------------------------------------------------------
def generator_forward(x, params):
    N = x.shape[0]
    # ---- layer 1: ConvTranspose(k=4, s=1, p=0) + BN + ReLU ------------------
    h_cm = x.astype(jnp.bfloat16).transpose(1, 0, 2, 3)          # (Cz, N, 1, 1)
    patches, (_, Ho, Wo) = _convT_s1_patches(h_cm, 4, 0)
    cout = params["w1"].shape[1]
    y = convbn_relu(patches, _convT_s1_weight_matrix(params["w1"]),
                    params["gamma1"], params["beta1"],
                    _ones_mask(N * Ho * Wo, patches.shape[1]), N * Ho * Wo)
    h_cm = y[:, :N * Ho * Wo].reshape(cout, N, Ho, Wo)           # channel-major bf16
    # ---- layers 2-4: sub-pixel ConvTranspose(k=4, s=2, p=1) + BN + ReLU -----
    for idx in range(2, 5):
        w = params[f"w{idx}"]
        cout = w.shape[1]
        patches, (_, H, W) = _subpix_patches(h_cm)
        y = convbn_relu(patches, _subpix_weight_matrix(w),
                        params[f"gamma{idx}"], params[f"beta{idx}"],
                        _subpix_mask(N, H, W, patches.shape[1]),
                        4 * N * H * W)
        h_cm = _pixel_shuffle(y, cout, N, H, W)
    # ---- layer 5: sub-pixel ConvTranspose + bias + tanh ---------------------
    patches, (_, H, W) = _subpix_patches(h_cm)
    y = conv_bias_tanh(patches, _subpix_weight_matrix(params["w5"]),
                       params["b5"])
    out_cm = _pixel_shuffle(y, 3, N, H, W)
    return out_cm.transpose(1, 0, 2, 3)                          # back to NCHW


# ----------------------------------------------------------------------------
# Pure-JAX reference (for correctness check)
# ----------------------------------------------------------------------------
def _conv_transpose_ref(x, w, bias, stride, padding):
    k = w.shape[2]
    w_conv = jnp.flip(w, axis=(2, 3)).transpose(1, 0, 2, 3)      # (Cout, Cin, k, k)
    p = k - 1 - padding
    out = lax.conv_general_dilated(
        x, w_conv, window_strides=(1, 1), padding=((p, p), (p, p)),
        lhs_dilation=(stride, stride),
        dimension_numbers=("NCHW", "OIHW", "NCHW"),
        precision=lax.Precision.HIGHEST)
    return out + bias.reshape(1, -1, 1, 1)


def _bn_relu_ref(x, g, b, eps=1e-5):
    mean = x.mean(axis=(0, 2, 3), keepdims=True)
    var = ((x - mean) ** 2).mean(axis=(0, 2, 3), keepdims=True)
    y = (x - mean) / jnp.sqrt(var + eps) * g.reshape(1, -1, 1, 1) + b.reshape(1, -1, 1, 1)
    return jnp.maximum(y, 0.0)


def generator_ref(x, params):
    strides = (1, 2, 2, 2)
    pads = (0, 1, 1, 1)
    h = x
    for idx in range(4):
        w = params[f"w{idx + 1}"]
        cout = w.shape[1]
        h = _conv_transpose_ref(h, w, jnp.zeros((cout,), jnp.float32),
                                strides[idx], pads[idx])
        h = _bn_relu_ref(h, params[f"gamma{idx + 1}"], params[f"beta{idx + 1}"])
    h = _conv_transpose_ref(h, params["w5"], params["b5"], 2, 1)
    return jnp.tanh(h)


# ----------------------------------------------------------------------------
# Parameter init (deterministic, DCGAN-style N(0, 0.02) weights)
# ----------------------------------------------------------------------------
def init_params(key, channels_noise, features_g):
    fg = features_g
    chans = [channels_noise, fg * 16, fg * 8, fg * 4, fg * 2, 3]
    params = {}
    keys = jax.random.split(key, 16)
    ki = 0
    for layer in range(5):
        cin, cout = chans[layer], chans[layer + 1]
        params[f"w{layer + 1}"] = 0.02 * jax.random.normal(
            keys[ki], (cin, cout, 4, 4), jnp.float32)
        ki += 1
        if layer < 4:
            params[f"gamma{layer + 1}"] = 1.0 + 0.1 * jax.random.normal(
                keys[ki], (cout,), jnp.float32)
            ki += 1
            params[f"beta{layer + 1}"] = 0.1 * jax.random.normal(
                keys[ki], (cout,), jnp.float32)
            ki += 1
    params["b5"] = 0.1 * jax.random.normal(keys[ki], (3,), jnp.float32)
    return params


if __name__ == "__main__":
    batch = 2
    channels_noise = 8
    features_g = 4

    key = jax.random.PRNGKey(0)
    k_x, k_p = jax.random.split(key)
    x = jax.random.normal(k_x, (batch, channels_noise, 1, 1), jnp.float32)
    params = init_params(k_p, channels_noise, features_g)

    out = jax.block_until_ready(jax.jit(generator_forward)(x, params))
    assert out.shape == (batch, 3, 64, 64), out.shape

    ref = jax.block_until_ready(generator_ref(x, params))
    np.testing.assert_allclose(np.asarray(out), np.asarray(ref),
                               atol=2e-2, rtol=2e-2)

    print("KERNEL_OK")
</pallas_src>

<mosaic_0001>
module attributes {stable_mosaic.version = 11 : i64} {
  func.func @_convbn_relu_kernel(%arg0: memref<128x256xbf16, #tpu.memory_space<vmem>>, %arg1: memref<64x128xbf16, #tpu.memory_space<vmem>>, %arg2: memref<1x256xf32, #tpu.memory_space<vmem>>, %arg3: memref<64x1xf32, #tpu.memory_space<vmem>>, %arg4: memref<64x1xf32, #tpu.memory_space<vmem>>, %arg5: memref<64x256xbf16, #tpu.memory_space<vmem>>) attributes {dimension_semantics = [], scalar_prefetch = 0 : i64, scratch_operands = 0 : i64, tpu.core_type = #tpu.core_type<tc>} {
    %c0 = arith.constant 0 : index
    %c0_0 = arith.constant 0 : index
    %0 = vector.load %arg1[%c0, %c0_0] : memref<64x128xbf16, #tpu.memory_space<vmem>>, vector<64x128xbf16>
    %c0_1 = arith.constant 0 : index
    %c0_2 = arith.constant 0 : index
    %1 = vector.load %arg0[%c0_1, %c0_2] : memref<128x256xbf16, #tpu.memory_space<vmem>>, vector<128x256xbf16>
    %cst = arith.constant dense<0.000000e+00> : vector<64x256xf32>
    %2 = tpu.matmul %0, %1, %cst {dimension_numbers = #tpu.dot_dimension_numbers<[1], [0], [0], [1], [0, 0, 1, 1], [], []>} : vector<64x128xbf16>, vector<128x256xbf16>, vector<64x256xf32> -> vector<64x256xf32>
    %c0_3 = arith.constant 0 : index
    %c0_4 = arith.constant 0 : index
    %3 = vector.load %arg2[%c0_3, %c0_4] : memref<1x256xf32, #tpu.memory_space<vmem>>, vector<1x256xf32>
    %cst_5 = arith.constant 0.000000e+00 : f32
    %4 = vector.broadcast %cst_5 : f32 to vector<64x1xf32>
    %cst_6 = arith.constant 0.000000e+00 : f32
    %5 = vector.broadcast %cst_6 : f32 to vector<64x1xf32>
    %6 = vector.broadcast %3 : vector<1x256xf32> to vector<64x256xf32>
    %7 = arith.mulf %2, %6 : vector<64x256xf32>
    %cst_7 = arith.constant dense<0.000000e+00> : vector<64xf32>
    %8 = vector.multi_reduction <add>, %7, %cst_7 [1] : vector<64x256xf32> to vector<64xf32>
    %9 = vector.shape_cast %8 : vector<64xf32> to vector<64x1xf32>
    %10 = arith.addf %4, %9 : vector<64x1xf32>
    %11 = arith.mulf %7, %2 : vector<64x256xf32>
    %cst_8 = arith.constant dense<0.000000e+00> : vector<64xf32>
    %12 = vector.multi_reduction <add>, %11, %cst_8 [1] : vector<64x256xf32> to vector<64xf32>
    %13 = vector.shape_cast %12 : vector<64xf32> to vector<64x1xf32>
    %14 = arith.addf %5, %13 : vector<64x1xf32>
    %cst_9 = arith.constant 3.125000e-02 : f32
    %15 = vector.broadcast %cst_9 : f32 to vector<64x1xf32>
    %16 = arith.mulf %10, %15 : vector<64x1xf32>
    %cst_10 = arith.constant 3.125000e-02 : f32
    %17 = vector.broadcast %cst_10 : f32 to vector<64x1xf32>
    %18 = arith.mulf %14, %17 : vector<64x1xf32>
    %19 = arith.mulf %16, %16 : vector<64x1xf32>
    %20 = arith.subf %18, %19 : vector<64x1xf32>
    %cst_11 = arith.constant 0.000000e+00 : f32
    %21 = vector.broadcast %cst_11 : f32 to vector<64x1xf32>
    %22 = arith.maximumf %20, %21 : vector<64x1xf32>
    %cst_12 = arith.constant 9.99999974E-6 : f32
    %23 = vector.broadcast %cst_12 : f32 to vector<64x1xf32>
    %24 = arith.addf %22, %23 : vector<64x1xf32>
    %25 = math.rsqrt %24 : vector<64x1xf32>
    %c0_13 = arith.constant 0 : index
    %c0_14 = arith.constant 0 : index
    %26 = vector.load %arg3[%c0_13, %c0_14] : memref<64x1xf32, #tpu.memory_space<vmem>>, vector<64x1xf32>
    %27 = arith.mulf %25, %26 : vector<64x1xf32>
    %c0_15 = arith.constant 0 : index
    %c0_16 = arith.constant 0 : index
    %28 = vector.load %arg4[%c0_15, %c0_16] : memref<64x1xf32, #tpu.memory_space<vmem>>, vector<64x1xf32>
    %29 = arith.mulf %16, %27 : vector<64x1xf32>
    %30 = arith.subf %28, %29 : vector<64x1xf32>
    %31 = vector.broadcast %27 : vector<64x1xf32> to vector<64x256xf32>
    %32 = arith.mulf %2, %31 : vector<64x256xf32>
    %33 = vector.broadcast %30 : vector<64x1xf32> to vector<64x256xf32>
    %34 = arith.addf %32, %33 : vector<64x256xf32>
    %cst_17 = arith.constant 0.000000e+00 : f32
    %35 = vector.broadcast %cst_17 : f32 to vector<64x256xf32>
    %36 = arith.maximumf %34, %35 : vector<64x256xf32>
    %37 = arith.truncf %36 : vector<64x256xf32> to vector<64x256xbf16>
    %c0_18 = arith.constant 0 : index
    %c0_19 = arith.constant 0 : index
    %38 = vector.load %arg5[%c0_18, %c0_19] : memref<64x256xbf16, #tpu.memory_space<vmem>>, vector<64x256xbf16>
    tpu.vector_store %arg5[%c0_18, %c0_19], %37 {strides = array<i32>} : memref<64x256xbf16, #tpu.memory_space<vmem>>, vector<64x256xbf16>,
    return
  }
}

module attributes {stable_mosaic.version = 11 : i64} {
  func.func @_convbn_relu_kernel(%arg0: memref<256x256xbf16, #tpu.memory_space<vmem>>, %arg1: memref<128x256xbf16, #tpu.memory_space<vmem>>, %arg2: memref<4x256xf32, #tpu.memory_space<vmem>>, %arg3: memref<32x1xf32, #tpu.memory_space<vmem>>, %arg4: memref<32x1xf32, #tpu.memory_space<vmem>>, %arg5: memref<128x256xbf16, #tpu.memory_space<vmem>>) attributes {dimension_semantics = [], scalar_prefetch = 0 : i64, scratch_operands = 0 : i64, tpu.core_type = #tpu.core_type<tc>} {
    %c0 = arith.constant 0 : index
    %c0_0 = arith.constant 0 : index
    %0 = vector.load %arg1[%c0, %c0_0] : memref<128x256xbf16, #tpu.memory_space<vmem>>, vector<128x256xbf16>
    %c0_1 = arith.constant 0 : index
    %c0_2 = arith.constant 0 : index
    %1 = vector.load %arg0[%c0_1, %c0_2] : memref<256x256xbf16, #tpu.memory_space<vmem>>, vector<256x256xbf16>
    %cst = arith.constant dense<0.000000e+00> : vector<128x256xf32>
    %2 = tpu.matmul %0, %1, %cst {dimension_numbers = #tpu.dot_dimension_numbers<[1], [0], [0], [1], [0, 0, 1, 1], [], []>} : vector<128x256xbf16>, vector<256x256xbf16>, vector<128x256xf32> -> vector<128x256xf32>
    %c0_3 = arith.constant 0 : index
    %c0_4 = arith.constant 0 : index
    %3 = vector.load %arg2[%c0_3, %c0_4] : memref<4x256xf32, #tpu.memory_space<vmem>>, vector<4x256xf32>
    %cst_5 = arith.constant 0.000000e+00 : f32
    %4 = vector.broadcast %cst_5 : f32 to vector<32x1xf32>
    %cst_6 = arith.constant 0.000000e+00 : f32
    %5 = vector.broadcast %cst_6 : f32 to vector<32x1xf32>
    %6 = vector.extract_strided_slice %2 {offsets = [0, 0], sizes = [32, 256], strides = [1, 1]} : vector<128x256xf32> to vector<32x256xf32>
    %7 = vector.extract_strided_slice %3 {offsets = [0, 0], sizes = [1, 256], strides = [1, 1]} : vector<4x256xf32> to vector<1x256xf32>
    %8 = vector.broadcast %7 : vector<1x256xf32> to vector<32x256xf32>
    %9 = arith.mulf %6, %8 : vector<32x256xf32>
    %cst_7 = arith.constant dense<0.000000e+00> : vector<32xf32>
    %10 = vector.multi_reduction <add>, %9, %cst_7 [1] : vector<32x256xf32> to vector<32xf32>
    %11 = vector.shape_cast %10 : vector<32xf32> to vector<32x1xf32>
    %12 = arith.addf %4, %11 : vector<32x1xf32>
    %13 = arith.mulf %9, %6 : vector<32x256xf32>
    %cst_8 = arith.constant dense<0.000000e+00> : vector<32xf32>
    %14 = vector.multi_reduction <add>, %13, %cst_8 [1] : vector<32x256xf32> to vector<32xf32>
    %15 = vector.shape_cast %14 : vector<32xf32> to vector<32x1xf32>
    %16 = arith.addf %5, %15 : vector<32x1xf32>
    %17 = vector.extract_strided_slice %2 {offsets = [32, 0], sizes = [32, 256], strides = [1, 1]} : vector<128x256xf32> to vector<32x256xf32>
    %18 = vector.extract_strided_slice %3 {offsets = [1, 0], sizes = [1, 256], strides = [1, 1]} : vector<4x256xf32> to vector<1x256xf32>
    %19 = vector.broadcast %18 : vector<1x256xf32> to vector<32x256xf32>
    %20 = arith.mulf %17, %19 : vector<32x256xf32>
    %cst_9 = arith.constant dense<0.000000e+00> : vector<32xf32>
    %21 = vector.multi_reduction <add>, %20, %cst_9 [1] : vector<32x256xf32> to vector<32xf32>
    %22 = vector.shape_cast %21 : vector<32xf32> to vector<32x1xf32>
    %23 = arith.addf %12, %22 : vector<32x1xf32>
    %24 = arith.mulf %20, %17 : vector<32x256xf32>
    %cst_10 = arith.constant dense<0.000000e+00> : vector<32xf32>
    %25 = vector.multi_reduction <add>, %24, %cst_10 [1] : vector<32x256xf32> to vector<32xf32>
    %26 = vector.shape_cast %25 : vector<32xf32> to vector<32x1xf32>
    %27 = arith.addf %16, %26 : vector<32x1xf32>
    %28 = vector.extract_strided_slice %2 {offsets = [64, 0], sizes = [32, 256], strides = [1, 1]} : vector<128x256xf32> to vector<32x256xf32>
    %29 = vector.extract_strided_slice %3 {offsets = [2, 0], sizes = [1, 256], strides = [1, 1]} : vector<4x256xf32> to vector<1x256xf32>
    %30 = vector.broadcast %29 : vector<1x256xf32> to vector<32x256xf32>
    %31 = arith.mulf %28, %30 : vector<32x256xf32>
    %cst_11 = arith.constant dense<0.000000e+00> : vector<32xf32>
    %32 = vector.multi_reduction <add>, %31, %cst_11 [1] : vector<32x256xf32> to vector<32xf32>
    %33 = vector.shape_cast %32 : vector<32xf32> to vector<32x1xf32>
    %34 = arith.addf %23, %33 : vector<32x1xf32>
    %35 = arith.mulf %31, %28 : vector<32x256xf32>
    %cst_12 = arith.constant dense<0.000000e+00> : vector<32xf32>
    %36 = vector.multi_reduction <add>, %35, %cst_12 [1] : vector<32x256xf32> to vector<32xf32>
    %37 = vector.shape_cast %36 : vector<32xf32> to vector<32x1xf32>
    %38 = arith.addf %27, %37 : vector<32x1xf32>
    %39 = vector.extract_strided_slice %2 {offsets = [96, 0], sizes = [32, 256], strides = [1, 1]} : vector<128x256xf32> to vector<32x256xf32>
    %40 = vector.extract_strided_slice %3 {offsets = [3, 0], sizes = [1, 256], strides = [1, 1]} : vector<4x256xf32> to vector<1x256xf32>
    %41 = vector.broadcast %40 : vector<1x256xf32> to vector<32x256xf32>
    %42 = arith.mulf %39, %41 : vector<32x256xf32>
    %cst_13 = arith.constant dense<0.000000e+00> : vector<32xf32>
    %43 = vector.multi_reduction <add>, %42, %cst_13 [1] : vector<32x256xf32> to vector<32xf32>
    %44 = vector.shape_cast %43 : vector<32xf32> to vector<32x1xf32>
    %45 = arith.addf %34, %44 : vector<32x1xf32>
    %46 = arith.mulf %42, %39 : vector<32x256xf32>
    %cst_14 = arith.constant dense<0.000000e+00> : vector<32xf32>
    %47 = vector.multi_reduction <add>, %46, %cst_14 [1] : vector<32x256xf32> to vector<32xf32>
    %48 = vector.shape_cast %47 : vector<32xf32> to vector<32x1xf32>
    %49 = arith.addf %38, %48 : vector<32x1xf32>
    %cst_15 = arith.constant 7.812500e-03 : f32
    %50 = vector.broadcast %cst_15 : f32 to vector<32x1xf32>
    %51 = arith.mulf %45, %50 : vector<32x1xf32>
    %cst_16 = arith.constant 7.812500e-03 : f32
    %52 = vector.broadcast %cst_16 : f32 to vector<32x1xf32>
    %53 = arith.mulf %49, %52 : vector<32x1xf32>
    %54 = arith.mulf %51, %51 : vector<32x1xf32>
    %55 = arith.subf %53, %54 : vector<32x1xf32>
    %cst_17 = arith.constant 0.000000e+00 : f32
    %56 = vector.broadcast %cst_17 : f32 to vector<32x1xf32>
    %57 = arith.maximumf %55, %56 : vector<32x1xf32>
    %cst_18 = arith.constant 9.99999974E-6 : f32
    %58 = vector.broadcast %cst_18 : f32 to vector<32x1xf32>
    %59 = arith.addf %57, %58 : vector<32x1xf32>
    %60 = math.rsqrt %59 : vector<32x1xf32>
    %c0_19 = arith.constant 0 : index
    %c0_20 = arith.constant 0 : index
    %61 = vector.load %arg3[%c0_19, %c0_20] : memref<32x1xf32, #tpu.memory_space<vmem>>, vector<32x1xf32>
    %62 = arith.mulf %60, %61 : vector<32x1xf32>
    %c0_21 = arith.constant 0 : index
    %c0_22 = arith.constant 0 : index
    %63 = vector.load %arg4[%c0_21, %c0_22] : memref<32x1xf32, #tpu.memory_space<vmem>>, vector<32x1xf32>
    %64 = arith.mulf %51, %62 : vector<32x1xf32>
    %65 = arith.subf %63, %64 : vector<32x1xf32>
    %66 = vector.extract_strided_slice %2 {offsets = [0, 0], sizes = [32, 256], strides = [1, 1]} : vector<128x256xf32> to vector<32x256xf32>
    %67 = vector.broadcast %62 : vector<32x1xf32> to vector<32x256xf32>
    %68 = arith.mulf %66, %67 : vector<32x256xf32>
    %69 = vector.broadcast %65 : vector<32x1xf32> to vector<32x256xf32>
    %70 = arith.addf %68, %69 : vector<32x256xf32>
    %cst_23 = arith.constant 0.000000e+00 : f32
    %71 = vector.broadcast %cst_23 : f32 to vector<32x256xf32>
    %72 = arith.maximumf %70, %71 : vector<32x256xf32>
    %73 = arith.truncf %72 : vector<32x256xf32> to vector<32x256xbf16>
    %c0_24 = arith.constant 0 : index
    %c0_25 = arith.constant 0 : index
    %74 = vector.load %arg5[%c0_24, %c0_25] : memref<128x256xbf16, #tpu.memory_space<vmem>>, vector<32x256xbf16>
    tpu.vector_store %arg5[%c0_24, %c0_25], %73 {strides = array<i32>} : memref<128x256xbf16, #tpu.memory_space<vmem>>, vector<32x256xbf16>,
    %75 = vector.extract_strided_slice %2 {offsets = [32, 0], sizes = [32, 256], strides = [1, 1]} : vector<128x256xf32> to vector<32x256xf32>
    %76 = vector.broadcast %62 : vector<32x1xf32> to vector<32x256xf32>
    %77 = arith.mulf %75, %76 : vector<32x256xf32>
    %78 = vector.broadcast %65 : vector<32x1xf32> to vector<32x256xf32>
    %79 = arith.addf %77, %78 : vector<32x256xf32>
    %cst_26 = arith.constant 0.000000e+00 : f32
    %80 = vector.broadcast %cst_26 : f32 to vector<32x256xf32>
    %81 = arith.maximumf %79, %80 : vector<32x256xf32>
    %82 = arith.truncf %81 : vector<32x256xf32> to vector<32x256xbf16>
    %c32 = arith.constant 32 : index
    %c0_27 = arith.constant 0 : index
    %83 = vector.load %arg5[%c32, %c0_27] : memref<128x256xbf16, #tpu.memory_space<vmem>>, vector<32x256xbf16>
    tpu.vector_store %arg5[%c32, %c0_27], %82 {strides = array<i32>} : memref<128x256xbf16, #tpu.memory_space<vmem>>, vector<32x256xbf16>,
    %84 = vector.extract_strided_slice %2 {offsets = [64, 0], sizes = [32, 256], strides = [1, 1]} : vector<128x256xf32> to vector<32x256xf32>
    %85 = vector.broadcast %62 : vector<32x1xf32> to vector<32x256xf32>
    %86 = arith.mulf %84, %85 : vector<32x256xf32>
    %87 = vector.broadcast %65 : vector<32x1xf32> to vector<32x256xf32>
    %88 = arith.addf %86, %87 : vector<32x256xf32>
    %cst_28 = arith.constant 0.000000e+00 : f32
    %89 = vector.broadcast %cst_28 : f32 to vector<32x256xf32>
    %90 = arith.maximumf %88, %89 : vector<32x256xf32>
    %91 = arith.truncf %90 : vector<32x256xf32> to vector<32x256xbf16>
    %c64 = arith.constant 64 : index
    %c0_29 = arith.constant 0 : index
    %92 = vector.load %arg5[%c64, %c0_29] : memref<128x256xbf16, #tpu.memory_space<vmem>>, vector<32x256xbf16>
    tpu.vector_store %arg5[%c64, %c0_29], %91 {strides = array<i32>} : memref<128x256xbf16, #tpu.memory_space<vmem>>, vector<32x256xbf16>,
    %93 = vector.extract_strided_slice %2 {offsets = [96, 0], sizes = [32, 256], strides = [1, 1]} : vector<128x256xf32> to vector<32x256xf32>
    %94 = vector.broadcast %62 : vector<32x1xf32> to vector<32x256xf32>
    %95 = arith.mulf %93, %94 : vector<32x256xf32>
    %96 = vector.broadcast %65 : vector<32x1xf32> to vector<32x256xf32>
    %97 = arith.addf %95, %96 : vector<32x256xf32>
    %cst_30 = arith.constant 0.000000e+00 : f32
    %98 = vector.broadcast %cst_30 : f32 to vector<32x256xf32>
    %99 = arith.maximumf %97, %98 : vector<32x256xf32>
    %100 = arith.truncf %99 : vector<32x256xf32> to vector<32x256xbf16>
    %c96 = arith.constant 96 : index
    %c0_31 = arith.constant 0 : index
    %101 = vector.load %arg5[%c96, %c0_31] : memref<128x256xbf16, #tpu.memory_space<vmem>>, vector<32x256xbf16>
    tpu.vector_store %arg5[%c96, %c0_31], %100 {strides = array<i32>} : memref<128x256xbf16, #tpu.memory_space<vmem>>, vector<32x256xbf16>,
    return
  }
}

module attributes {stable_mosaic.version = 11 : i64} {
  func.func @_convbn_relu_kernel(%arg0: memref<128x256xbf16, #tpu.memory_space<vmem>>, %arg1: memref<64x128xbf16, #tpu.memory_space<vmem>>, %arg2: memref<4x256xf32, #tpu.memory_space<vmem>>, %arg3: memref<16x1xf32, #tpu.memory_space<vmem>>, %arg4: memref<16x1xf32, #tpu.memory_space<vmem>>, %arg5: memref<64x256xbf16, #tpu.memory_space<vmem>>) attributes {dimension_semantics = [], scalar_prefetch = 0 : i64, scratch_operands = 0 : i64, tpu.core_type = #tpu.core_type<tc>} {
    %c0 = arith.constant 0 : index
    %c0_0 = arith.constant 0 : index
    %0 = vector.load %arg1[%c0, %c0_0] : memref<64x128xbf16, #tpu.memory_space<vmem>>, vector<64x128xbf16>
    %c0_1 = arith.constant 0 : index
    %c0_2 = arith.constant 0 : index
    %1 = vector.load %arg0[%c0_1, %c0_2] : memref<128x256xbf16, #tpu.memory_space<vmem>>, vector<128x256xbf16>
    %cst = arith.constant dense<0.000000e+00> : vector<64x256xf32>
    %2 = tpu.matmul %0, %1, %cst {dimension_numbers = #tpu.dot_dimension_numbers<[1], [0], [0], [1], [0, 0, 1, 1], [], []>} : vector<64x128xbf16>, vector<128x256xbf16>, vector<64x256xf32> -> vector<64x256xf32>
    %c0_3 = arith.constant 0 : index
    %c0_4 = arith.constant 0 : index
    %3 = vector.load %arg2[%c0_3, %c0_4] : memref<4x256xf32, #tpu.memory_space<vmem>>, vector<4x256xf32>
    %cst_5 = arith.constant 0.000000e+00 : f32
    %4 = vector.broadcast %cst_5 : f32 to vector<16x1xf32>
    %cst_6 = arith.constant 0.000000e+00 : f32
    %5 = vector.broadcast %cst_6 : f32 to vector<16x1xf32>
    %6 = vector.extract_strided_slice %2 {offsets = [0, 0], sizes = [16, 256], strides = [1, 1]} : vector<64x256xf32> to vector<16x256xf32>
    %7 = vector.extract_strided_slice %3 {offsets = [0, 0], sizes = [1, 256], strides = [1, 1]} : vector<4x256xf32> to vector<1x256xf32>
    %8 = vector.broadcast %7 : vector<1x256xf32> to vector<16x256xf32>
    %9 = arith.mulf %6, %8 : vector<16x256xf32>
    %cst_7 = arith.constant dense<0.000000e+00> : vector<16xf32>
    %10 = vector.multi_reduction <add>, %9, %cst_7 [1] : vector<16x256xf32> to vector<16xf32>
    %11 = vector.shape_cast %10 : vector<16xf32> to vector<16x1xf32>
    %12 = arith.addf %4, %11 : vector<16x1xf32>
    %13 = arith.mulf %9, %6 : vector<16x256xf32>
    %cst_8 = arith.constant dense<0.000000e+00> : vector<16xf32>
    %14 = vector.multi_reduction <add>, %13, %cst_8 [1] : vector<16x256xf32> to vector<16xf32>
    %15 = vector.shape_cast %14 : vector<16xf32> to vector<16x1xf32>
    %16 = arith.addf %5, %15 : vector<16x1xf32>
    %17 = vector.extract_strided_slice %2 {offsets = [16, 0], sizes = [16, 256], strides = [1, 1]} : vector<64x256xf32> to vector<16x256xf32>
    %18 = vector.extract_strided_slice %3 {offsets = [1, 0], sizes = [1, 256], strides = [1, 1]} : vector<4x256xf32> to vector<1x256xf32>
    %19 = vector.broadcast %18 : vector<1x256xf32> to vector<16x256xf32>
    %20 = arith.mulf %17, %19 : vector<16x256xf32>
    %cst_9 = arith.constant dense<0.000000e+00> : vector<16xf32>
    %21 = vector.multi_reduction <add>, %20, %cst_9 [1] : vector<16x256xf32> to vector<16xf32>
    %22 = vector.shape_cast %21 : vector<16xf32> to vector<16x1xf32>
    %23 = arith.addf %12, %22 : vector<16x1xf32>
    %24 = arith.mulf %20, %17 : vector<16x256xf32>
    %cst_10 = arith.constant dense<0.000000e+00> : vector<16xf32>
    %25 = vector.multi_reduction <add>, %24, %cst_10 [1] : vector<16x256xf32> to vector<16xf32>
    %26 = vector.shape_cast %25 : vector<16xf32> to vector<16x1xf32>
    %27 = arith.addf %16, %26 : vector<16x1xf32>
    %28 = vector.extract_strided_slice %2 {offsets = [32, 0], sizes = [16, 256], strides = [1, 1]} : vector<64x256xf32> to vector<16x256xf32>
    %29 = vector.extract_strided_slice %3 {offsets = [2, 0], sizes = [1, 256], strides = [1, 1]} : vector<4x256xf32> to vector<1x256xf32>
    %30 = vector.broadcast %29 : vector<1x256xf32> to vector<16x256xf32>
    %31 = arith.mulf %28, %30 : vector<16x256xf32>
    %cst_11 = arith.constant dense<0.000000e+00> : vector<16xf32>
    %32 = vector.multi_reduction <add>, %31, %cst_11 [1] : vector<16x256xf32> to vector<16xf32>
    %33 = vector.shape_cast %32 : vector<16xf32> to vector<16x1xf32>
    %34 = arith.addf %23, %33 : vector<16x1xf32>
    %35 = arith.mulf %31, %28 : vector<16x256xf32>
    %cst_12 = arith.constant dense<0.000000e+00> : vector<16xf32>
    %36 = vector.multi_reduction <add>, %35, %cst_12 [1] : vector<16x256xf32> to vector<16xf32>
    %37 = vector.shape_cast %36 : vector<16xf32> to vector<16x1xf32>
    %38 = arith.addf %27, %37 : vector<16x1xf32>
    %39 = vector.extract_strided_slice %2 {offsets = [48, 0], sizes = [16, 256], strides = [1, 1]} : vector<64x256xf32> to vector<16x256xf32>
    %40 = vector.extract_strided_slice %3 {offsets = [3, 0], sizes = [1, 256], strides = [1, 1]} : vector<4x256xf32> to vector<1x256xf32>
    %41 = vector.broadcast %40 : vector<1x256xf32> to vector<16x256xf32>
    %42 = arith.mulf %39, %41 : vector<16x256xf32>
    %cst_13 = arith.constant dense<0.000000e+00> : vector<16xf32>
    %43 = vector.multi_reduction <add>, %42, %cst_13 [1] : vector<16x256xf32> to vector<16xf32>
    %44 = vector.shape_cast %43 : vector<16xf32> to vector<16x1xf32>
    %45 = arith.addf %34, %44 : vector<16x1xf32>
    %46 = arith.mulf %42, %39 : vector<16x256xf32>
    %cst_14 = arith.constant dense<0.000000e+00> : vector<16xf32>
    %47 = vector.multi_reduction <add>, %46, %cst_14 [1] : vector<16x256xf32> to vector<16xf32>
    %48 = vector.shape_cast %47 : vector<16xf32> to vector<16x1xf32>
    %49 = arith.addf %38, %48 : vector<16x1xf32>
    %cst_15 = arith.constant 0.001953125 : f32
    %50 = vector.broadcast %cst_15 : f32 to vector<16x1xf32>
    %51 = arith.mulf %45, %50 : vector<16x1xf32>
    %cst_16 = arith.constant 0.001953125 : f32
    %52 = vector.broadcast %cst_16 : f32 to vector<16x1xf32>
    %53 = arith.mulf %49, %52 : vector<16x1xf32>
    %54 = arith.mulf %51, %51 : vector<16x1xf32>
    %55 = arith.subf %53, %54 : vector<16x1xf32>
    %cst_17 = arith.constant 0.000000e+00 : f32
    %56 = vector.broadcast %cst_17 : f32 to vector<16x1xf32>
    %57 = arith.maximumf %55, %56 : vector<16x1xf32>
    %cst_18 = arith.constant 9.99999974E-6 : f32
    %58 = vector.broadcast %cst_18 : f32 to vector<16x1xf32>
    %59 = arith.addf %57, %58 : vector<16x1xf32>
    %60 = math.rsqrt %59 : vector<16x1xf32>
    %c0_19 = arith.constant 0 : index
    %c0_20 = arith.constant 0 : index
    %61 = vector.load %arg3[%c0_19, %c0_20] : memref<16x1xf32, #tpu.memory_space<vmem>>, vector<16x1xf32>
    %62 = arith.mulf %60, %61 : vector<16x1xf32>
    %c0_21 = arith.constant 0 : index
    %c0_22 = arith.constant 0 : index
    %63 = vector.load %arg4[%c0_21, %c0_22] : memref<16x1xf32, #tpu.memory_space<vmem>>, vector<16x1xf32>
    %64 = arith.mulf %51, %62 : vector<16x1xf32>
    %65 = arith.subf %63, %64 : vector<16x1xf32>
    %66 = vector.extract_strided_slice %2 {offsets = [0, 0], sizes = [16, 256], strides = [1, 1]} : vector<64x256xf32> to vector<16x256xf32>
    %67 = vector.broadcast %62 : vector<16x1xf32> to vector<16x256xf32>
    %68 = arith.mulf %66, %67 : vector<16x256xf32>
    %69 = vector.broadcast %65 : vector<16x1xf32> to vector<16x256xf32>
    %70 = arith.addf %68, %69 : vector<16x256xf32>
    %cst_23 = arith.constant 0.000000e+00 : f32
    %71 = vector.broadcast %cst_23 : f32 to vector<16x256xf32>
    %72 = arith.maximumf %70, %71 : vector<16x256xf32>
    %73 = arith.truncf %72 : vector<16x256xf32> to vector<16x256xbf16>
    %c0_24 = arith.constant 0 : index
    %c0_25 = arith.constant 0 : index
    %74 = vector.load %arg5[%c0_24, %c0_25] : memref<64x256xbf16, #tpu.memory_space<vmem>>, vector<16x256xbf16>
    tpu.vector_store %arg5[%c0_24, %c0_25], %73 {strides = array<i32>} : memref<64x256xbf16, #tpu.memory_space<vmem>>, vector<16x256xbf16>,
    %75 = vector.extract_strided_slice %2 {offsets = [16, 0], sizes = [16, 256], strides = [1, 1]} : vector<64x256xf32> to vector<16x256xf32>
    %76 = vector.broadcast %62 : vector<16x1xf32> to vector<16x256xf32>
    %77 = arith.mulf %75, %76 : vector<16x256xf32>
    %78 = vector.broadcast %65 : vector<16x1xf32> to vector<16x256xf32>
    %79 = arith.addf %77, %78 : vector<16x256xf32>
    %cst_26 = arith.constant 0.000000e+00 : f32
    %80 = vector.broadcast %cst_26 : f32 to vector<16x256xf32>
    %81 = arith.maximumf %79, %80 : vector<16x256xf32>
    %82 = arith.truncf %81 : vector<16x256xf32> to vector<16x256xbf16>
    %c16 = arith.constant 16 : index
    %c0_27 = arith.constant 0 : index
    %83 = vector.load %arg5[%c16, %c0_27] : memref<64x256xbf16, #tpu.memory_space<vmem>>, vector<16x256xbf16>
    tpu.vector_store %arg5[%c16, %c0_27], %82 {strides = array<i32>} : memref<64x256xbf16, #tpu.memory_space<vmem>>, vector<16x256xbf16>,
    %84 = vector.extract_strided_slice %2 {offsets = [32, 0], sizes = [16, 256], strides = [1, 1]} : vector<64x256xf32> to vector<16x256xf32>
    %85 = vector.broadcast %62 : vector<16x1xf32> to vector<16x256xf32>
    %86 = arith.mulf %84, %85 : vector<16x256xf32>
    %87 = vector.broadcast %65 : vector<16x1xf32> to vector<16x256xf32>
    %88 = arith.addf %86, %87 : vector<16x256xf32>
    %cst_28 = arith.constant 0.000000e+00 : f32
    %89 = vector.broadcast %cst_28 : f32 to vector<16x256xf32>
    %90 = arith.maximumf %88, %89 : vector<16x256xf32>
    %91 = arith.truncf %90 : vector<16x256xf32> to vector<16x256xbf16>
    %c32 = arith.constant 32 : index
    %c0_29 = arith.constant 0 : index
    %92 = vector.load %arg5[%c32, %c0_29] : memref<64x256xbf16, #tpu.memory_space<vmem>>, vector<16x256xbf16>
    tpu.vector_store %arg5[%c32, %c0_29], %91 {strides = array<i32>} : memref<64x256xbf16, #tpu.memory_space<vmem>>, vector<16x256xbf16>,
    %93 = vector.extract_strided_slice %2 {offsets = [48, 0], sizes = [16, 256], strides = [1, 1]} : vector<64x256xf32> to vector<16x256xf32>
    %94 = vector.broadcast %62 : vector<16x1xf32> to vector<16x256xf32>
    %95 = arith.mulf %93, %94 : vector<16x256xf32>
    %96 = vector.broadcast %65 : vector<16x1xf32> to vector<16x256xf32>
    %97 = arith.addf %95, %96 : vector<16x256xf32>
    %cst_30 = arith.constant 0.000000e+00 : f32
    %98 = vector.broadcast %cst_30 : f32 to vector<16x256xf32>
    %99 = arith.maximumf %97, %98 : vector<16x256xf32>
    %100 = arith.truncf %99 : vector<16x256xf32> to vector<16x256xbf16>
    %c48 = arith.constant 48 : index
    %c0_31 = arith.constant 0 : index
    %101 = vector.load %arg5[%c48, %c0_31] : memref<64x256xbf16, #tpu.memory_space<vmem>>, vector<16x256xbf16>
    tpu.vector_store %arg5[%c48, %c0_31], %100 {strides = array<i32>} : memref<64x256xbf16, #tpu.memory_space<vmem>>, vector<16x256xbf16>,
    return
  }
}

module attributes {stable_mosaic.version = 11 : i64} {
  func.func @_convbn_relu_kernel(%arg0: memref<64x768xbf16, #tpu.memory_space<vmem>>, %arg1: memref<32x64xbf16, #tpu.memory_space<vmem>>, %arg2: memref<4x768xf32, #tpu.memory_space<vmem>>, %arg3: memref<8x1xf32, #tpu.memory_space<vmem>>, %arg4: memref<8x1xf32, #tpu.memory_space<vmem>>, %arg5: memref<32x768xbf16, #tpu.memory_space<vmem>>) attributes {dimension_semantics = [], scalar_prefetch = 0 : i64, scratch_operands = 0 : i64, tpu.core_type = #tpu.core_type<tc>} {
    %c0 = arith.constant 0 : index
    %c0_0 = arith.constant 0 : index
    %0 = vector.load %arg1[%c0, %c0_0] : memref<32x64xbf16, #tpu.memory_space<vmem>>, vector<32x64xbf16>
    %c0_1 = arith.constant 0 : index
    %c0_2 = arith.constant 0 : index
    %1 = vector.load %arg0[%c0_1, %c0_2] : memref<64x768xbf16, #tpu.memory_space<vmem>>, vector<64x768xbf16>
    %cst = arith.constant dense<0.000000e+00> : vector<32x768xf32>
    %2 = tpu.matmul %0, %1, %cst {dimension_numbers = #tpu.dot_dimension_numbers<[1], [0], [0], [1], [0, 0, 1, 1], [], []>} : vector<32x64xbf16>, vector<64x768xbf16>, vector<32x768xf32> -> vector<32x768xf32>
    %c0_3 = arith.constant 0 : index
    %c0_4 = arith.constant 0 : index
    %3 = vector.load %arg2[%c0_3, %c0_4] : memref<4x768xf32, #tpu.memory_space<vmem>>, vector<4x768xf32>
    %cst_5 = arith.constant 0.000000e+00 : f32
    %4 = vector.broadcast %cst_5 : f32 to vector<8x1xf32>
    %cst_6 = arith.constant 0.000000e+00 : f32
    %5 = vector.broadcast %cst_6 : f32 to vector<8x1xf32>
    %6 = vector.extract_strided_slice %2 {offsets = [0, 0], sizes = [8, 768], strides = [1, 1]} : vector<32x768xf32> to vector<8x768xf32>
    %7 = vector.extract_strided_slice %3 {offsets = [0, 0], sizes = [1, 768], strides = [1, 1]} : vector<4x768xf32> to vector<1x768xf32>
    %8 = vector.broadcast %7 : vector<1x768xf32> to vector<8x768xf32>
    %9 = arith.mulf %6, %8 : vector<8x768xf32>
    %cst_7 = arith.constant dense<0.000000e+00> : vector<8xf32>
    %10 = vector.multi_reduction <add>, %9, %cst_7 [1] : vector<8x768xf32> to vector<8xf32>
    %11 = vector.shape_cast %10 : vector<8xf32> to vector<8x1xf32>
    %12 = arith.addf %4, %11 : vector<8x1xf32>
    %13 = arith.mulf %9, %6 : vector<8x768xf32>
    %cst_8 = arith.constant dense<0.000000e+00> : vector<8xf32>
    %14 = vector.multi_reduction <add>, %13, %cst_8 [1] : vector<8x768xf32> to vector<8xf32>
    %15 = vector.shape_cast %14 : vector<8xf32> to vector<8x1xf32>
    %16 = arith.addf %5, %15 : vector<8x1xf32>
    %17 = vector.extract_strided_slice %2 {offsets = [8, 0], sizes = [8, 768], strides = [1, 1]} : vector<32x768xf32> to vector<8x768xf32>
    %18 = vector.extract_strided_slice %3 {offsets = [1, 0], sizes = [1, 768], strides = [1, 1]} : vector<4x768xf32> to vector<1x768xf32>
    %19 = vector.broadcast %18 : vector<1x768xf32> to vector<8x768xf32>
    %20 = arith.mulf %17, %19 : vector<8x768xf32>
    %cst_9 = arith.constant dense<0.000000e+00> : vector<8xf32>
    %21 = vector.multi_reduction <add>, %20, %cst_9 [1] : vector<8x768xf32> to vector<8xf32>
    %22 = vector.shape_cast %21 : vector<8xf32> to vector<8x1xf32>
    %23 = arith.addf %12, %22 : vector<8x1xf32>
    %24 = arith.mulf %20, %17 : vector<8x768xf32>
    %cst_10 = arith.constant dense<0.000000e+00> : vector<8xf32>
    %25 = vector.multi_reduction <add>, %24, %cst_10 [1] : vector<8x768xf32> to vector<8xf32>
    %26 = vector.shape_cast %25 : vector<8xf32> to vector<8x1xf32>
    %27 = arith.addf %16, %26 : vector<8x1xf32>
    %28 = vector.extract_strided_slice %2 {offsets = [16, 0], sizes = [8, 768], strides = [1, 1]} : vector<32x768xf32> to vector<8x768xf32>
    %29 = vector.extract_strided_slice %3 {offsets = [2, 0], sizes = [1, 768], strides = [1, 1]} : vector<4x768xf32> to vector<1x768xf32>
    %30 = vector.broadcast %29 : vector<1x768xf32> to vector<8x768xf32>
    %31 = arith.mulf %28, %30 : vector<8x768xf32>
    %cst_11 = arith.constant dense<0.000000e+00> : vector<8xf32>
    %32 = vector.multi_reduction <add>, %31, %cst_11 [1] : vector<8x768xf32> to vector<8xf32>
    %33 = vector.shape_cast %32 : vector<8xf32> to vector<8x1xf32>
    %34 = arith.addf %23, %33 : vector<8x1xf32>
    %35 = arith.mulf %31, %28 : vector<8x768xf32>
    %cst_12 = arith.constant dense<0.000000e+00> : vector<8xf32>
    %36 = vector.multi_reduction <add>, %35, %cst_12 [1] : vector<8x768xf32> to vector<8xf32>
    %37 = vector.shape_cast %36 : vector<8xf32> to vector<8x1xf32>
    %38 = arith.addf %27, %37 : vector<8x1xf32>
    %39 = vector.extract_strided_slice %2 {offsets = [24, 0], sizes = [8, 768], strides = [1, 1]} : vector<32x768xf32> to vector<8x768xf32>
    %40 = vector.extract_strided_slice %3 {offsets = [3, 0], sizes = [1, 768], strides = [1, 1]} : vector<4x768xf32> to vector<1x768xf32>
    %41 = vector.broadcast %40 : vector<1x768xf32> to vector<8x768xf32>
    %42 = arith.mulf %39, %41 : vector<8x768xf32>
    %cst_13 = arith.constant dense<0.000000e+00> : vector<8xf32>
    %43 = vector.multi_reduction <add>, %42, %cst_13 [1] : vector<8x768xf32> to vector<8xf32>
    %44 = vector.shape_cast %43 : vector<8xf32> to vector<8x1xf32>
    %45 = arith.addf %34, %44 : vector<8x1xf32>
    %46 = arith.mulf %42, %39 : vector<8x768xf32>
    %cst_14 = arith.constant dense<0.000000e+00> : vector<8xf32>
    %47 = vector.multi_reduction <add>, %46, %cst_14 [1] : vector<8x768xf32> to vector<8xf32>
    %48 = vector.shape_cast %47 : vector<8xf32> to vector<8x1xf32>
    %49 = arith.addf %38, %48 : vector<8x1xf32>
    %cst_15 = arith.constant 4.8828125E-4 : f32
    %50 = vector.broadcast %cst_15 : f32 to vector<8x1xf32>
    %51 = arith.mulf %45, %50 : vector<8x1xf32>
    %cst_16 = arith.constant 4.8828125E-4 : f32
    %52 = vector.broadcast %cst_16 : f32 to vector<8x1xf32>
    %53 = arith.mulf %49, %52 : vector<8x1xf32>
    %54 = arith.mulf %51, %51 : vector<8x1xf32>
    %55 = arith.subf %53, %54 : vector<8x1xf32>
    %cst_17 = arith.constant 0.000000e+00 : f32
    %56 = vector.broadcast %cst_17 : f32 to vector<8x1xf32>
    %57 = arith.maximumf %55, %56 : vector<8x1xf32>
    %cst_18 = arith.constant 9.99999974E-6 : f32
    %58 = vector.broadcast %cst_18 : f32 to vector<8x1xf32>
    %59 = arith.addf %57, %58 : vector<8x1xf32>
    %60 = math.rsqrt %59 : vector<8x1xf32>
    %c0_19 = arith.constant 0 : index
    %c0_20 = arith.constant 0 : index
    %61 = vector.load %arg3[%c0_19, %c0_20] : memref<8x1xf32, #tpu.memory_space<vmem>>, vector<8x1xf32>
    %62 = arith.mulf %60, %61 : vector<8x1xf32>
    %c0_21 = arith.constant 0 : index
    %c0_22 = arith.constant 0 : index
    %63 = vector.load %arg4[%c0_21, %c0_22] : memref<8x1xf32, #tpu.memory_space<vmem>>, vector<8x1xf32>
    %64 = arith.mulf %51, %62 : vector<8x1xf32>
    %65 = arith.subf %63, %64 : vector<8x1xf32>
    %66 = vector.extract_strided_slice %2 {offsets = [0, 0], sizes = [8, 768], strides = [1, 1]} : vector<32x768xf32> to vector<8x768xf32>
    %67 = vector.broadcast %62 : vector<8x1xf32> to vector<8x768xf32>
    %68 = arith.mulf %66, %67 : vector<8x768xf32>
    %69 = vector.broadcast %65 : vector<8x1xf32> to vector<8x768xf32>
    %70 = arith.addf %68, %69 : vector<8x768xf32>
    %cst_23 = arith.constant 0.000000e+00 : f32
    %71 = vector.broadcast %cst_23 : f32 to vector<8x768xf32>
    %72 = arith.maximumf %70, %71 : vector<8x768xf32>
    %73 = arith.truncf %72 : vector<8x768xf32> to vector<8x768xbf16>
    %c0_24 = arith.constant 0 : index
    %c0_25 = arith.constant 0 : index
    %74 = vector.load %arg5[%c0_24, %c0_25] : memref<32x768xbf16, #tpu.memory_space<vmem>>, vector<8x768xbf16>
    tpu.vector_store %arg5[%c0_24, %c0_25], %73 {strides = array<i32>} : memref<32x768xbf16, #tpu.memory_space<vmem>>, vector<8x768xbf16>,
    %75 = vector.extract_strided_slice %2 {offsets = [8, 0], sizes = [8, 768], strides = [1, 1]} : vector<32x768xf32> to vector<8x768xf32>
    %76 = vector.broadcast %62 : vector<8x1xf32> to vector<8x768xf32>
    %77 = arith.mulf %75, %76 : vector<8x768xf32>
    %78 = vector.broadcast %65 : vector<8x1xf32> to vector<8x768xf32>
    %79 = arith.addf %77, %78 : vector<8x768xf32>
    %cst_26 = arith.constant 0.000000e+00 : f32
    %80 = vector.broadcast %cst_26 : f32 to vector<8x768xf32>
    %81 = arith.maximumf %79, %80 : vector<8x768xf32>
    %82 = arith.truncf %81 : vector<8x768xf32> to vector<8x768xbf16>
    %c8 = arith.constant 8 : index
    %c0_27 = arith.constant 0 : index
    %83 = vector.load %arg5[%c8, %c0_27] : memref<32x768xbf16, #tpu.memory_space<vmem>>, vector<8x768xbf16>
    tpu.vector_store %arg5[%c8, %c0_27], %82 {strides = array<i32>} : memref<32x768xbf16, #tpu.memory_space<vmem>>, vector<8x768xbf16>,
    %84 = vector.extract_strided_slice %2 {offsets = [16, 0], sizes = [8, 768], strides = [1, 1]} : vector<32x768xf32> to vector<8x768xf32>
    %85 = vector.broadcast %62 : vector<8x1xf32> to vector<8x768xf32>
    %86 = arith.mulf %84, %85 : vector<8x768xf32>
    %87 = vector.broadcast %65 : vector<8x1xf32> to vector<8x768xf32>
    %88 = arith.addf %86, %87 : vector<8x768xf32>
    %cst_28 = arith.constant 0.000000e+00 : f32
    %89 = vector.broadcast %cst_28 : f32 to vector<8x768xf32>
    %90 = arith.maximumf %88, %89 : vector<8x768xf32>
    %91 = arith.truncf %90 : vector<8x768xf32> to vector<8x768xbf16>
    %c16 = arith.constant 16 : index
    %c0_29 = arith.constant 0 : index
    %92 = vector.load %arg5[%c16, %c0_29] : memref<32x768xbf16, #tpu.memory_space<vmem>>, vector<8x768xbf16>
    tpu.vector_store %arg5[%c16, %c0_29], %91 {strides = array<i32>} : memref<32x768xbf16, #tpu.memory_space<vmem>>, vector<8x768xbf16>,
    %93 = vector.extract_strided_slice %2 {offsets = [24, 0], sizes = [8, 768], strides = [1, 1]} : vector<32x768xf32> to vector<8x768xf32>
    %94 = vector.broadcast %62 : vector<8x1xf32> to vector<8x768xf32>
    %95 = arith.mulf %93, %94 : vector<8x768xf32>
    %96 = vector.broadcast %65 : vector<8x1xf32> to vector<8x768xf32>
    %97 = arith.addf %95, %96 : vector<8x768xf32>
    %cst_30 = arith.constant 0.000000e+00 : f32
    %98 = vector.broadcast %cst_30 : f32 to vector<8x768xf32>
    %99 = arith.maximumf %97, %98 : vector<8x768xf32>
    %100 = arith.truncf %99 : vector<8x768xf32> to vector<8x768xbf16>
    %c24 = arith.constant 24 : index
    %c0_31 = arith.constant 0 : index
    %101 = vector.load %arg5[%c24, %c0_31] : memref<32x768xbf16, #tpu.memory_space<vmem>>, vector<8x768xbf16>
    tpu.vector_store %arg5[%c24, %c0_31], %100 {strides = array<i32>} : memref<32x768xbf16, #tpu.memory_space<vmem>>, vector<8x768xbf16>,
    return
  }
}

module attributes {stable_mosaic.version = 11 : i64} {
  func.func @_conv_bias_tanh_kernel(%arg0: i32, %arg1: memref<32x2304xbf16, #tpu.memory_space<vmem>>, %arg2: memref<12x32xbf16, #tpu.memory_space<vmem>>, %arg3: memref<12x1xf32, #tpu.memory_space<vmem>>, %arg4: memref<12x2304xf32, #tpu.memory_space<vmem>>) attributes {dimension_semantics = [#tpu.dimension_semantics<parallel>], iteration_bounds = array<i64: 1>, scalar_prefetch = 0 : i64, scratch_operands = 0 : i64, tpu.core_type = #tpu.core_type<tc>, window_params = [{transform_indices = @transform_0, window_bounds = array<i64: 32, 2304>}, {pipeline_mode = #tpu.pipeline_mode<synchronous>, transform_indices = @transform_1, window_bounds = array<i64: 12, 32>}, {pipeline_mode = #tpu.pipeline_mode<synchronous>, transform_indices = @transform_2, window_bounds = array<i64: 12, 1>}, {transform_indices = @transform_3, window_bounds = array<i64: 12, 2304>}]} {
    %c0 = arith.constant 0 : index
    %c0_0 = arith.constant 0 : index
    %0 = vector.load %arg2[%c0, %c0_0] : memref<12x32xbf16, #tpu.memory_space<vmem>>, vector<12x32xbf16>
    %c0_1 = arith.constant 0 : index
    %c0_2 = arith.constant 0 : index
    %1 = vector.load %arg1[%c0_1, %c0_2] : memref<32x2304xbf16, #tpu.memory_space<vmem>>, vector<32x2304xbf16>
    %cst = arith.constant dense<0.000000e+00> : vector<12x2304xf32>
    %2 = tpu.matmul %0, %1, %cst {dimension_numbers = #tpu.dot_dimension_numbers<[1], [0], [0], [1], [0, 0, 1, 1], [], []>} : vector<12x32xbf16>, vector<32x2304xbf16>, vector<12x2304xf32> -> vector<12x2304xf32>
    %c0_3 = arith.constant 0 : index
    %c0_4 = arith.constant 0 : index
    %3 = vector.load %arg3[%c0_3, %c0_4] : memref<12x1xf32, #tpu.memory_space<vmem>>, vector<12x1xf32>
    %4 = vector.broadcast %3 : vector<12x1xf32> to vector<12x2304xf32>
    %5 = arith.addf %2, %4 : vector<12x2304xf32>
    %6 = math.tanh %5 : vector<12x2304xf32>
    %c0_5 = arith.constant 0 : index
    %c0_6 = arith.constant 0 : index
    %7 = vector.load %arg4[%c0_5, %c0_6] : memref<12x2304xf32, #tpu.memory_space<vmem>>, vector<12x2304xf32>
    tpu.vector_store %arg4[%c0_5, %c0_6], %6 {strides = array<i32>} : memref<12x2304xf32, #tpu.memory_space<vmem>>, vector<12x2304xf32>,
    return
  }
  func.func @transform_0(%arg0: i32) -> (i32, i32) {
    %c0_i32 = arith.constant 0 : i32
    %c0_i32_0 = arith.constant 0 : i32
    return %c0_i32, %arg0 : i32, i32
  }
  func.func @transform_1(%arg0: i32) -> (i32, i32) {
    %c0_i32 = arith.constant 0 : i32
    %c0_i32_0 = arith.constant 0 : i32
    %c0_i32_1 = arith.constant 0 : i32
    return %c0_i32, %c0_i32_0 : i32, i32
  }
  func.func @transform_2(%arg0: i32) -> (i32, i32) {
    %c0_i32 = arith.constant 0 : i32
    %c0_i32_0 = arith.constant 0 : i32
    %c0_i32_1 = arith.constant 0 : i32
    return %c0_i32, %c0_i32_0 : i32, i32
  }
  func.func @transform_3(%arg0: i32) -> (i32, i32) {
    %c0_i32 = arith.constant 0 : i32
    %c0_i32_0 = arith.constant 0 : i32
    return %c0_i32, %arg0 : i32, i32
  }
}

</mosaic_0001>

<llo_original>
// kernel: tile.8
$region0: #{tile.8}
  #allocation2 [shape = 's32[1]{0}', space=sflag, size = 0x4, scoped, tag = 'scoped memory for tile.8']
  %s0 = inlined_call_operand.hbm [shape: f32[3], index: 0, kind: input, shape index: {}]
  %s1 = inlined_call_operand.vmem [shape: f32[4,3], index: 1, kind: output, shape index: {}]
  $region1: #{tile.8} parent=0
    #allocation0 [shape = 'u8[512]{0}', space=vmem, size = 0x400, scoped, tag = 'operand span for operand 0']
    #allocation1 [shape = 's32[1]{0}', space=sflag, size = 0x4, scoped, tag = 'scoped memory for tile.8']
    %2 = vsyncpa [#allocation1], 0
    // Predicated region
    $region2: #{tile.8} parent=1 // pred_check
      _
    $region3: #{tile.8} parent=1 // pred_check_branch
      %4 = sbr.rel (0) target = $region5
    $region4: #{tile.8} parent=1 // pred_region
      %s6 = ssub.s32 16, 16
      %7 = vsyncadd [#allocation1], %s6
      %s9 = sshll.u32 [#allocation0], 4
      %s10 = int_to_ptr.vmem [resolvable:$true] %s9
      %12 = dma.hbm_to_vmem [thread:$0]  %s0, 16, %s10, [#allocation1]
    $region5: #{tile.8} parent=1 // pred_fallthru
      _
    // Predicated region
    $region6: #{tile.8} parent=1 // pred_check
      _
    $region7: #{tile.8} parent=1 // pred_check_branch
      %14 = sbr.rel (0) target = $region9
    $region8: #{tile.8} parent=1 // pred_region
      %15 = dma.done [#allocation1], 16
    $region9: #{tile.8} parent=1 // pred_fallthru
      _
    %v16 = vld [vmem:[#allocation0] ss:$0 sm:$0xff]
    %17 = vst [vmem:[%s1] sm:$0xf] %v16
    %18 = vsyncpa [#allocation1], 1

// kernel: tile.0
$region0: #{tile.0}
  %s0 = inlined_call_operand.vmem [shape: f32[4,3], index: 0, kind: input, shape index: {}]
  %s1 = inlined_call_operand.vmem [shape: f32[12,1], index: 1, kind: output, shape index: {}]
  $region1: #{tile.0} parent=0
    #allocation0 [shape = 'u8[4096]{0}', space=vmem, size = 0x1000, scoped, tag = 'scoped mem for input reshape']
    %s3 = sshllo.u32 0, 4
    %v4 = vld [vmem:[%s0] sm:%s3]
    %5 = vst [vmem:[#allocation0] sm:%s3] %v4
    %v6 = vld [vmem:[#allocation0] sm:$0xf]
    %vm7 = vcmask 7168
    %8 = vst.msk [vmem:[%s1] ss:$3 sm:$0xf] %vm7, %v6
    %v9 = vld [vmem:[#allocation0] sm:$0xf]
    %10 = vrot.lane.b32.xlu0 %v9, 127
    %v11 = vpop.permute.xlu0 %10
    %vm12 = vcmask 7168
    %s13 = scalar_lea.vmem %s1, 1
    %14 = vst.msk [vmem:[%s13] ss:$3 sm:$0xf] %vm12, %v11
    %v15 = vld [vmem:[#allocation0] sm:$0xf]
    %16 = vrot.lane.b32.xlu0 %v15, 126
    %v17 = vpop.permute.xlu0 %16
    %vm18 = vcmask 7168
    %s19 = scalar_lea.vmem %s1, 2
    %20 = vst.msk [vmem:[%s19] ss:$3 sm:$0xf] %vm18, %v17

// kernel: generator_forward.5
$region0: #{generator_forward.5}
  #allocation0 [shape = 'u32[]', space=smem, size = 0x4, offset = 0x4, fixed_abs, tag = 'smem constant byte address 0x4 - core index']
  #allocation1 [shape = 'u32[144,128]{1,0:T(1,128)}', space=vmem, size = 0x12000, scoped, tag = 'internal scratch']
  %s0 = inlined_call_operand.vmem [shape: bf16[128,256], index: 0, kind: input, shape index: {}]
  %s1 = inlined_call_operand.vmem [shape: bf16[64,128], index: 1, kind: input, shape index: {}]
  %s2 = inlined_call_operand.hbm [shape: f32[1,256], index: 2, kind: input, shape index: {}]
  %s3 = inlined_call_operand.vmem [shape: f32[64,1], index: 3, kind: input, shape index: {}]
  %s4 = inlined_call_operand.vmem [shape: f32[64,1], index: 4, kind: input, shape index: {}]
  %s5 = inlined_call_operand.vmem [shape: bf16[64,256], index: 5, kind: output, shape index: {}]
  %s6 = sld [smem:[#allocation0]]
  $region34: #{generator_forward.5} parent=0
    _
  %s8 = ssub.s32 1, %s6
  %s9 = scalar_select 0, %s8, %s6
  $region1: #{generator_forward.5} parent=0
    #allocation2 [shape = 'u8[1024]{0}', space=vmem, size = 0x400, scoped, tag = 'input window, operand 2, single buffered']
    #allocation3 [shape = 's32[1]{0}', space=sflag, size = 0x4, scoped, tag = 'scoped memory for generator_forward.5']
    %10 = vsyncpa [#allocation3], 0
    // Predicated region
    $region2: #{generator_forward.5} parent=1 // pred_check
      _
    $region3: #{generator_forward.5} parent=1 // pred_check_branch
      %12 = sbr.rel (0) target = $region5
    $region4: #{generator_forward.5} parent=1 // pred_region
      _
    $region5: #{generator_forward.5} parent=1 // pred_fallthru
      _
    // Predicated region
    $region6: #{generator_forward.5} parent=1 // pred_check
      _
    $region7: #{generator_forward.5} parent=1 // pred_check_branch
      %14 = sbr.rel (0) target = $region9
    $region8: #{generator_forward.5} parent=1 // pred_region
      _
    $region9: #{generator_forward.5} parent=1 // pred_fallthru
      _
    // Predicated region
    $region10: #{generator_forward.5} parent=1 // pred_check
      _
    $region11: #{generator_forward.5} parent=1 // pred_check_branch
      %16 = sbr.rel (0) target = $region13
    $region12: #{generator_forward.5} parent=1 // pred_region
      %s18 = ssub.s32 32, 32
      %19 = vsyncadd [#allocation3], %s18
      %s21 = sshll.u32 [#allocation2], 4
      %s22 = int_to_ptr.vmem [resolvable:$true] %s21
      %24 = dma.hbm_to_vmem [thread:$0]  %s2, 32, %s22, [#allocation3]
    $region13: #{generator_forward.5} parent=1 // pred_fallthru
      _
    // Predicated region
    $region14: #{generator_forward.5} parent=1 // pred_check
      _
    $region15: #{generator_forward.5} parent=1 // pred_check_branch
      %26 = sbr.rel (0) target = $region17
    $region16: #{generator_forward.5} parent=1 // pred_region
      _
    $region17: #{generator_forward.5} parent=1 // pred_fallthru
      _
    // Predicated region
    $region18: #{generator_forward.5} parent=1 // pred_check
      _
    $region19: #{generator_forward.5} parent=1 // pred_check_branch
      %28 = sbr.rel (0) target = $region21
    $region20: #{generator_forward.5} parent=1 // pred_region
      _
    $region21: #{generator_forward.5} parent=1 // pred_fallthru
      _
    // Predicated region
    $region22: #{generator_forward.5} parent=1 // pred_check
      _
    $region23: #{generator_forward.5} parent=1 // pred_check_branch
      %30 = sbr.rel (0) target = $region25
    $region24: #{generator_forward.5} parent=1 // pred_region
      %31 = dma.done [#allocation3], 32
    $region25: #{generator_forward.5} parent=1 // pred_fallthru
      _
    %v33 = vld [vmem:[%s1] sm:$0xf]
    %v34 = vld [vmem:[%s1 + $0x4] sm:$0xf]
    %v35 = vld [vmem:[%s1 + $0x8] sm:$0xf]
    %v36 = vld [vmem:[%s1 + $0xc] sm:$0xf]
    %v37 = vld [vmem:[%s1 + $0x10] sm:$0xf]
    %v38 = vld [vmem:[%s1 + $0x14] sm:$0xf]
    %v39 = vld [vmem:[%s1 + $0x18] sm:$0xf]
    %v40 = vld [vmem:[%s1 + $0x1c] sm:$0xf]
    %v41 = vld [vmem:[%s0] sm:$0xff]
    %v42 = vld [vmem:[%s0 + $0x8] sm:$0xff]
    %v43 = vld [vmem:[%s0 + $0x10] sm:$0xff]
    %v44 = vld [vmem:[%s0 + $0x18] sm:$0xff]
    %v45 = vld [vmem:[%s0 + $0x20] sm:$0xff]
    %v46 = vld [vmem:[%s0 + $0x28] sm:$0xff]
    %v47 = vld [vmem:[%s0 + $0x30] sm:$0xff]
    %v48 = vld [vmem:[%s0 + $0x38] sm:$0xff]
    %v49 = vld [vmem:[%s0 + $0x40] sm:$0xff]
    %v50 = vld [vmem:[%s0 + $0x48] sm:$0xff]
    %v51 = vld [vmem:[%s0 + $0x50] sm:$0xff]
    %v52 = vld [vmem:[%s0 + $0x58] sm:$0xff]
    %v53 = vld [vmem:[%s0 + $0x60] sm:$0xff]
    %v54 = vld [vmem:[%s0 + $0x68] sm:$0xff]
    %v55 = vld [vmem:[%s0 + $0x70] sm:$0xff]
    %v56 = vld [vmem:[%s0 + $0x78] sm:$0xff]
    %v65 = vunpack.c.l.b16 %v33
    %v66 = vunpack.c.l.b16 %v34
    %v67 = vunpack.c.l.b16 %v35
    %v68 = vunpack.c.l.b16 %v36
    %v69 = vunpack.c.l.b16 %v37
    %v70 = vunpack.c.l.b16 %v38
    %v71 = vunpack.c.l.b16 %v39
    %v72 = vunpack.c.l.b16 %v40
    %v73 = vpack.c.b16 %v66, %v65
    %v74 = vpack.c.b16 %v68, %v67
    %v75 = vpack.c.b16 %v70, %v69
    %v76 = vpack.c.b16 %v72, %v71
    %v97 = vunpack.c.l.b16 %v41
    %v98 = vunpack.c.h.b16 %v41
    %v99 = vunpack.c.l.b16 %v42
    %v100 = vunpack.c.h.b16 %v42
    %v101 = vunpack.c.l.b16 %v43
    %v102 = vunpack.c.h.b16 %v43
    %v103 = vunpack.c.l.b16 %v44
    %v104 = vunpack.c.h.b16 %v44
    %v105 = vunpack.c.l.b16 %v45
    %v106 = vunpack.c.h.b16 %v45
    %v107 = vunpack.c.l.b16 %v46
    %v108 = vunpack.c.h.b16 %v46
    %v109 = vunpack.c.l.b16 %v47
    %v110 = vunpack.c.h.b16 %v47
    %v111 = vunpack.c.l.b16 %v48
    %v112 = vunpack.c.h.b16 %v48
    %v113 = vunpack.c.l.b16 %v49
    %v114 = vunpack.c.h.b16 %v49
    %v115 = vunpack.c.l.b16 %v50
    %v116 = vunpack.c.h.b16 %v50
    %v117 = vunpack.c.l.b16 %v51
    %v118 = vunpack.c.h.b16 %v51
    %v119 = vunpack.c.l.b16 %v52
    %v120 = vunpack.c.h.b16 %v52
    %v121 = vunpack.c.l.b16 %v53
    %v122 = vunpack.c.h.b16 %v53
    %v123 = vunpack.c.l.b16 %v54
    %v124 = vunpack.c.h.b16 %v54
    %v125 = vunpack.c.l.b16 %v55
    %v126 = vunpack.c.h.b16 %v55
    %v127 = vunpack.c.l.b16 %v56
    %v128 = vunpack.c.h.b16 %v56
    %v129 = vpack.c.b16 %v99, %v97
    %v130 = vpack.c.b16 %v100, %v98
    %v131 = vpack.c.b16 %v103, %v101
    %v132 = vpack.c.b16 %v104, %v102
    %v133 = vpack.c.b16 %v107, %v105
    %v134 = vpack.c.b16 %v108, %v106
    %v135 = vpack.c.b16 %v111, %v109
    %v136 = vpack.c.b16 %v112, %v110
    %v137 = vpack.c.b16 %v115, %v113
    %v138 = vpack.c.b16 %v116, %v114
    %v139 = vpack.c.b16 %v119, %v117
    %v140 = vpack.c.b16 %v120, %v118
    %v141 = vpack.c.b16 %v123, %v121
    %v142 = vpack.c.b16 %v124, %v122
    %v143 = vpack.c.b16 %v127, %v125
    %v144 = vpack.c.b16 %v128, %v126
    %161 = vmatprep.subr.bf16.mxu0 %v130
    %162 = vmatpush1.bf16.msra.mxu0 %v129
    %163 = vmatprep.subr.bf16.mxu0 %v132
    %164 = vmatpush1.bf16.msra.mxu0 %v131
    %165 = vmatprep.subr.bf16.mxu0 %v134
    %166 = vmatpush1.bf16.msra.mxu0 %v133
    %167 = vmatprep.subr.bf16.mxu0 %v136
    %168 = vmatpush1.bf16.msra.mxu0 %v135
    %169 = vmatprep.subr.bf16.mxu0 %v138
    %170 = vmatpush1.bf16.msra.mxu0 %v137
    %171 = vmatprep.subr.bf16.mxu0 %v140
    %172 = vmatpush1.bf16.msra.mxu0 %v139
    %173 = vmatprep.subr.bf16.mxu0 %v142
    %174 = vmatpush1.bf16.msra.mxu0 %v141
    %175 = vmatprep.subr.bf16.mxu0 %v144
    %176 = vmatpush1.bf16.msra.mxu0 %v143
    %177 = vmatprep.subr.bf16.mxu0 0
    %178 = vmatpush1.bf16.msra.mxu0 0
    %179 = vmatprep.subr.bf16.mxu0 0
    %180 = vmatpush1.bf16.msra.mxu0 0
    %181 = vmatprep.subr.bf16.mxu0 0
    %182 = vmatpush1.bf16.msra.mxu0 0
    %183 = vmatprep.subr.bf16.mxu0 0
    %184 = vmatpush1.bf16.msra.mxu0 0
    %185 = vmatprep.subr.bf16.mxu0 0
    %186 = vmatpush1.bf16.msra.mxu0 0
    %187 = vmatprep.subr.bf16.mxu0 0
    %188 = vmatpush1.bf16.msra.mxu0 0
    %189 = vmatprep.subr.bf16.mxu0 0
    %190 = vmatpush1.bf16.msra.mxu0 0
    %191 = vmatprep.subr.bf16.mxu0 0
    %192 = vmatpush1.bf16.msra.mxu0 0
    %193 = vmatprep.mubr.bf16.mxu0 0
    %194 = vmatmul.mubr.bf16.gmra.mrb[0].mxu0 %v73
    %v195 = vpop.f32.mrb[0].mxu0
    %v196 = vadd.f32 0.0, %v195
    %v197 = vpop.f32.mrb[0].mxu0
    %v198 = vadd.f32 0.0, %v197
    %v199 = vpop.f32.mrb[0].mxu0
    %v200 = vadd.f32 0.0, %v199
    %v201 = vpop.f32.mrb[0].mxu0
    %v202 = vadd.f32 0.0, %v201
    %203 = vmatprep.mubr.bf16.mxu0 0
    %204 = vmatmul.mubr.bf16.gmra.mrb[0].mxu0 %v74
    %v205 = vpop.f32.mrb[0].mxu0
    %v206 = vadd.f32 0.0, %v205
    %v207 = vpop.f32.mrb[0].mxu0
    %v208 = vadd.f32 0.0, %v207
    %v209 = vpop.f32.mrb[0].mxu0
    %v210 = vadd.f32 0.0, %v209
    %v211 = vpop.f32.mrb[0].mxu0
    %v212 = vadd.f32 0.0, %v211
    %213 = vmatprep.mubr.bf16.mxu0 0
    %214 = vmatmul.mubr.bf16.gmra.mrb[0].mxu0 %v75
    %v215 = vpop.f32.mrb[0].mxu0
    %v216 = vadd.f32 0.0, %v215
    %v217 = vpop.f32.mrb[0].mxu0
    %v218 = vadd.f32 0.0, %v217
    %v219 = vpop.f32.mrb[0].mxu0
    %v220 = vadd.f32 0.0, %v219
    %v221 = vpop.f32.mrb[0].mxu0
    %v222 = vadd.f32 0.0, %v221
    %223 = vmatprep.mubr.bf16.mxu0 0
    %224 = vmatmul.mubr.bf16.gmra.mrb[0].mxu0 %v76
    %v225 = vpop.f32.mrb[0].mxu0
    %v226 = vadd.f32 0.0, %v225
    %v227 = vpop.f32.mrb[0].mxu0
    %v228 = vadd.f32 0.0, %v227
    %v229 = vpop.f32.mrb[0].mxu0
    %v230 = vadd.f32 0.0, %v229
    %v231 = vpop.f32.mrb[0].mxu0
    %v232 = vadd.f32 0.0, %v231
    %233 = vdwg.mxu0
    %v234 = vld [vmem:[#allocation2] sm:$0x3]
    %v236 = vlaneseq
    %v237 = vshrl.u32 %v236, 7
    %v238 = vsub.s32 0, %v237
    %v239 = vrot.slane %v234, %v238
    %v240 = vlaneseq
    %v241 = vshrl.u32 %v240, 7
    %v242 = vsub.s32 1, %v241
    %v243 = vrot.slane %v234, %v242
    %v246 = vmul.f32 %v196, %v239
    %v247 = vmul.f32 %v198, %v243
    %v248 = vmul.f32 %v200, %v239
    %v249 = vmul.f32 %v202, %v243
    %v250 = vmul.f32 %v206, %v239
    %v251 = vmul.f32 %v208, %v243
    %v252 = vmul.f32 %v210, %v239
    %v253 = vmul.f32 %v212, %v243
    %v254 = vmul.f32 %v216, %v239
    %v255 = vmul.f32 %v218, %v243
    %v256 = vmul.f32 %v220, %v239
    %v257 = vmul.f32 %v222, %v243
    %v258 = vmul.f32 %v226, %v239
    %v259 = vmul.f32 %v228, %v243
    %v260 = vmul.f32 %v230, %v239
    %v261 = vmul.f32 %v232, %v243
    %v262 = vadd.f32 %v246, %v247
    %263 = vadd.xlane.f32.xlu0 %v262
    %v264 = vpop.xlane.xlu0 %263
    %v265 = vadd.f32 %v248, %v249
    %266 = vadd.xlane.f32.xlu0 %v265
    %v267 = vpop.xlane.xlu0 %266
    %v268 = vadd.f32 %v250, %v251
    %269 = vadd.xlane.f32.xlu0 %v268
    %v270 = vpop.xlane.xlu0 %269
    %v271 = vadd.f32 %v252, %v253
    %272 = vadd.xlane.f32.xlu0 %v271
    %v273 = vpop.xlane.xlu0 %272
    %v274 = vadd.f32 %v254, %v255
    %275 = vadd.xlane.f32.xlu0 %v274
    %v276 = vpop.xlane.xlu0 %275
    %v277 = vadd.f32 %v256, %v257
    %278 = vadd.xlane.f32.xlu0 %v277
    %v279 = vpop.xlane.xlu0 %278
    %v280 = vadd.f32 %v258, %v259
    %281 = vadd.xlane.f32.xlu0 %v280
    %v282 = vpop.xlane.xlu0 %281
    %v283 = vadd.f32 %v260, %v261
    %284 = vadd.xlane.f32.xlu0 %v283
    %v285 = vpop.xlane.xlu0 %284
    %v286 = vadd.f32 %v264, 0.0
    %v287 = vadd.f32 %v267, 0.0
    %v288 = vadd.f32 %v270, 0.0
    %v289 = vadd.f32 %v273, 0.0
    %v290 = vadd.f32 %v276, 0.0
    %v291 = vadd.f32 %v279, 0.0
    %v292 = vadd.f32 %v282, 0.0
    %v293 = vadd.f32 %v285, 0.0
    %v294 = vmul.f32 %v246, %v196
    %v295 = vmul.f32 %v247, %v198
    %v296 = vmul.f32 %v248, %v200
    %v297 = vmul.f32 %v249, %v202
    %v298 = vmul.f32 %v250, %v206
    %v299 = vmul.f32 %v251, %v208
    %v300 = vmul.f32 %v252, %v210
    %v301 = vmul.f32 %v253, %v212
    %v302 = vmul.f32 %v254, %v216
    %v303 = vmul.f32 %v255, %v218
    %v304 = vmul.f32 %v256, %v220
    %v305 = vmul.f32 %v257, %v222
    %v306 = vmul.f32 %v258, %v226
    %v307 = vmul.f32 %v259, %v228
    %v308 = vmul.f32 %v260, %v230
    %v309 = vmul.f32 %v261, %v232
    %v310 = vadd.f32 %v294, %v295
    %311 = vadd.xlane.f32.xlu0 %v310
    %v312 = vpop.xlane.xlu0 %311
    %v313 = vadd.f32 %v296, %v297
    %314 = vadd.xlane.f32.xlu0 %v313
    %v315 = vpop.xlane.xlu0 %314
    %v316 = vadd.f32 %v298, %v299
    %317 = vadd.xlane.f32.xlu0 %v316
    %v318 = vpop.xlane.xlu0 %317
    %v319 = vadd.f32 %v300, %v301
    %320 = vadd.xlane.f32.xlu0 %v319
    %v321 = vpop.xlane.xlu0 %320
    %v322 = vadd.f32 %v302, %v303
    %323 = vadd.xlane.f32.xlu0 %v322
    %v324 = vpop.xlane.xlu0 %323
    %v325 = vadd.f32 %v304, %v305
    %326 = vadd.xlane.f32.xlu0 %v325
    %v327 = vpop.xlane.xlu0 %326
    %v328 = vadd.f32 %v306, %v307
    %329 = vadd.xlane.f32.xlu0 %v328
    %v330 = vpop.xlane.xlu0 %329
    %v331 = vadd.f32 %v308, %v309
    %332 = vadd.xlane.f32.xlu0 %v331
    %v333 = vpop.xlane.xlu0 %332
    %v334 = vadd.f32 %v312, 0.0
    %v335 = vadd.f32 %v315, 0.0
    %v336 = vadd.f32 %v318, 0.0
    %v337 = vadd.f32 %v321, 0.0
    %v338 = vadd.f32 %v324, 0.0
    %v339 = vadd.f32 %v327, 0.0
    %v340 = vadd.f32 %v330, 0.0
    %v341 = vadd.f32 %v333, 0.0
    %v342 = vmul.f32 %v286, 0.03125
    %v343 = vmul.f32 %v287, 0.03125
    %v344 = vmul.f32 %v288, 0.03125
    %v345 = vmul.f32 %v289, 0.03125
    %v346 = vmul.f32 %v290, 0.03125
    %v347 = vmul.f32 %v291, 0.03125
    %v348 = vmul.f32 %v292, 0.03125
    %v349 = vmul.f32 %v293, 0.03125
    %v350 = vmul.f32 %v334, 0.03125
    %v351 = vmul.f32 %v335, 0.03125
    %v352 = vmul.f32 %v336, 0.03125
    %v353 = vmul.f32 %v337, 0.03125
    %v354 = vmul.f32 %v338, 0.03125
    %v355 = vmul.f32 %v339, 0.03125
    %v356 = vmul.f32 %v340, 0.03125
    %v357 = vmul.f32 %v341, 0.03125
    %v358 = vmul.f32 %v342, %v342
    %v359 = vmul.f32 %v343, %v343
    %v360 = vmul.f32 %v344, %v344
    %v361 = vmul.f32 %v345, %v345
    %v362 = vmul.f32 %v346, %v346
    %v363 = vmul.f32 %v347, %v347
    %v364 = vmul.f32 %v348, %v348
    %v365 = vmul.f32 %v349, %v349
    %v366 = vsub.f32 %v350, %v358
    %v367 = vsub.f32 %v351, %v359
    %v368 = vsub.f32 %v352, %v360
    %v369 = vsub.f32 %v353, %v361
    %v370 = vsub.f32 %v354, %v362
    %v371 = vsub.f32 %v355, %v363
    %v372 = vsub.f32 %v356, %v364
    %v373 = vsub.f32 %v357, %v365
    %v374 = vmax.f32 %v366, 0.0
    %v375 = vmax.f32 %v367, 0.0
    %v376 = vmax.f32 %v368, 0.0
    %v377 = vmax.f32 %v369, 0.0
    %v378 = vmax.f32 %v370, 0.0
    %v379 = vmax.f32 %v371, 0.0
    %v380 = vmax.f32 %v372, 0.0
    %v381 = vmax.f32 %v373, 0.0
    %v382 = vadd.f32 %v374, 1e-05
    %v383 = vadd.f32 %v375, 1e-05
    %v384 = vadd.f32 %v376, 1e-05
    %v385 = vadd.f32 %v377, 1e-05
    %v386 = vadd.f32 %v378, 1e-05
    %v387 = vadd.f32 %v379, 1e-05
    %v388 = vadd.f32 %v380, 1e-05
    %v389 = vadd.f32 %v381, 1e-05
    %v390 = vrsqrt.pop %v382
    %v391 = vrsqrt.pop %v383
    %v392 = vrsqrt.pop %v384
    %v393 = vrsqrt.pop %v385
    %v394 = vrsqrt.pop %v386
    %v395 = vrsqrt.pop %v387
    %v396 = vrsqrt.pop %v388
    %v397 = vrsqrt.pop %v389
    %v398 = vld [vmem:[%s3] sm:$0xff]
    %v399 = vld [vmem:[%s3 + $0x8] sm:$0xff]
    %v400 = vld [vmem:[%s3 + $0x10] sm:$0xff]
    %v401 = vld [vmem:[%s3 + $0x18] sm:$0xff]
    %v402 = vld [vmem:[%s3 + $0x20] sm:$0xff]
    %v403 = vld [vmem:[%s3 + $0x28] sm:$0xff]
    %v404 = vld [vmem:[%s3 + $0x30] sm:$0xff]
    %v405 = vld [vmem:[%s3 + $0x38] sm:$0xff]
    %v406 = vmul.f32 %v390, %v398
    %v407 = vmul.f32 %v391, %v399
    %v408 = vmul.f32 %v392, %v400
    %v409 = vmul.f32 %v393, %v401
    %v410 = vmul.f32 %v394, %v402
    %v411 = vmul.f32 %v395, %v403
    %v412 = vmul.f32 %v396, %v404
    %v413 = vmul.f32 %v397, %v405
    %v414 = vld [vmem:[%s4] sm:$0xff]
    %v415 = vld [vmem:[%s4 + $0x8] sm:$0xff]
    %v416 = vld [vmem:[%s4 + $0x10] sm:$0xff]
    %v417 = vld [vmem:[%s4 + $0x18] sm:$0xff]
    %v418 = vld [vmem:[%s4 + $0x20] sm:$0xff]
    %v419 = vld [vmem:[%s4 + $0x28] sm:$0xff]
    %v420 = vld [vmem:[%s4 + $0x30] sm:$0xff]
    %v421 = vld [vmem:[%s4 + $0x38] sm:$0xff]
    %v422 = vmul.f32 %v342, %v406
    %v423 = vmul.f32 %v343, %v407
    %v424 = vmul.f32 %v344, %v408
    %v425 = vmul.f32 %v345, %v409
    %v426 = vmul.f32 %v346, %v410
    %v427 = vmul.f32 %v347, %v411
    %v428 = vmul.f32 %v348, %v412
    %v429 = vmul.f32 %v349, %v413
    %v430 = vsub.f32 %v414, %v422
    %v431 = vsub.f32 %v415, %v423
    %v432 = vsub.f32 %v416, %v424
    %v433 = vsub.f32 %v417, %v425
    %v434 = vsub.f32 %v418, %v426
    %v435 = vsub.f32 %v419, %v427
    %v436 = vsub.f32 %v420, %v428
    %v437 = vsub.f32 %v421, %v429
    %439 = vset.pattern.permute.xlu0 0
    %440 = vperm.xlu0 %439, %v406
    %v441 = vpop.permute.xlu0 %440
    %444 = vset.pattern.permute.xlu0 0
    %445 = vperm.xlu0 %444, %v407
    %v446 = vpop.permute.xlu0 %445
    %449 = vset.pattern.permute.xlu0 0
    %450 = vperm.xlu0 %449, %v408
    %v451 = vpop.permute.xlu0 %450
    %454 = vset.pattern.permute.xlu0 0
    %455 = vperm.xlu0 %454, %v409
    %v456 = vpop.permute.xlu0 %455
    %459 = vset.pattern.permute.xlu0 0
    %460 = vperm.xlu0 %459, %v410
    %v461 = vpop.permute.xlu0 %460
    %464 = vset.pattern.permute.xlu0 0
    %465 = vperm.xlu0 %464, %v411
    %v466 = vpop.permute.xlu0 %465
    %469 = vset.pattern.permute.xlu0 0
    %470 = vperm.xlu0 %469, %v412
    %v471 = vpop.permute.xlu0 %470
    %474 = vset.pattern.permute.xlu0 0
    %475 = vperm.xlu0 %474, %v413
    %v476 = vpop.permute.xlu0 %475
    %v478 = vmul.f32 %v196, %v441
    %v479 = vmul.f32 %v198, %v441
    %v480 = vmul.f32 %v200, %v446
    %v481 = vmul.f32 %v202, %v446
    %v482 = vmul.f32 %v206, %v451
    %v483 = vmul.f32 %v208, %v451
    %v484 = vmul.f32 %v210, %v456
    %v485 = vmul.f32 %v212, %v456
    %v486 = vmul.f32 %v216, %v461
    %v487 = vmul.f32 %v218, %v461
    %v488 = vmul.f32 %v220, %v466
    %v489 = vmul.f32 %v222, %v466
    %v490 = vmul.f32 %v226, %v471
    %v491 = vmul.f32 %v228, %v471
    %v492 = vmul.f32 %v230, %v476
    %v493 = vmul.f32 %v232, %v476
    %495 = vset.pattern.permute.xlu0 0
    %496 = vperm.xlu0 %495, %v430
    %v497 = vpop.permute.xlu0 %496
    %500 = vset.pattern.permute.xlu0 0
    %501 = vperm.xlu0 %500, %v431
    %v502 = vpop.permute.xlu0 %501
    %505 = vset.pattern.permute.xlu0 0
    %506 = vperm.xlu0 %505, %v432
    %v507 = vpop.permute.xlu0 %506
    %510 = vset.pattern.permute.xlu0 0
    %511 = vperm.xlu0 %510, %v433
    %v512 = vpop.permute.xlu0 %511
    %515 = vset.pattern.permute.xlu0 0
    %516 = vperm.xlu0 %515, %v434
    %v517 = vpop.permute.xlu0 %516
    %520 = vset.pattern.permute.xlu0 0
    %521 = vperm.xlu0 %520, %v435
    %v522 = vpop.permute.xlu0 %521
    %525 = vset.pattern.permute.xlu0 0
    %526 = vperm.xlu0 %525, %v436
    %v527 = vpop.permute.xlu0 %526
    %530 = vset.pattern.permute.xlu0 0
    %531 = vperm.xlu0 %530, %v437
    %v532 = vpop.permute.xlu0 %531
    %v534 = vadd.f32 %v478, %v497
    %v535 = vadd.f32 %v479, %v497
    %v536 = vadd.f32 %v480, %v502
    %v537 = vadd.f32 %v481, %v502
    %v538 = vadd.f32 %v482, %v507
    %v539 = vadd.f32 %v483, %v507
    %v540 = vadd.f32 %v484, %v512
    %v541 = vadd.f32 %v485, %v512
    %v542 = vadd.f32 %v486, %v517
    %v543 = vadd.f32 %v487, %v517
    %v544 = vadd.f32 %v488, %v522
    %v545 = vadd.f32 %v489, %v522
    %v546 = vadd.f32 %v490, %v527
    %v547 = vadd.f32 %v491, %v527
    %v548 = vadd.f32 %v492, %v532
    %v549 = vadd.f32 %v493, %v532
    %v550 = vmax.f32 %v534, 0.0
    %v551 = vmax.f32 %v535, 0.0
    %v552 = vmax.f32 %v536, 0.0
    %v553 = vmax.f32 %v537, 0.0
    %v554 = vmax.f32 %v538, 0.0
    %v555 = vmax.f32 %v539, 0.0
    %v556 = vmax.f32 %v540, 0.0
    %v557 = vmax.f32 %v541, 0.0
    %v558 = vmax.f32 %v542, 0.0
    %v559 = vmax.f32 %v543, 0.0
    %v560 = vmax.f32 %v544, 0.0
    %v561 = vmax.f32 %v545, 0.0
    %v562 = vmax.f32 %v546, 0.0
    %v563 = vmax.f32 %v547, 0.0
    %v564 = vmax.f32 %v548, 0.0
    %v565 = vmax.f32 %v549, 0.0
    %v566 = vpack.c.bf16 %v552, %v550
    %v567 = vpack.c.bf16 %v553, %v551
    %v568 = vpack.c.bf16 %v556, %v554
    %v569 = vpack.c.bf16 %v557, %v555
    %v570 = vpack.c.bf16 %v560, %v558
    %v571 = vpack.c.bf16 %v561, %v559
    %v572 = vpack.c.bf16 %v564, %v562
    %v573 = vpack.c.bf16 %v565, %v563
    %v582 = vunpack.c.l.b16 %v566
    %v583 = vunpack.c.l.b16 %v567
    %v584 = vunpack.c.h.b16 %v566
    %v585 = vunpack.c.h.b16 %v567
    %v586 = vunpack.c.l.b16 %v568
    %v587 = vunpack.c.l.b16 %v569
    %v588 = vunpack.c.h.b16 %v568
    %v589 = vunpack.c.h.b16 %v569
    %v590 = vunpack.c.l.b16 %v570
    %v591 = vunpack.c.l.b16 %v571
    %v592 = vunpack.c.h.b16 %v570
    %v593 = vunpack.c.h.b16 %v571
    %v594 = vunpack.c.l.b16 %v572
    %v595 = vunpack.c.l.b16 %v573
    %v596 = vunpack.c.h.b16 %v572
    %v597 = vunpack.c.h.b16 %v573
    %v598 = vpack.c.b16 %v583, %v582
    %v599 = vpack.c.b16 %v585, %v584
    %v600 = vpack.c.b16 %v587, %v586
    %v601 = vpack.c.b16 %v589, %v588
    %v602 = vpack.c.b16 %v591, %v590
    %v603 = vpack.c.b16 %v593, %v592
    %v604 = vpack.c.b16 %v595, %v594
    %v605 = vpack.c.b16 %v597, %v596
    %614 = vst [vmem:[%s5] sm:$0xff] %v598
    %615 = vst [vmem:[%s5 + $0x8] sm:$0xff] %v599
    %616 = vst [vmem:[%s5 + $0x10] sm:$0xff] %v600
    %617 = vst [vmem:[%s5 + $0x18] sm:$0xff] %v601
    %618 = vst [vmem:[%s5 + $0x20] sm:$0xff] %v602
    %619 = vst [vmem:[%s5 + $0x28] sm:$0xff] %v603
    %620 = vst [vmem:[%s5 + $0x30] sm:$0xff] %v604
    %621 = vst [vmem:[%s5 + $0x38] sm:$0xff] %v605
    // Predicated region
    $region26: #{generator_forward.5} parent=1 // pred_check
      _
    $region27: #{generator_forward.5} parent=1 // pred_check_branch
      %623 = sbr.rel (0) target = $region29
    $region28: #{generator_forward.5} parent=1 // pred_region
      _
    $region29: #{generator_forward.5} parent=1 // pred_fallthru
      _
    // Predicated region
    $region30: #{generator_forward.5} parent=1 // pred_check
      _
    $region31: #{generator_forward.5} parent=1 // pred_check_branch
      %625 = sbr.rel (0) target = $region33
    $region32: #{generator_forward.5} parent=1 // pred_region
      _
    $region33: #{generator_forward.5} parent=1 // pred_fallthru
      _
    %626 = vsyncpa [#allocation3], 1

// kernel: generator_forward.6
$region0: #{generator_forward.6}
  #allocation0 [shape = 'u32[]', space=smem, size = 0x4, offset = 0x4, fixed_abs, tag = 'smem constant byte address 0x4 - core index']
  #allocation1 [shape = 'u32[144,128]{1,0:T(1,128)}', space=vmem, size = 0x12000, scoped, tag = 'internal scratch']
  %s0 = inlined_call_operand.vmem [shape: bf16[256,256], index: 0, kind: input, shape index: {}]
  %s1 = inlined_call_operand.vmem [shape: bf16[128,256], index: 1, kind: input, shape index: {}]
  %s2 = inlined_call_operand.vmem [shape: f32[4,256], index: 2, kind: input, shape index: {}]
  %s3 = inlined_call_operand.vmem [shape: f32[32,1], index: 3, kind: input, shape index: {}]
  %s4 = inlined_call_operand.vmem [shape: f32[32,1], index: 4, kind: input, shape index: {}]
  %s5 = inlined_call_operand.vmem [shape: bf16[128,256], index: 5, kind: output, shape index: {}]
  %s6 = sld [smem:[#allocation0]]
  $region30: #{generator_forward.6} parent=0
    _
  %s8 = ssub.s32 1, %s6
  %s9 = scalar_select 0, %s8, %s6
  // Predicated region
  $region2: #{generator_forward.6} parent=0 // pred_check
    _
  $region3: #{generator_forward.6} parent=0 // pred_check_branch
    %11 = sbr.rel (0) target = $region5
  $region4: #{generator_forward.6} parent=0 // pred_region
    _
  $region5: #{generator_forward.6} parent=0 // pred_fallthru
    _
  // Predicated region
  $region6: #{generator_forward.6} parent=0 // pred_check
    _
  $region7: #{generator_forward.6} parent=0 // pred_check_branch
    %13 = sbr.rel (0) target = $region9
  $region8: #{generator_forward.6} parent=0 // pred_region
    _
  $region9: #{generator_forward.6} parent=0 // pred_fallthru
    _
  // Predicated region
  $region10: #{generator_forward.6} parent=0 // pred_check
    _
  $region11: #{generator_forward.6} parent=0 // pred_check_branch
    %15 = sbr.rel (0) target = $region13
  $region12: #{generator_forward.6} parent=0 // pred_region
    _
  $region13: #{generator_forward.6} parent=0 // pred_fallthru
    _
  // Predicated region
  $region14: #{generator_forward.6} parent=0 // pred_check
    _
  $region15: #{generator_forward.6} parent=0 // pred_check_branch
    %17 = sbr.rel (0) target = $region17
  $region16: #{generator_forward.6} parent=0 // pred_region
    _
  $region17: #{generator_forward.6} parent=0 // pred_fallthru
    _
  // Predicated region
  $region18: #{generator_forward.6} parent=0 // pred_check
    _
  $region19: #{generator_forward.6} parent=0 // pred_check_branch
    %19 = sbr.rel (0) target = $region21
  $region20: #{generator_forward.6} parent=0 // pred_region
    _
  $region21: #{generator_forward.6} parent=0 // pred_fallthru
    _
  %v20 = vld [vmem:[%s1] sm:$0xff]
  %v21 = vld [vmem:[%s1 + $0x8] sm:$0xff]
  %v22 = vld [vmem:[%s1 + $0x10] sm:$0xff]
  %v23 = vld [vmem:[%s1 + $0x18] sm:$0xff]
  %v24 = vld [vmem:[%s1 + $0x20] sm:$0xff]
  %v25 = vld [vmem:[%s1 + $0x28] sm:$0xff]
  %v26 = vld [vmem:[%s1 + $0x30] sm:$0xff]
  %v27 = vld [vmem:[%s1 + $0x38] sm:$0xff]
  %v28 = vld [vmem:[%s1 + $0x40] sm:$0xff]
  %v29 = vld [vmem:[%s1 + $0x48] sm:$0xff]
  %v30 = vld [vmem:[%s1 + $0x50] sm:$0xff]
  %v31 = vld [vmem:[%s1 + $0x58] sm:$0xff]
  %v32 = vld [vmem:[%s1 + $0x60] sm:$0xff]
  %v33 = vld [vmem:[%s1 + $0x68] sm:$0xff]
  %v34 = vld [vmem:[%s1 + $0x70] sm:$0xff]
  %v35 = vld [vmem:[%s1 + $0x78] sm:$0xff]
  %v36 = vld [vmem:[%s0] sm:$0xff]
  %v37 = vld [vmem:[%s0 + $0x8] sm:$0xff]
  %v38 = vld [vmem:[%s0 + $0x10] sm:$0xff]
  %v39 = vld [vmem:[%s0 + $0x18] sm:$0xff]
  %v40 = vld [vmem:[%s0 + $0x20] sm:$0xff]
  %v41 = vld [vmem:[%s0 + $0x28] sm:$0xff]
  %v42 = vld [vmem:[%s0 + $0x30] sm:$0xff]
  %v43 = vld [vmem:[%s0 + $0x38] sm:$0xff]
  %v44 = vld [vmem:[%s0 + $0x40] sm:$0xff]
  %v45 = vld [vmem:[%s0 + $0x48] sm:$0xff]
  %v46 = vld [vmem:[%s0 + $0x50] sm:$0xff]
  %v47 = vld [vmem:[%s0 + $0x58] sm:$0xff]
  %v48 = vld [vmem:[%s0 + $0x60] sm:$0xff]
  %v49 = vld [vmem:[%s0 + $0x68] sm:$0xff]
  %v50 = vld [vmem:[%s0 + $0x70] sm:$0xff]
  %v51 = vld [vmem:[%s0 + $0x78] sm:$0xff]
  %v52 = vld [vmem:[%s0 + $0x80] sm:$0xff]
  %v53 = vld [vmem:[%s0 + $0x88] sm:$0xff]
  %v54 = vld [vmem:[%s0 + $0x90] sm:$0xff]
  %v55 = vld [vmem:[%s0 + $0x98] sm:$0xff]
  %v56 = vld [vmem:[%s0 + $0xa0] sm:$0xff]
  %v57 = vld [vmem:[%s0 + $0xa8] sm:$0xff]
  %v58 = vld [vmem:[%s0 + $0xb0] sm:$0xff]
  %v59 = vld [vmem:[%s0 + $0xb8] sm:$0xff]
  %v60 = vld [vmem:[%s0 + $0xc0] sm:$0xff]
  %v61 = vld [vmem:[%s0 + $0xc8] sm:$0xff]
  %v62 = vld [vmem:[%s0 + $0xd0] sm:$0xff]
  %v63 = vld [vmem:[%s0 + $0xd8] sm:$0xff]
  %v64 = vld [vmem:[%s0 + $0xe0] sm:$0xff]
  %v65 = vld [vmem:[%s0 + $0xe8] sm:$0xff]
  %v66 = vld [vmem:[%s0 + $0xf0] sm:$0xff]
  %v67 = vld [vmem:[%s0 + $0xf8] sm:$0xff]
  %v84 = vunpack.c.l.b16 %v20
  %v85 = vunpack.c.h.b16 %v20
  %v86 = vunpack.c.l.b16 %v21
  %v87 = vunpack.c.h.b16 %v21
  %v88 = vunpack.c.l.b16 %v22
  %v89 = vunpack.c.h.b16 %v22
  %v90 = vunpack.c.l.b16 %v23
  %v91 = vunpack.c.h.b16 %v23
  %v92 = vunpack.c.l.b16 %v24
  %v93 = vunpack.c.h.b16 %v24
  %v94 = vunpack.c.l.b16 %v25
  %v95 = vunpack.c.h.b16 %v25
  %v96 = vunpack.c.l.b16 %v26
  %v97 = vunpack.c.h.b16 %v26
  %v98 = vunpack.c.l.b16 %v27
  %v99 = vunpack.c.h.b16 %v27
  %v100 = vunpack.c.l.b16 %v28
  %v101 = vunpack.c.h.b16 %v28
  %v102 = vunpack.c.l.b16 %v29
  %v103 = vunpack.c.h.b16 %v29
  %v104 = vunpack.c.l.b16 %v30
  %v105 = vunpack.c.h.b16 %v30
  %v106 = vunpack.c.l.b16 %v31
  %v107 = vunpack.c.h.b16 %v31
  %v108 = vunpack.c.l.b16 %v32
  %v109 = vunpack.c.h.b16 %v32
  %v110 = vunpack.c.l.b16 %v33
  %v111 = vunpack.c.h.b16 %v33
  %v112 = vunpack.c.l.b16 %v34
  %v113 = vunpack.c.h.b16 %v34
  %v114 = vunpack.c.l.b16 %v35
  %v115 = vunpack.c.h.b16 %v35
  %v116 = vpack.c.b16 %v86, %v84
  %v117 = vpack.c.b16 %v87, %v85
  %v118 = vpack.c.b16 %v90, %v88
  %v119 = vpack.c.b16 %v91, %v89
  %v120 = vpack.c.b16 %v94, %v92
  %v121 = vpack.c.b16 %v95, %v93
  %v122 = vpack.c.b16 %v98, %v96
  %v123 = vpack.c.b16 %v99, %v97
  %v124 = vpack.c.b16 %v102, %v100
  %v125 = vpack.c.b16 %v103, %v101
  %v126 = vpack.c.b16 %v106, %v104
  %v127 = vpack.c.b16 %v107, %v105
  %v128 = vpack.c.b16 %v110, %v108
  %v129 = vpack.c.b16 %v111, %v109
  %v130 = vpack.c.b16 %v114, %v112
  %v131 = vpack.c.b16 %v115, %v113
  %v180 = vunpack.c.l.b16 %v36
  %v181 = vunpack.c.h.b16 %v36
  %v182 = vunpack.c.l.b16 %v37
  %v183 = vunpack.c.h.b16 %v37
  %v184 = vunpack.c.l.b16 %v38
  %v185 = vunpack.c.h.b16 %v38
  %v186 = vunpack.c.l.b16 %v39
  %v187 = vunpack.c.h.b16 %v39
  %v188 = vunpack.c.l.b16 %v40
  %v189 = vunpack.c.h.b16 %v40
  %v190 = vunpack.c.l.b16 %v41
  %v191 = vunpack.c.h.b16 %v41
  %v192 = vunpack.c.l.b16 %v42
  %v193 = vunpack.c.h.b16 %v42
  %v194 = vunpack.c.l.b16 %v43
  %v195 = vunpack.c.h.b16 %v43
  %v196 = vunpack.c.l.b16 %v44
  %v197 = vunpack.c.h.b16 %v44
  %v198 = vunpack.c.l.b16 %v45
  %v199 = vunpack.c.h.b16 %v45
  %v200 = vunpack.c.l.b16 %v46
  %v201 = vunpack.c.h.b16 %v46
  %v202 = vunpack.c.l.b16 %v47
  %v203 = vunpack.c.h.b16 %v47
  %v204 = vunpack.c.l.b16 %v48
  %v205 = vunpack.c.h.b16 %v48
  %v206 = vunpack.c.l.b16 %v49
  %v207 = vunpack.c.h.b16 %v49
  %v208 = vunpack.c.l.b16 %v50
  %v209 = vunpack.c.h.b16 %v50
  %v210 = vunpack.c.l.b16 %v51
  %v211 = vunpack.c.h.b16 %v51
  %v212 = vunpack.c.l.b16 %v52
  %v213 = vunpack.c.h.b16 %v52
  %v214 = vunpack.c.l.b16 %v53
  %v215 = vunpack.c.h.b16 %v53
  %v216 = vunpack.c.l.b16 %v54
  %v217 = vunpack.c.h.b16 %v54
  %v218 = vunpack.c.l.b16 %v55
  %v219 = vunpack.c.h.b16 %v55
  %v220 = vunpack.c.l.b16 %v56
  %v221 = vunpack.c.h.b16 %v56
  %v222 = vunpack.c.l.b16 %v57
  %v223 = vunpack.c.h.b16 %v57
  %v224 = vunpack.c.l.b16 %v58
  %v225 = vunpack.c.h.b16 %v58
  %v226 = vunpack.c.l.b16 %v59
  %v227 = vunpack.c.h.b16 %v59
  %v228 = vunpack.c.l.b16 %v60
  %v229 = vunpack.c.h.b16 %v60
  %v230 = vunpack.c.l.b16 %v61
  %v231 = vunpack.c.h.b16 %v61
  %v232 = vunpack.c.l.b16 %v62
  %v233 = vunpack.c.h.b16 %v62
  %v234 = vunpack.c.l.b16 %v63
  %v235 = vunpack.c.h.b16 %v63
  %v236 = vunpack.c.l.b16 %v64
  %v237 = vunpack.c.h.b16 %v64
  %v238 = vunpack.c.l.b16 %v65
  %v239 = vunpack.c.h.b16 %v65
  %v240 = vunpack.c.l.b16 %v66
  %v241 = vunpack.c.h.b16 %v66
  %v242 = vunpack.c.l.b16 %v67
  %v243 = vunpack.c.h.b16 %v67
  %v244 = vpack.c.b16 %v182, %v180
  %v245 = vpack.c.b16 %v183, %v181
  %v246 = vpack.c.b16 %v186, %v184
  %v247 = vpack.c.b16 %v187, %v185
  %v248 = vpack.c.b16 %v190, %v188
  %v249 = vpack.c.b16 %v191, %v189
  %v250 = vpack.c.b16 %v194, %v192
  %v251 = vpack.c.b16 %v195, %v193
  %v252 = vpack.c.b16 %v198, %v196
  %v253 = vpack.c.b16 %v199, %v197
  %v254 = vpack.c.b16 %v202, %v200
  %v255 = vpack.c.b16 %v203, %v201
  %v256 = vpack.c.b16 %v206, %v204
  %v257 = vpack.c.b16 %v207, %v205
  %v258 = vpack.c.b16 %v210, %v208
  %v259 = vpack.c.b16 %v211, %v209
  %v260 = vpack.c.b16 %v214, %v212
  %v261 = vpack.c.b16 %v215, %v213
  %v262 = vpack.c.b16 %v218, %v216
  %v263 = vpack.c.b16 %v219, %v217
  %v264 = vpack.c.b16 %v222, %v220
  %v265 = vpack.c.b16 %v223, %v221
  %v266 = vpack.c.b16 %v226, %v224
  %v267 = vpack.c.b16 %v227, %v225
  %v268 = vpack.c.b16 %v230, %v228
  %v269 = vpack.c.b16 %v231, %v229
  %v270 = vpack.c.b16 %v234, %v232
  %v271 = vpack.c.b16 %v235, %v233
  %v272 = vpack.c.b16 %v238, %v236
  %v273 = vpack.c.b16 %v239, %v237
  %v274 = vpack.c.b16 %v242, %v240
  %v275 = vpack.c.b16 %v243, %v241
  %308 = vmatprep.subr.bf16.mxu0 %v245
  %309 = vmatpush1.bf16.msra.mxu0 %v244
  %310 = vmatprep.subr.bf16.mxu0 %v247
  %311 = vmatpush1.bf16.msra.mxu0 %v246
  %312 = vmatprep.subr.bf16.mxu0 %v249
  %313 = vmatpush1.bf16.msra.mxu0 %v248
  %314 = vmatprep.subr.bf16.mxu0 %v251
  %315 = vmatpush1.bf16.msra.mxu0 %v250
  %316 = vmatprep.subr.bf16.mxu0 %v253
  %317 = vmatpush1.bf16.msra.mxu0 %v252
  %318 = vmatprep.subr.bf16.mxu0 %v255
  %319 = vmatpush1.bf16.msra.mxu0 %v254
  %320 = vmatprep.subr.bf16.mxu0 %v257
  %321 = vmatpush1.bf16.msra.mxu0 %v256
  %322 = vmatprep.subr.bf16.mxu0 %v259
  %323 = vmatpush1.bf16.msra.mxu0 %v258
  %324 = vmatprep.subr.bf16.mxu0 %v261
  %325 = vmatpush1.bf16.msra.mxu0 %v260
  %326 = vmatprep.subr.bf16.mxu0 %v263
  %327 = vmatpush1.bf16.msra.mxu0 %v262
  %328 = vmatprep.subr.bf16.mxu0 %v265
  %329 = vmatpush1.bf16.msra.mxu0 %v264
  %330 = vmatprep.subr.bf16.mxu0 %v267
  %331 = vmatpush1.bf16.msra.mxu0 %v266
  %332 = vmatprep.subr.bf16.mxu0 %v269
  %333 = vmatpush1.bf16.msra.mxu0 %v268
  %334 = vmatprep.subr.bf16.mxu0 %v271
  %335 = vmatpush1.bf16.msra.mxu0 %v270
  %336 = vmatprep.subr.bf16.mxu0 %v273
  %337 = vmatpush1.bf16.msra.mxu0 %v272
  %338 = vmatprep.subr.bf16.mxu0 %v275
  %339 = vmatpush1.bf16.msra.mxu0 %v274
  %340 = vmatprep.mubr.bf16.mxu0 %v117
  %341 = vmatmul.mubr.bf16.gmra.mrb[0].mxu0 %v116
  %v342 = vpop.f32.mrb[0].mxu0
  %v343 = vadd.f32 0.0, %v342
  %v344 = vpop.f32.mrb[0].mxu0
  %v345 = vadd.f32 0.0, %v344
  %v346 = vpop.f32.mrb[0].mxu0
  %v347 = vadd.f32 0.0, %v346
  %v348 = vpop.f32.mrb[0].mxu0
  %v349 = vadd.f32 0.0, %v348
  %350 = vmatprep.mubr.bf16.mxu0 %v119
  %351 = vmatmul.mubr.bf16.gmra.mrb[0].mxu0 %v118
  %v352 = vpop.f32.mrb[0].mxu0
  %v353 = vadd.f32 0.0, %v352
  %v354 = vpop.f32.mrb[0].mxu0
  %v355 = vadd.f32 0.0, %v354
  %v356 = vpop.f32.mrb[0].mxu0
  %v357 = vadd.f32 0.0, %v356
  %v358 = vpop.f32.mrb[0].mxu0
  %v359 = vadd.f32 0.0, %v358
  %360 = vmatprep.mubr.bf16.mxu0 %v121
  %361 = vmatmul.mubr.bf16.gmra.mrb[0].mxu0 %v120
  %v362 = vpop.f32.mrb[0].mxu0
  %v363 = vadd.f32 0.0, %v362
  %v364 = vpop.f32.mrb[0].mxu0
  %v365 = vadd.f32 0.0, %v364
  %v366 = vpop.f32.mrb[0].mxu0
  %v367 = vadd.f32 0.0, %v366
  %v368 = vpop.f32.mrb[0].mxu0
  %v369 = vadd.f32 0.0, %v368
  %370 = vmatprep.mubr.bf16.mxu0 %v123
  %371 = vmatmul.mubr.bf16.gmra.mrb[0].mxu0 %v122
  %v372 = vpop.f32.mrb[0].mxu0
  %v373 = vadd.f32 0.0, %v372
  %v374 = vpop.f32.mrb[0].mxu0
  %v375 = vadd.f32 0.0, %v374
  %v376 = vpop.f32.mrb[0].mxu0
  %v377 = vadd.f32 0.0, %v376
  %v378 = vpop.f32.mrb[0].mxu0
  %v379 = vadd.f32 0.0, %v378
  %380 = vmatprep.mubr.bf16.mxu0 %v125
  %381 = vmatmul.mubr.bf16.gmra.mrb[0].mxu0 %v124
  %v382 = vpop.f32.mrb[0].mxu0
  %v383 = vadd.f32 0.0, %v382
  %v384 = vpop.f32.mrb[0].mxu0
  %v385 = vadd.f32 0.0, %v384
  %v386 = vpop.f32.mrb[0].mxu0
  %v387 = vadd.f32 0.0, %v386
  %v388 = vpop.f32.mrb[0].mxu0
  %v389 = vadd.f32 0.0, %v388
  %390 = vmatprep.mubr.bf16.mxu0 %v127
  %391 = vmatmul.mubr.bf16.gmra.mrb[0].mxu0 %v126
  %v392 = vpop.f32.mrb[0].mxu0
  %v393 = vadd.f32 0.0, %v392
  %v394 = vpop.f32.mrb[0].mxu0
  %v395 = vadd.f32 0.0, %v394
  %v396 = vpop.f32.mrb[0].mxu0
  %v397 = vadd.f32 0.0, %v396
  %v398 = vpop.f32.mrb[0].mxu0
  %v399 = vadd.f32 0.0, %v398
  %400 = vmatprep.mubr.bf16.mxu0 %v129
  %401 = vmatmul.mubr.bf16.gmra.mrb[0].mxu0 %v128
  %v402 = vpop.f32.mrb[0].mxu0
  %v403 = vadd.f32 0.0, %v402
  %v404 = vpop.f32.mrb[0].mxu0
  %v405 = vadd.f32 0.0, %v404
  %v406 = vpop.f32.mrb[0].mxu0
  %v407 = vadd.f32 0.0, %v406
  %v408 = vpop.f32.mrb[0].mxu0
  %v409 = vadd.f32 0.0, %v408
  %410 = vmatprep.mubr.bf16.mxu0 %v131
  %411 = vmatmul.mubr.bf16.gmra.mrb[0].mxu0 %v130
  %v412 = vpop.f32.mrb[0].mxu0
  %v413 = vadd.f32 0.0, %v412
  %v414 = vpop.f32.mrb[0].mxu0
  %v415 = vadd.f32 0.0, %v414
  %v416 = vpop.f32.mrb[0].mxu0
  %v417 = vadd.f32 0.0, %v416
  %v418 = vpop.f32.mrb[0].mxu0
  %v419 = vadd.f32 0.0, %v418
  %420 = vdwg.mxu0
  %v421 = vld [vmem:[%s2] sm:$0xff]
  %v423 = vlaneseq
  %v424 = vshrl.u32 %v423, 7
  %v425 = vsub.s32 0, %v424
  %v426 = vrot.slane %v421, %v425
  %v427 = vlaneseq
  %v428 = vshrl.u32 %v427, 7
  %v429 = vsub.s32 4, %v428
  %v430 = vrot.slane %v421, %v429
  %v433 = vlaneseq
  %v434 = vshrl.u32 %v433, 7
  %v435 = vsub.s32 0, %v434
  %v436 = vrot.slane %v426, %v435
  %v437 = vlaneseq
  %v438 = vshrl.u32 %v437, 7
  %v439 = vsub.s32 0, %v438
  %v440 = vrot.slane %v430, %v439
  %v441 = vmul.f32 %v343, %v436
  %v442 = vmul.f32 %v345, %v440
  %v443 = vmul.f32 %v347, %v436
  %v444 = vmul.f32 %v349, %v440
  %v445 = vmul.f32 %v353, %v436
  %v446 = vmul.f32 %v355, %v440
  %v447 = vmul.f32 %v357, %v436
  %v448 = vmul.f32 %v359, %v440
  %v449 = vadd.f32 %v441, %v442
  %450 = vadd.xlane.f32.xlu0 %v449
  %v451 = vpop.xlane.xlu0 %450
  %v452 = vadd.f32 %v443, %v444
  %453 = vadd.xlane.f32.xlu0 %v452
  %v454 = vpop.xlane.xlu0 %453
  %v455 = vadd.f32 %v445, %v446
  %456 = vadd.xlane.f32.xlu0 %v455
  %v457 = vpop.xlane.xlu0 %456
  %v458 = vadd.f32 %v447, %v448
  %459 = vadd.xlane.f32.xlu0 %v458
  %v460 = vpop.xlane.xlu0 %459
  %v461 = vadd.f32 %v451, 0.0
  %v462 = vadd.f32 %v454, 0.0
  %v463 = vadd.f32 %v457, 0.0
  %v464 = vadd.f32 %v460, 0.0
  %v465 = vmul.f32 %v441, %v343
  %v466 = vmul.f32 %v442, %v345
  %v467 = vmul.f32 %v443, %v347
  %v468 = vmul.f32 %v444, %v349
  %v469 = vmul.f32 %v445, %v353
  %v470 = vmul.f32 %v446, %v355
  %v471 = vmul.f32 %v447, %v357
  %v472 = vmul.f32 %v448, %v359
  %v473 = vadd.f32 %v465, %v466
  %474 = vadd.xlane.f32.xlu0 %v473
  %v475 = vpop.xlane.xlu0 %474
  %v476 = vadd.f32 %v467, %v468
  %477 = vadd.xlane.f32.xlu0 %v476
  %v478 = vpop.xlane.xlu0 %477
  %v479 = vadd.f32 %v469, %v470
  %480 = vadd.xlane.f32.xlu0 %v479
  %v481 = vpop.xlane.xlu0 %480
  %v482 = vadd.f32 %v471, %v472
  %483 = vadd.xlane.f32.xlu0 %v482
  %v484 = vpop.xlane.xlu0 %483
  %v485 = vadd.f32 %v475, 0.0
  %v486 = vadd.f32 %v478, 0.0
  %v487 = vadd.f32 %v481, 0.0
  %v488 = vadd.f32 %v484, 0.0
  %v489 = vlaneseq
  %v490 = vshrl.u32 %v489, 7
  %v491 = vsub.s32 1, %v490
  %v492 = vrot.slane %v421, %v491
  %v493 = vlaneseq
  %v494 = vshrl.u32 %v493, 7
  %v495 = vsub.s32 5, %v494
  %v496 = vrot.slane %v421, %v495
  %v499 = vlaneseq
  %v500 = vshrl.u32 %v499, 7
  %v501 = vsub.s32 1, %v500
  %v502 = vrot.slane %v492, %v501
  %v503 = vlaneseq
  %v504 = vshrl.u32 %v503, 7
  %v505 = vsub.s32 1, %v504
  %v506 = vrot.slane %v496, %v505
  %v507 = vmul.f32 %v363, %v502
  %v508 = vmul.f32 %v365, %v506
  %v509 = vmul.f32 %v367, %v502
  %v510 = vmul.f32 %v369, %v506
  %v511 = vmul.f32 %v373, %v502
  %v512 = vmul.f32 %v375, %v506
  %v513 = vmul.f32 %v377, %v502
  %v514 = vmul.f32 %v379, %v506
  %v515 = vadd.f32 %v507, %v508
  %516 = vadd.xlane.f32.xlu0 %v515
  %v517 = vpop.xlane.xlu0 %516
  %v518 = vadd.f32 %v509, %v510
  %519 = vadd.xlane.f32.xlu0 %v518
  %v520 = vpop.xlane.xlu0 %519
  %v521 = vadd.f32 %v511, %v512
  %522 = vadd.xlane.f32.xlu0 %v521
  %v523 = vpop.xlane.xlu0 %522
  %v524 = vadd.f32 %v513, %v514
  %525 = vadd.xlane.f32.xlu0 %v524
  %v526 = vpop.xlane.xlu0 %525
  %v527 = vadd.f32 %v461, %v517
  %v528 = vadd.f32 %v462, %v520
  %v529 = vadd.f32 %v463, %v523
  %v530 = vadd.f32 %v464, %v526
  %v531 = vmul.f32 %v507, %v363
  %v532 = vmul.f32 %v508, %v365
  %v533 = vmul.f32 %v509, %v367
  %v534 = vmul.f32 %v510, %v369
  %v535 = vmul.f32 %v511, %v373
  %v536 = vmul.f32 %v512, %v375
  %v537 = vmul.f32 %v513, %v377
  %v538 = vmul.f32 %v514, %v379
  %v539 = vadd.f32 %v531, %v532
  %540 = vadd.xlane.f32.xlu0 %v539
  %v541 = vpop.xlane.xlu0 %540
  %v542 = vadd.f32 %v533, %v534
  %543 = vadd.xlane.f32.xlu0 %v542
  %v544 = vpop.xlane.xlu0 %543
  %v545 = vadd.f32 %v535, %v536
  %546 = vadd.xlane.f32.xlu0 %v545
  %v547 = vpop.xlane.xlu0 %546
  %v548 = vadd.f32 %v537, %v538
  %549 = vadd.xlane.f32.xlu0 %v548
  %v550 = vpop.xlane.xlu0 %549
  %v551 = vadd.f32 %v485, %v541
  %v552 = vadd.f32 %v486, %v544
  %v553 = vadd.f32 %v487, %v547
  %v554 = vadd.f32 %v488, %v550
  %v555 = vlaneseq
  %v556 = vshrl.u32 %v555, 7
  %v557 = vsub.s32 2, %v556
  %v558 = vrot.slane %v421, %v557
  %v559 = vlaneseq
  %v560 = vshrl.u32 %v559, 7
  %v561 = vsub.s32 6, %v560
  %v562 = vrot.slane %v421, %v561
  %v565 = vlaneseq
  %v566 = vshrl.u32 %v565, 7
  %v567 = vsub.s32 2, %v566
  %v568 = vrot.slane %v558, %v567
  %v569 = vlaneseq
  %v570 = vshrl.u32 %v569, 7
  %v571 = vsub.s32 2, %v570
  %v572 = vrot.slane %v562, %v571
  %v573 = vmul.f32 %v383, %v568
  %v574 = vmul.f32 %v385, %v572
  %v575 = vmul.f32 %v387, %v568
  %v576 = vmul.f32 %v389, %v572
  %v577 = vmul.f32 %v393, %v568
  %v578 = vmul.f32 %v395, %v572
  %v579 = vmul.f32 %v397, %v568
  %v580 = vmul.f32 %v399, %v572
  %v581 = vadd.f32 %v573, %v574
  %582 = vadd.xlane.f32.xlu0 %v581
  %v583 = vpop.xlane.xlu0 %582
  %v584 = vadd.f32 %v575, %v576
  %585 = vadd.xlane.f32.xlu0 %v584
  %v586 = vpop.xlane.xlu0 %585
  %v587 = vadd.f32 %v577, %v578
  %588 = vadd.xlane.f32.xlu0 %v587
  %v589 = vpop.xlane.xlu0 %588
  %v590 = vadd.f32 %v579, %v580
  %591 = vadd.xlane.f32.xlu0 %v590
  %v592 = vpop.xlane.xlu0 %591
  %v593 = vadd.f32 %v527, %v583
  %v594 = vadd.f32 %v528, %v586
  %v595 = vadd.f32 %v529, %v589
  %v596 = vadd.f32 %v530, %v592
  %v597 = vmul.f32 %v573, %v383
  %v598 = vmul.f32 %v574, %v385
  %v599 = vmul.f32 %v575, %v387
  %v600 = vmul.f32 %v576, %v389
  %v601 = vmul.f32 %v577, %v393
  %v602 = vmul.f32 %v578, %v395
  %v603 = vmul.f32 %v579, %v397
  %v604 = vmul.f32 %v580, %v399
  %v605 = vadd.f32 %v597, %v598
  %606 = vadd.xlane.f32.xlu0 %v605
  %v607 = vpop.xlane.xlu0 %606
  %v608 = vadd.f32 %v599, %v600
  %609 = vadd.xlane.f32.xlu0 %v608
  %v610 = vpop.xlane.xlu0 %609
  %v611 = vadd.f32 %v601, %v602
  %612 = vadd.xlane.f32.xlu0 %v611
  %v613 = vpop.xlane.xlu0 %612
  %v614 = vadd.f32 %v603, %v604
  %615 = vadd.xlane.f32.xlu0 %v614
  %v616 = vpop.xlane.xlu0 %615
  %v617 = vadd.f32 %v551, %v607
  %v618 = vadd.f32 %v552, %v610
  %v619 = vadd.f32 %v553, %v613
  %v620 = vadd.f32 %v554, %v616
  %v621 = vlaneseq
  %v622 = vshrl.u32 %v621, 7
  %v623 = vsub.s32 3, %v622
  %v624 = vrot.slane %v421, %v623
  %v625 = vlaneseq
  %v626 = vshrl.u32 %v625, 7
  %v627 = vsub.s32 7, %v626
  %v628 = vrot.slane %v421, %v627
  %v631 = vlaneseq
  %v632 = vshrl.u32 %v631, 7
  %v633 = vsub.s32 3, %v632
  %v634 = vrot.slane %v624, %v633
  %v635 = vlaneseq
  %v636 = vshrl.u32 %v635, 7
  %v637 = vsub.s32 3, %v636
  %v638 = vrot.slane %v628, %v637
  %v639 = vmul.f32 %v403, %v634
  %v640 = vmul.f32 %v405, %v638
  %v641 = vmul.f32 %v407, %v634
  %v642 = vmul.f32 %v409, %v638
  %v643 = vmul.f32 %v413, %v634
  %v644 = vmul.f32 %v415, %v638
  %v645 = vmul.f32 %v417, %v634
  %v646 = vmul.f32 %v419, %v638
  %v647 = vadd.f32 %v639, %v640
  %648 = vadd.xlane.f32.xlu0 %v647
  %v649 = vpop.xlane.xlu0 %648
  %v650 = vadd.f32 %v641, %v642
  %651 = vadd.xlane.f32.xlu0 %v650
  %v652 = vpop.xlane.xlu0 %651
  %v653 = vadd.f32 %v643, %v644
  %654 = vadd.xlane.f32.xlu0 %v653
  %v655 = vpop.xlane.xlu0 %654
  %v656 = vadd.f32 %v645, %v646
  %657 = vadd.xlane.f32.xlu0 %v656
  %v658 = vpop.xlane.xlu0 %657
  %v659 = vadd.f32 %v593, %v649
  %v660 = vadd.f32 %v594, %v652
  %v661 = vadd.f32 %v595, %v655
  %v662 = vadd.f32 %v596, %v658
  %v663 = vmul.f32 %v639, %v403
  %v664 = vmul.f32 %v640, %v405
  %v665 = vmul.f32 %v641, %v407
  %v666 = vmul.f32 %v642, %v409
  %v667 = vmul.f32 %v643, %v413
  %v668 = vmul.f32 %v644, %v415
  %v669 = vmul.f32 %v645, %v417
  %v670 = vmul.f32 %v646, %v419
  %v671 = vadd.f32 %v663, %v664
  %672 = vadd.xlane.f32.xlu0 %v671
  %v673 = vpop.xlane.xlu0 %672
  %v674 = vadd.f32 %v665, %v666
  %675 = vadd.xlane.f32.xlu0 %v674
  %v676 = vpop.xlane.xlu0 %675
  %v677 = vadd.f32 %v667, %v668
  %678 = vadd.xlane.f32.xlu0 %v677
  %v679 = vpop.xlane.xlu0 %678
  %v680 = vadd.f32 %v669, %v670
  %681 = vadd.xlane.f32.xlu0 %v680
  %v682 = vpop.xlane.xlu0 %681
  %v683 = vadd.f32 %v617, %v673
  %v684 = vadd.f32 %v618, %v676
  %v685 = vadd.f32 %v619, %v679
  %v686 = vadd.f32 %v620, %v682
  %v687 = vmul.f32 %v659, 0.0078125
  %v688 = vmul.f32 %v660, 0.0078125
  %v689 = vmul.f32 %v661, 0.0078125
  %v690 = vmul.f32 %v662, 0.0078125
  %v691 = vmul.f32 %v683, 0.0078125
  %v692 = vmul.f32 %v684, 0.0078125
  %v693 = vmul.f32 %v685, 0.0078125
  %v694 = vmul.f32 %v686, 0.0078125
  %v695 = vmul.f32 %v687, %v687
  %v696 = vmul.f32 %v688, %v688
  %v697 = vmul.f32 %v689, %v689
  %v698 = vmul.f32 %v690, %v690
  %v699 = vsub.f32 %v691, %v695
  %v700 = vsub.f32 %v692, %v696
  %v701 = vsub.f32 %v693, %v697
  %v702 = vsub.f32 %v694, %v698
  %v703 = vmax.f32 %v699, 0.0
  %v704 = vmax.f32 %v700, 0.0
  %v705 = vmax.f32 %v701, 0.0
  %v706 = vmax.f32 %v702, 0.0
  %v707 = vadd.f32 %v703, 1e-05
  %v708 = vadd.f32 %v704, 1e-05
  %v709 = vadd.f32 %v705, 1e-05
  %v710 = vadd.f32 %v706, 1e-05
  %v711 = vrsqrt.pop %v707
  %v712 = vrsqrt.pop %v708
  %v713 = vrsqrt.pop %v709
  %v714 = vrsqrt.pop %v710
  %v715 = vld [vmem:[%s3] sm:$0xff]
  %v716 = vld [vmem:[%s3 + $0x8] sm:$0xff]
  %v717 = vld [vmem:[%s3 + $0x10] sm:$0xff]
  %v718 = vld [vmem:[%s3 + $0x18] sm:$0xff]
  %v719 = vmul.f32 %v711, %v715
  %v720 = vmul.f32 %v712, %v716
  %v721 = vmul.f32 %v713, %v717
  %v722 = vmul.f32 %v714, %v718
  %v723 = vld [vmem:[%s4] sm:$0xff]
  %v724 = vld [vmem:[%s4 + $0x8] sm:$0xff]
  %v725 = vld [vmem:[%s4 + $0x10] sm:$0xff]
  %v726 = vld [vmem:[%s4 + $0x18] sm:$0xff]
  %v727 = vmul.f32 %v687, %v719
  %v728 = vmul.f32 %v688, %v720
  %v729 = vmul.f32 %v689, %v721
  %v730 = vmul.f32 %v690, %v722
  %v731 = vsub.f32 %v723, %v727
  %v732 = vsub.f32 %v724, %v728
  %v733 = vsub.f32 %v725, %v729
  %v734 = vsub.f32 %v726, %v730
  %736 = vset.pattern.permute.xlu0 0
  %737 = vperm.xlu0 %736, %v719
  %v738 = vpop.permute.xlu0 %737
  %741 = vset.pattern.permute.xlu0 0
  %742 = vperm.xlu0 %741, %v720
  %v743 = vpop.permute.xlu0 %742
  %746 = vset.pattern.permute.xlu0 0
  %747 = vperm.xlu0 %746, %v721
  %v748 = vpop.permute.xlu0 %747
  %751 = vset.pattern.permute.xlu0 0
  %752 = vperm.xlu0 %751, %v722
  %v753 = vpop.permute.xlu0 %752
  %v755 = vmul.f32 %v343, %v738
  %v756 = vmul.f32 %v345, %v738
  %v757 = vmul.f32 %v347, %v743
  %v758 = vmul.f32 %v349, %v743
  %v759 = vmul.f32 %v353, %v748
  %v760 = vmul.f32 %v355, %v748
  %v761 = vmul.f32 %v357, %v753
  %v762 = vmul.f32 %v359, %v753
  %764 = vset.pattern.permute.xlu0 0
  %765 = vperm.xlu0 %764, %v731
  %v766 = vpop.permute.xlu0 %765
  %769 = vset.pattern.permute.xlu0 0
  %770 = vperm.xlu0 %769, %v732
  %v771 = vpop.permute.xlu0 %770
  %774 = vset.pattern.permute.xlu0 0
  %775 = vperm.xlu0 %774, %v733
  %v776 = vpop.permute.xlu0 %775
  %779 = vset.pattern.permute.xlu0 0
  %780 = vperm.xlu0 %779, %v734
  %v781 = vpop.permute.xlu0 %780
  %v783 = vadd.f32 %v755, %v766
  %v784 = vadd.f32 %v756, %v766
  %v785 = vadd.f32 %v757, %v771
  %v786 = vadd.f32 %v758, %v771
  %v787 = vadd.f32 %v759, %v776
  %v788 = vadd.f32 %v760, %v776
  %v789 = vadd.f32 %v761, %v781
  %v790 = vadd.f32 %v762, %v781
  %v791 = vmax.f32 %v783, 0.0
  %v792 = vmax.f32 %v784, 0.0
  %v793 = vmax.f32 %v785, 0.0
  %v794 = vmax.f32 %v786, 0.0
  %v795 = vmax.f32 %v787, 0.0
  %v796 = vmax.f32 %v788, 0.0
  %v797 = vmax.f32 %v789, 0.0
  %v798 = vmax.f32 %v790, 0.0
  %v799 = vpack.c.bf16 %v793, %v791
  %v800 = vpack.c.bf16 %v794, %v792
  %v801 = vpack.c.bf16 %v797, %v795
  %v802 = vpack.c.bf16 %v798, %v796
  %v807 = vunpack.c.l.b16 %v799
  %v808 = vunpack.c.l.b16 %v800
  %v809 = vunpack.c.h.b16 %v799
  %v810 = vunpack.c.h.b16 %v800
  %v811 = vunpack.c.l.b16 %v801
  %v812 = vunpack.c.l.b16 %v802
  %v813 = vunpack.c.h.b16 %v801
  %v814 = vunpack.c.h.b16 %v802
  %v815 = vpack.c.b16 %v808, %v807
  %v816 = vpack.c.b16 %v810, %v809
  %v817 = vpack.c.b16 %v812, %v811
  %v818 = vpack.c.b16 %v814, %v813
  %823 = vst [vmem:[%s5] sm:$0xff] %v815
  %824 = vst [vmem:[%s5 + $0x8] sm:$0xff] %v816
  %825 = vst [vmem:[%s5 + $0x10] sm:$0xff] %v817
  %826 = vst [vmem:[%s5 + $0x18] sm:$0xff] %v818
  %v827 = vmul.f32 %v363, %v738
  %v828 = vmul.f32 %v365, %v738
  %v829 = vmul.f32 %v367, %v743
  %v830 = vmul.f32 %v369, %v743
  %v831 = vmul.f32 %v373, %v748
  %v832 = vmul.f32 %v375, %v748
  %v833 = vmul.f32 %v377, %v753
  %v834 = vmul.f32 %v379, %v753
  %v835 = vadd.f32 %v827, %v766
  %v836 = vadd.f32 %v828, %v766
  %v837 = vadd.f32 %v829, %v771
  %v838 = vadd.f32 %v830, %v771
  %v839 = vadd.f32 %v831, %v776
  %v840 = vadd.f32 %v832, %v776
  %v841 = vadd.f32 %v833, %v781
  %v842 = vadd.f32 %v834, %v781
  %v843 = vmax.f32 %v835, 0.0
  %v844 = vmax.f32 %v836, 0.0
  %v845 = vmax.f32 %v837, 0.0
  %v846 = vmax.f32 %v838, 0.0
  %v847 = vmax.f32 %v839, 0.0
  %v848 = vmax.f32 %v840, 0.0
  %v849 = vmax.f32 %v841, 0.0
  %v850 = vmax.f32 %v842, 0.0
  %v851 = vpack.c.bf16 %v845, %v843
  %v852 = vpack.c.bf16 %v846, %v844
  %v853 = vpack.c.bf16 %v849, %v847
  %v854 = vpack.c.bf16 %v850, %v848
  %v859 = vunpack.c.l.b16 %v851
  %v860 = vunpack.c.l.b16 %v852
  %v861 = vunpack.c.h.b16 %v851
  %v862 = vunpack.c.h.b16 %v852
  %v863 = vunpack.c.l.b16 %v853
  %v864 = vunpack.c.l.b16 %v854
  %v865 = vunpack.c.h.b16 %v853
  %v866 = vunpack.c.h.b16 %v854
  %v867 = vpack.c.b16 %v860, %v859
  %v868 = vpack.c.b16 %v862, %v861
  %v869 = vpack.c.b16 %v864, %v863
  %v870 = vpack.c.b16 %v866, %v865
  %875 = vst [vmem:[%s5 + $0x20] sm:$0xff] %v867
  %876 = vst [vmem:[%s5 + $0x28] sm:$0xff] %v868
  %877 = vst [vmem:[%s5 + $0x30] sm:$0xff] %v869
  %878 = vst [vmem:[%s5 + $0x38] sm:$0xff] %v870
  %v879 = vmul.f32 %v383, %v738
  %v880 = vmul.f32 %v385, %v738
  %v881 = vmul.f32 %v387, %v743
  %v882 = vmul.f32 %v389, %v743
  %v883 = vmul.f32 %v393, %v748
  %v884 = vmul.f32 %v395, %v748
  %v885 = vmul.f32 %v397, %v753
  %v886 = vmul.f32 %v399, %v753
  %v887 = vadd.f32 %v879, %v766
  %v888 = vadd.f32 %v880, %v766
  %v889 = vadd.f32 %v881, %v771
  %v890 = vadd.f32 %v882, %v771
  %v891 = vadd.f32 %v883, %v776
  %v892 = vadd.f32 %v884, %v776
  %v893 = vadd.f32 %v885, %v781
  %v894 = vadd.f32 %v886, %v781
  %v895 = vmax.f32 %v887, 0.0
  %v896 = vmax.f32 %v888, 0.0
  %v897 = vmax.f32 %v889, 0.0
  %v898 = vmax.f32 %v890, 0.0
  %v899 = vmax.f32 %v891, 0.0
  %v900 = vmax.f32 %v892, 0.0
  %v901 = vmax.f32 %v893, 0.0
  %v902 = vmax.f32 %v894, 0.0
  %v903 = vpack.c.bf16 %v897, %v895
  %v904 = vpack.c.bf16 %v898, %v896
  %v905 = vpack.c.bf16 %v901, %v899
  %v906 = vpack.c.bf16 %v902, %v900
  %v911 = vunpack.c.l.b16 %v903
  %v912 = vunpack.c.l.b16 %v904
  %v913 = vunpack.c.h.b16 %v903
  %v914 = vunpack.c.h.b16 %v904
  %v915 = vunpack.c.l.b16 %v905
  %v916 = vunpack.c.l.b16 %v906
  %v917 = vunpack.c.h.b16 %v905
  %v918 = vunpack.c.h.b16 %v906
  %v919 = vpack.c.b16 %v912, %v911
  %v920 = vpack.c.b16 %v914, %v913
  %v921 = vpack.c.b16 %v916, %v915
  %v922 = vpack.c.b16 %v918, %v917
  %927 = vst [vmem:[%s5 + $0x40] sm:$0xff] %v919
  %928 = vst [vmem:[%s5 + $0x48] sm:$0xff] %v920
  %929 = vst [vmem:[%s5 + $0x50] sm:$0xff] %v921
  %930 = vst [vmem:[%s5 + $0x58] sm:$0xff] %v922
  %v931 = vmul.f32 %v403, %v738
  %v932 = vmul.f32 %v405, %v738
  %v933 = vmul.f32 %v407, %v743
  %v934 = vmul.f32 %v409, %v743
  %v935 = vmul.f32 %v413, %v748
  %v936 = vmul.f32 %v415, %v748
  %v937 = vmul.f32 %v417, %v753
  %v938 = vmul.f32 %v419, %v753
  %v939 = vadd.f32 %v931, %v766
  %v940 = vadd.f32 %v932, %v766
  %v941 = vadd.f32 %v933, %v771
  %v942 = vadd.f32 %v934, %v771
  %v943 = vadd.f32 %v935, %v776
  %v944 = vadd.f32 %v936, %v776
  %v945 = vadd.f32 %v937, %v781
  %v946 = vadd.f32 %v938, %v781
  %v947 = vmax.f32 %v939, 0.0
  %v948 = vmax.f32 %v940, 0.0
  %v949 = vmax.f32 %v941, 0.0
  %v950 = vmax.f32 %v942, 0.0
  %v951 = vmax.f32 %v943, 0.0
  %v952 = vmax.f32 %v944, 0.0
  %v953 = vmax.f32 %v945, 0.0
  %v954 = vmax.f32 %v946, 0.0
  %v955 = vpack.c.bf16 %v949, %v947
  %v956 = vpack.c.bf16 %v950, %v948
  %v957 = vpack.c.bf16 %v953, %v951
  %v958 = vpack.c.bf16 %v954, %v952
  %v963 = vunpack.c.l.b16 %v955
  %v964 = vunpack.c.l.b16 %v956
  %v965 = vunpack.c.h.b16 %v955
  %v966 = vunpack.c.h.b16 %v956
  %v967 = vunpack.c.l.b16 %v957
  %v968 = vunpack.c.l.b16 %v958
  %v969 = vunpack.c.h.b16 %v957
  %v970 = vunpack.c.h.b16 %v958
  %v971 = vpack.c.b16 %v964, %v963
  %v972 = vpack.c.b16 %v966, %v965
  %v973 = vpack.c.b16 %v968, %v967
  %v974 = vpack.c.b16 %v970, %v969
  %979 = vst [vmem:[%s5 + $0x60] sm:$0xff] %v971
  %980 = vst [vmem:[%s5 + $0x68] sm:$0xff] %v972
  %981 = vst [vmem:[%s5 + $0x70] sm:$0xff] %v973
  %982 = vst [vmem:[%s5 + $0x78] sm:$0xff] %v974
  // Predicated region
  $region22: #{generator_forward.6} parent=0 // pred_check
    _
  $region23: #{generator_forward.6} parent=0 // pred_check_branch
    %984 = sbr.rel (0) target = $region25
  $region24: #{generator_forward.6} parent=0 // pred_region
    _
  $region25: #{generator_forward.6} parent=0 // pred_fallthru
    _
  // Predicated region
  $region26: #{generator_forward.6} parent=0 // pred_check
    _
  $region27: #{generator_forward.6} parent=0 // pred_check_branch
    %986 = sbr.rel (0) target = $region29
  $region28: #{generator_forward.6} parent=0 // pred_region
    _
  $region29: #{generator_forward.6} parent=0 // pred_fallthru
    _

// kernel: generator_forward.7
$region0: #{generator_forward.7}
  #allocation0 [shape = 'u32[]', space=smem, size = 0x4, offset = 0x4, fixed_abs, tag = 'smem constant byte address 0x4 - core index']
  #allocation1 [shape = 'u32[144,128]{1,0:T(1,128)}', space=vmem, size = 0x12000, scoped, tag = 'internal scratch']
  %s0 = inlined_call_operand.vmem [shape: bf16[128,256], index: 0, kind: input, shape index: {}]
  %s1 = inlined_call_operand.vmem [shape: bf16[64,128], index: 1, kind: input, shape index: {}]
  %s2 = inlined_call_operand.vmem [shape: f32[4,256], index: 2, kind: input, shape index: {}]
  %s3 = inlined_call_operand.vmem [shape: f32[16,1], index: 3, kind: input, shape index: {}]
  %s4 = inlined_call_operand.vmem [shape: f32[16,1], index: 4, kind: input, shape index: {}]
  %s5 = inlined_call_operand.vmem [shape: bf16[64,256], index: 5, kind: output, shape index: {}]
  %s6 = sld [smem:[#allocation0]]
  $region30: #{generator_forward.7} parent=0
    _
  %s8 = ssub.s32 1, %s6
  %s9 = scalar_select 0, %s8, %s6
  // Predicated region
  $region2: #{generator_forward.7} parent=0 // pred_check
    _
  $region3: #{generator_forward.7} parent=0 // pred_check_branch
    %11 = sbr.rel (0) target = $region5
  $region4: #{generator_forward.7} parent=0 // pred_region
    _
  $region5: #{generator_forward.7} parent=0 // pred_fallthru
    _
  // Predicated region
  $region6: #{generator_forward.7} parent=0 // pred_check
    _
  $region7: #{generator_forward.7} parent=0 // pred_check_branch
    %13 = sbr.rel (0) target = $region9
  $region8: #{generator_forward.7} parent=0 // pred_region
    _
  $region9: #{generator_forward.7} parent=0 // pred_fallthru
    _
  // Predicated region
  $region10: #{generator_forward.7} parent=0 // pred_check
    _
  $region11: #{generator_forward.7} parent=0 // pred_check_branch
    %15 = sbr.rel (0) target = $region13
  $region12: #{generator_forward.7} parent=0 // pred_region
    _
  $region13: #{generator_forward.7} parent=0 // pred_fallthru
    _
  // Predicated region
  $region14: #{generator_forward.7} parent=0 // pred_check
    _
  $region15: #{generator_forward.7} parent=0 // pred_check_branch
    %17 = sbr.rel (0) target = $region17
  $region16: #{generator_forward.7} parent=0 // pred_region
    _
  $region17: #{generator_forward.7} parent=0 // pred_fallthru
    _
  // Predicated region
  $region18: #{generator_forward.7} parent=0 // pred_check
    _
  $region19: #{generator_forward.7} parent=0 // pred_check_branch
    %19 = sbr.rel (0) target = $region21
  $region20: #{generator_forward.7} parent=0 // pred_region
    _
  $region21: #{generator_forward.7} parent=0 // pred_fallthru
    _
  %v21 = vld [vmem:[%s1] sm:$0xf]
  %v22 = vld [vmem:[%s1 + $0x4] sm:$0xf]
  %v23 = vld [vmem:[%s1 + $0x8] sm:$0xf]
  %v24 = vld [vmem:[%s1 + $0xc] sm:$0xf]
  %v25 = vld [vmem:[%s1 + $0x10] sm:$0xf]
  %v26 = vld [vmem:[%s1 + $0x14] sm:$0xf]
  %v27 = vld [vmem:[%s1 + $0x18] sm:$0xf]
  %v28 = vld [vmem:[%s1 + $0x1c] sm:$0xf]
  %v29 = vld [vmem:[%s0] sm:$0xff]
  %v30 = vld [vmem:[%s0 + $0x8] sm:$0xff]
  %v31 = vld [vmem:[%s0 + $0x10] sm:$0xff]
  %v32 = vld [vmem:[%s0 + $0x18] sm:$0xff]
  %v33 = vld [vmem:[%s0 + $0x20] sm:$0xff]
  %v34 = vld [vmem:[%s0 + $0x28] sm:$0xff]
  %v35 = vld [vmem:[%s0 + $0x30] sm:$0xff]
  %v36 = vld [vmem:[%s0 + $0x38] sm:$0xff]
  %v37 = vld [vmem:[%s0 + $0x40] sm:$0xff]
  %v38 = vld [vmem:[%s0 + $0x48] sm:$0xff]
  %v39 = vld [vmem:[%s0 + $0x50] sm:$0xff]
  %v40 = vld [vmem:[%s0 + $0x58] sm:$0xff]
  %v41 = vld [vmem:[%s0 + $0x60] sm:$0xff]
  %v42 = vld [vmem:[%s0 + $0x68] sm:$0xff]
  %v43 = vld [vmem:[%s0 + $0x70] sm:$0xff]
  %v44 = vld [vmem:[%s0 + $0x78] sm:$0xff]
  %v53 = vunpack.c.l.b16 %v21
  %v54 = vunpack.c.l.b16 %v22
  %v55 = vunpack.c.l.b16 %v23
  %v56 = vunpack.c.l.b16 %v24
  %v57 = vunpack.c.l.b16 %v25
  %v58 = vunpack.c.l.b16 %v26
  %v59 = vunpack.c.l.b16 %v27
  %v60 = vunpack.c.l.b16 %v28
  %v61 = vpack.c.b16 %v54, %v53
  %v62 = vpack.c.b16 %v56, %v55
  %v63 = vpack.c.b16 %v58, %v57
  %v64 = vpack.c.b16 %v60, %v59
  %v85 = vunpack.c.l.b16 %v29
  %v86 = vunpack.c.h.b16 %v29
  %v87 = vunpack.c.l.b16 %v30
  %v88 = vunpack.c.h.b16 %v30
  %v89 = vunpack.c.l.b16 %v31
  %v90 = vunpack.c.h.b16 %v31
  %v91 = vunpack.c.l.b16 %v32
  %v92 = vunpack.c.h.b16 %v32
  %v93 = vunpack.c.l.b16 %v33
  %v94 = vunpack.c.h.b16 %v33
  %v95 = vunpack.c.l.b16 %v34
  %v96 = vunpack.c.h.b16 %v34
  %v97 = vunpack.c.l.b16 %v35
  %v98 = vunpack.c.h.b16 %v35
  %v99 = vunpack.c.l.b16 %v36
  %v100 = vunpack.c.h.b16 %v36
  %v101 = vunpack.c.l.b16 %v37
  %v102 = vunpack.c.h.b16 %v37
  %v103 = vunpack.c.l.b16 %v38
  %v104 = vunpack.c.h.b16 %v38
  %v105 = vunpack.c.l.b16 %v39
  %v106 = vunpack.c.h.b16 %v39
  %v107 = vunpack.c.l.b16 %v40
  %v108 = vunpack.c.h.b16 %v40
  %v109 = vunpack.c.l.b16 %v41
  %v110 = vunpack.c.h.b16 %v41
  %v111 = vunpack.c.l.b16 %v42
  %v112 = vunpack.c.h.b16 %v42
  %v113 = vunpack.c.l.b16 %v43
  %v114 = vunpack.c.h.b16 %v43
  %v115 = vunpack.c.l.b16 %v44
  %v116 = vunpack.c.h.b16 %v44
  %v117 = vpack.c.b16 %v87, %v85
  %v118 = vpack.c.b16 %v88, %v86
  %v119 = vpack.c.b16 %v91, %v89
  %v120 = vpack.c.b16 %v92, %v90
  %v121 = vpack.c.b16 %v95, %v93
  %v122 = vpack.c.b16 %v96, %v94
  %v123 = vpack.c.b16 %v99, %v97
  %v124 = vpack.c.b16 %v100, %v98
  %v125 = vpack.c.b16 %v103, %v101
  %v126 = vpack.c.b16 %v104, %v102
  %v127 = vpack.c.b16 %v107, %v105
  %v128 = vpack.c.b16 %v108, %v106
  %v129 = vpack.c.b16 %v111, %v109
  %v130 = vpack.c.b16 %v112, %v110
  %v131 = vpack.c.b16 %v115, %v113
  %v132 = vpack.c.b16 %v116, %v114
  %149 = vmatprep.subr.bf16.mxu0 %v118
  %150 = vmatpush1.bf16.msra.mxu0 %v117
  %151 = vmatprep.subr.bf16.mxu0 %v120
  %152 = vmatpush1.bf16.msra.mxu0 %v119
  %153 = vmatprep.subr.bf16.mxu0 %v122
  %154 = vmatpush1.bf16.msra.mxu0 %v121
  %155 = vmatprep.subr.bf16.mxu0 %v124
  %156 = vmatpush1.bf16.msra.mxu0 %v123
  %157 = vmatprep.subr.bf16.mxu0 %v126
  %158 = vmatpush1.bf16.msra.mxu0 %v125
  %159 = vmatprep.subr.bf16.mxu0 %v128
  %160 = vmatpush1.bf16.msra.mxu0 %v127
  %161 = vmatprep.subr.bf16.mxu0 %v130
  %162 = vmatpush1.bf16.msra.mxu0 %v129
  %163 = vmatprep.subr.bf16.mxu0 %v132
  %164 = vmatpush1.bf16.msra.mxu0 %v131
  %165 = vmatprep.subr.bf16.mxu0 0
  %166 = vmatpush1.bf16.msra.mxu0 0
  %167 = vmatprep.subr.bf16.mxu0 0
  %168 = vmatpush1.bf16.msra.mxu0 0
  %169 = vmatprep.subr.bf16.mxu0 0
  %170 = vmatpush1.bf16.msra.mxu0 0
  %171 = vmatprep.subr.bf16.mxu0 0
  %172 = vmatpush1.bf16.msra.mxu0 0
  %173 = vmatprep.subr.bf16.mxu0 0
  %174 = vmatpush1.bf16.msra.mxu0 0
  %175 = vmatprep.subr.bf16.mxu0 0
  %176 = vmatpush1.bf16.msra.mxu0 0
  %177 = vmatprep.subr.bf16.mxu0 0
  %178 = vmatpush1.bf16.msra.mxu0 0
  %179 = vmatprep.subr.bf16.mxu0 0
  %180 = vmatpush1.bf16.msra.mxu0 0
  %181 = vmatprep.mubr.bf16.mxu0 0
  %182 = vmatmul.mubr.bf16.gmra.mrb[0].mxu0 %v61
  %v183 = vpop.f32.mrb[0].mxu0
  %v184 = vadd.f32 0.0, %v183
  %v185 = vpop.f32.mrb[0].mxu0
  %v186 = vadd.f32 0.0, %v185
  %v187 = vpop.f32.mrb[0].mxu0
  %v188 = vadd.f32 0.0, %v187
  %v189 = vpop.f32.mrb[0].mxu0
  %v190 = vadd.f32 0.0, %v189
  %191 = vmatprep.mubr.bf16.mxu0 0
  %192 = vmatmul.mubr.bf16.gmra.mrb[0].mxu0 %v62
  %v193 = vpop.f32.mrb[0].mxu0
  %v194 = vadd.f32 0.0, %v193
  %v195 = vpop.f32.mrb[0].mxu0
  %v196 = vadd.f32 0.0, %v195
  %v197 = vpop.f32.mrb[0].mxu0
  %v198 = vadd.f32 0.0, %v197
  %v199 = vpop.f32.mrb[0].mxu0
  %v200 = vadd.f32 0.0, %v199
  %201 = vmatprep.mubr.bf16.mxu0 0
  %202 = vmatmul.mubr.bf16.gmra.mrb[0].mxu0 %v63
  %v203 = vpop.f32.mrb[0].mxu0
  %v204 = vadd.f32 0.0, %v203
  %v205 = vpop.f32.mrb[0].mxu0
  %v206 = vadd.f32 0.0, %v205
  %v207 = vpop.f32.mrb[0].mxu0
  %v208 = vadd.f32 0.0, %v207
  %v209 = vpop.f32.mrb[0].mxu0
  %v210 = vadd.f32 0.0, %v209
  %211 = vmatprep.mubr.bf16.mxu0 0
  %212 = vmatmul.mubr.bf16.gmra.mrb[0].mxu0 %v64
  %v213 = vpop.f32.mrb[0].mxu0
  %v214 = vadd.f32 0.0, %v213
  %v215 = vpop.f32.mrb[0].mxu0
  %v216 = vadd.f32 0.0, %v215
  %v217 = vpop.f32.mrb[0].mxu0
  %v218 = vadd.f32 0.0, %v217
  %v219 = vpop.f32.mrb[0].mxu0
  %v220 = vadd.f32 0.0, %v219
  %221 = vdwg.mxu0
  %v222 = vld [vmem:[%s2] sm:$0xff]
  %v224 = vlaneseq
  %v225 = vshrl.u32 %v224, 7
  %v226 = vsub.s32 0, %v225
  %v227 = vrot.slane %v222, %v226
  %v228 = vlaneseq
  %v229 = vshrl.u32 %v228, 7
  %v230 = vsub.s32 4, %v229
  %v231 = vrot.slane %v222, %v230
  %v234 = vlaneseq
  %v235 = vshrl.u32 %v234, 7
  %v236 = vsub.s32 0, %v235
  %v237 = vrot.slane %v227, %v236
  %v238 = vlaneseq
  %v239 = vshrl.u32 %v238, 7
  %v240 = vsub.s32 0, %v239
  %v241 = vrot.slane %v231, %v240
  %v242 = vmul.f32 %v184, %v237
  %v243 = vmul.f32 %v186, %v241
  %v244 = vmul.f32 %v188, %v237
  %v245 = vmul.f32 %v190, %v241
  %v246 = vadd.f32 %v242, %v243
  %247 = vadd.xlane.f32.xlu0 %v246
  %v248 = vpop.xlane.xlu0 %247
  %v249 = vadd.f32 %v244, %v245
  %250 = vadd.xlane.f32.xlu0 %v249
  %v251 = vpop.xlane.xlu0 %250
  %v252 = vadd.f32 %v248, 0.0
  %v253 = vadd.f32 %v251, 0.0
  %v254 = vmul.f32 %v242, %v184
  %v255 = vmul.f32 %v243, %v186
  %v256 = vmul.f32 %v244, %v188
  %v257 = vmul.f32 %v245, %v190
  %v258 = vadd.f32 %v254, %v255
  %259 = vadd.xlane.f32.xlu0 %v258
  %v260 = vpop.xlane.xlu0 %259
  %v261 = vadd.f32 %v256, %v257
  %262 = vadd.xlane.f32.xlu0 %v261
  %v263 = vpop.xlane.xlu0 %262
  %v264 = vadd.f32 %v260, 0.0
  %v265 = vadd.f32 %v263, 0.0
  %v266 = vlaneseq
  %v267 = vshrl.u32 %v266, 7
  %v268 = vsub.s32 1, %v267
  %v269 = vrot.slane %v222, %v268
  %v270 = vlaneseq
  %v271 = vshrl.u32 %v270, 7
  %v272 = vsub.s32 5, %v271
  %v273 = vrot.slane %v222, %v272
  %v276 = vlaneseq
  %v277 = vshrl.u32 %v276, 7
  %v278 = vsub.s32 1, %v277
  %v279 = vrot.slane %v269, %v278
  %v280 = vlaneseq
  %v281 = vshrl.u32 %v280, 7
  %v282 = vsub.s32 1, %v281
  %v283 = vrot.slane %v273, %v282
  %v284 = vmul.f32 %v194, %v279
  %v285 = vmul.f32 %v196, %v283
  %v286 = vmul.f32 %v198, %v279
  %v287 = vmul.f32 %v200, %v283
  %v288 = vadd.f32 %v284, %v285
  %289 = vadd.xlane.f32.xlu0 %v288
  %v290 = vpop.xlane.xlu0 %289
  %v291 = vadd.f32 %v286, %v287
  %292 = vadd.xlane.f32.xlu0 %v291
  %v293 = vpop.xlane.xlu0 %292
  %v294 = vadd.f32 %v252, %v290
  %v295 = vadd.f32 %v253, %v293
  %v296 = vmul.f32 %v284, %v194
  %v297 = vmul.f32 %v285, %v196
  %v298 = vmul.f32 %v286, %v198
  %v299 = vmul.f32 %v287, %v200
  %v300 = vadd.f32 %v296, %v297
  %301 = vadd.xlane.f32.xlu0 %v300
  %v302 = vpop.xlane.xlu0 %301
  %v303 = vadd.f32 %v298, %v299
  %304 = vadd.xlane.f32.xlu0 %v303
  %v305 = vpop.xlane.xlu0 %304
  %v306 = vadd.f32 %v264, %v302
  %v307 = vadd.f32 %v265, %v305
  %v308 = vlaneseq
  %v309 = vshrl.u32 %v308, 7
  %v310 = vsub.s32 2, %v309
  %v311 = vrot.slane %v222, %v310
  %v312 = vlaneseq
  %v313 = vshrl.u32 %v312, 7
  %v314 = vsub.s32 6, %v313
  %v315 = vrot.slane %v222, %v314
  %v318 = vlaneseq
  %v319 = vshrl.u32 %v318, 7
  %v320 = vsub.s32 2, %v319
  %v321 = vrot.slane %v311, %v320
  %v322 = vlaneseq
  %v323 = vshrl.u32 %v322, 7
  %v324 = vsub.s32 2, %v323
  %v325 = vrot.slane %v315, %v324
  %v326 = vmul.f32 %v204, %v321
  %v327 = vmul.f32 %v206, %v325
  %v328 = vmul.f32 %v208, %v321
  %v329 = vmul.f32 %v210, %v325
  %v330 = vadd.f32 %v326, %v327
  %331 = vadd.xlane.f32.xlu0 %v330
  %v332 = vpop.xlane.xlu0 %331
  %v333 = vadd.f32 %v328, %v329
  %334 = vadd.xlane.f32.xlu0 %v333
  %v335 = vpop.xlane.xlu0 %334
  %v336 = vadd.f32 %v294, %v332
  %v337 = vadd.f32 %v295, %v335
  %v338 = vmul.f32 %v326, %v204
  %v339 = vmul.f32 %v327, %v206
  %v340 = vmul.f32 %v328, %v208
  %v341 = vmul.f32 %v329, %v210
  %v342 = vadd.f32 %v338, %v339
  %343 = vadd.xlane.f32.xlu0 %v342
  %v344 = vpop.xlane.xlu0 %343
  %v345 = vadd.f32 %v340, %v341
  %346 = vadd.xlane.f32.xlu0 %v345
  %v347 = vpop.xlane.xlu0 %346
  %v348 = vadd.f32 %v306, %v344
  %v349 = vadd.f32 %v307, %v347
  %v350 = vlaneseq
  %v351 = vshrl.u32 %v350, 7
  %v352 = vsub.s32 3, %v351
  %v353 = vrot.slane %v222, %v352
  %v354 = vlaneseq
  %v355 = vshrl.u32 %v354, 7
  %v356 = vsub.s32 7, %v355
  %v357 = vrot.slane %v222, %v356
  %v360 = vlaneseq
  %v361 = vshrl.u32 %v360, 7
  %v362 = vsub.s32 3, %v361
  %v363 = vrot.slane %v353, %v362
  %v364 = vlaneseq
  %v365 = vshrl.u32 %v364, 7
  %v366 = vsub.s32 3, %v365
  %v367 = vrot.slane %v357, %v366
  %v368 = vmul.f32 %v214, %v363
  %v369 = vmul.f32 %v216, %v367
  %v370 = vmul.f32 %v218, %v363
  %v371 = vmul.f32 %v220, %v367
  %v372 = vadd.f32 %v368, %v369
  %373 = vadd.xlane.f32.xlu0 %v372
  %v374 = vpop.xlane.xlu0 %373
  %v375 = vadd.f32 %v370, %v371
  %376 = vadd.xlane.f32.xlu0 %v375
  %v377 = vpop.xlane.xlu0 %376
  %v378 = vadd.f32 %v336, %v374
  %v379 = vadd.f32 %v337, %v377
  %v380 = vmul.f32 %v368, %v214
  %v381 = vmul.f32 %v369, %v216
  %v382 = vmul.f32 %v370, %v218
  %v383 = vmul.f32 %v371, %v220
  %v384 = vadd.f32 %v380, %v381
  %385 = vadd.xlane.f32.xlu0 %v384
  %v386 = vpop.xlane.xlu0 %385
  %v387 = vadd.f32 %v382, %v383
  %388 = vadd.xlane.f32.xlu0 %v387
  %v389 = vpop.xlane.xlu0 %388
  %v390 = vadd.f32 %v348, %v386
  %v391 = vadd.f32 %v349, %v389
  %v392 = vmul.f32 %v378, 0.001953125
  %v393 = vmul.f32 %v379, 0.001953125
  %v394 = vmul.f32 %v390, 0.001953125
  %v395 = vmul.f32 %v391, 0.001953125
  %v396 = vmul.f32 %v392, %v392
  %v397 = vmul.f32 %v393, %v393
  %v398 = vsub.f32 %v394, %v396
  %v399 = vsub.f32 %v395, %v397
  %v400 = vmax.f32 %v398, 0.0
  %v401 = vmax.f32 %v399, 0.0
  %v402 = vadd.f32 %v400, 1e-05
  %v403 = vadd.f32 %v401, 1e-05
  %v404 = vrsqrt.pop %v402
  %v405 = vrsqrt.pop %v403
  %v406 = vld [vmem:[%s3] sm:$0xff]
  %v407 = vld [vmem:[%s3 + $0x8] sm:$0xff]
  %v408 = vmul.f32 %v404, %v406
  %v409 = vmul.f32 %v405, %v407
  %v410 = vld [vmem:[%s4] sm:$0xff]
  %v411 = vld [vmem:[%s4 + $0x8] sm:$0xff]
  %v412 = vmul.f32 %v392, %v408
  %v413 = vmul.f32 %v393, %v409
  %v414 = vsub.f32 %v410, %v412
  %v415 = vsub.f32 %v411, %v413
  %417 = vset.pattern.permute.xlu0 0
  %418 = vperm.xlu0 %417, %v408
  %v419 = vpop.permute.xlu0 %418
  %422 = vset.pattern.permute.xlu0 0
  %423 = vperm.xlu0 %422, %v409
  %v424 = vpop.permute.xlu0 %423
  %v426 = vmul.f32 %v184, %v419
  %v427 = vmul.f32 %v186, %v419
  %v428 = vmul.f32 %v188, %v424
  %v429 = vmul.f32 %v190, %v424
  %431 = vset.pattern.permute.xlu0 0
  %432 = vperm.xlu0 %431, %v414
  %v433 = vpop.permute.xlu0 %432
  %436 = vset.pattern.permute.xlu0 0
  %437 = vperm.xlu0 %436, %v415
  %v438 = vpop.permute.xlu0 %437
  %v440 = vadd.f32 %v426, %v433
  %v441 = vadd.f32 %v427, %v433
  %v442 = vadd.f32 %v428, %v438
  %v443 = vadd.f32 %v429, %v438
  %v444 = vmax.f32 %v440, 0.0
  %v445 = vmax.f32 %v441, 0.0
  %v446 = vmax.f32 %v442, 0.0
  %v447 = vmax.f32 %v443, 0.0
  %v448 = vpack.c.bf16 %v446, %v444
  %v449 = vpack.c.bf16 %v447, %v445
  %v452 = vunpack.c.l.b16 %v448
  %v453 = vunpack.c.l.b16 %v449
  %v454 = vunpack.c.h.b16 %v448
  %v455 = vunpack.c.h.b16 %v449
  %v456 = vpack.c.b16 %v453, %v452
  %v457 = vpack.c.b16 %v455, %v454
  %460 = vst [vmem:[%s5] sm:$0xff] %v456
  %461 = vst [vmem:[%s5 + $0x8] sm:$0xff] %v457
  %v462 = vmul.f32 %v194, %v419
  %v463 = vmul.f32 %v196, %v419
  %v464 = vmul.f32 %v198, %v424
  %v465 = vmul.f32 %v200, %v424
  %v466 = vadd.f32 %v462, %v433
  %v467 = vadd.f32 %v463, %v433
  %v468 = vadd.f32 %v464, %v438
  %v469 = vadd.f32 %v465, %v438
  %v470 = vmax.f32 %v466, 0.0
  %v471 = vmax.f32 %v467, 0.0
  %v472 = vmax.f32 %v468, 0.0
  %v473 = vmax.f32 %v469, 0.0
  %v474 = vpack.c.bf16 %v472, %v470
  %v475 = vpack.c.bf16 %v473, %v471
  %v478 = vunpack.c.l.b16 %v474
  %v479 = vunpack.c.l.b16 %v475
  %v480 = vunpack.c.h.b16 %v474
  %v481 = vunpack.c.h.b16 %v475
  %v482 = vpack.c.b16 %v479, %v478
  %v483 = vpack.c.b16 %v481, %v480
  %486 = vst [vmem:[%s5 + $0x10] sm:$0xff] %v482
  %487 = vst [vmem:[%s5 + $0x18] sm:$0xff] %v483
  %v488 = vmul.f32 %v204, %v419
  %v489 = vmul.f32 %v206, %v419
  %v490 = vmul.f32 %v208, %v424
  %v491 = vmul.f32 %v210, %v424
  %v492 = vadd.f32 %v488, %v433
  %v493 = vadd.f32 %v489, %v433
  %v494 = vadd.f32 %v490, %v438
  %v495 = vadd.f32 %v491, %v438
  %v496 = vmax.f32 %v492, 0.0
  %v497 = vmax.f32 %v493, 0.0
  %v498 = vmax.f32 %v494, 0.0
  %v499 = vmax.f32 %v495, 0.0
  %v500 = vpack.c.bf16 %v498, %v496
  %v501 = vpack.c.bf16 %v499, %v497
  %v504 = vunpack.c.l.b16 %v500
  %v505 = vunpack.c.l.b16 %v501
  %v506 = vunpack.c.h.b16 %v500
  %v507 = vunpack.c.h.b16 %v501
  %v508 = vpack.c.b16 %v505, %v504
  %v509 = vpack.c.b16 %v507, %v506
  %512 = vst [vmem:[%s5 + $0x20] sm:$0xff] %v508
  %513 = vst [vmem:[%s5 + $0x28] sm:$0xff] %v509
  %v514 = vmul.f32 %v214, %v419
  %v515 = vmul.f32 %v216, %v419
  %v516 = vmul.f32 %v218, %v424
  %v517 = vmul.f32 %v220, %v424
  %v518 = vadd.f32 %v514, %v433
  %v519 = vadd.f32 %v515, %v433
  %v520 = vadd.f32 %v516, %v438
  %v521 = vadd.f32 %v517, %v438
  %v522 = vmax.f32 %v518, 0.0
  %v523 = vmax.f32 %v519, 0.0
  %v524 = vmax.f32 %v520, 0.0
  %v525 = vmax.f32 %v521, 0.0
  %v526 = vpack.c.bf16 %v524, %v522
  %v527 = vpack.c.bf16 %v525, %v523
  %v530 = vunpack.c.l.b16 %v526
  %v531 = vunpack.c.l.b16 %v527
  %v532 = vunpack.c.h.b16 %v526
  %v533 = vunpack.c.h.b16 %v527
  %v534 = vpack.c.b16 %v531, %v530
  %v535 = vpack.c.b16 %v533, %v532
  %538 = vst [vmem:[%s5 + $0x30] sm:$0xff] %v534
  %539 = vst [vmem:[%s5 + $0x38] sm:$0xff] %v535
  // Predicated region
  $region22: #{generator_forward.7} parent=0 // pred_check
    _
  $region23: #{generator_forward.7} parent=0 // pred_check_branch
    %541 = sbr.rel (0) target = $region25
  $region24: #{generator_forward.7} parent=0 // pred_region
    _
  $region25: #{generator_forward.7} parent=0 // pred_fallthru
    _
  // Predicated region
  $region26: #{generator_forward.7} parent=0 // pred_check
    _
  $region27: #{generator_forward.7} parent=0 // pred_check_branch
    %543 = sbr.rel (0) target = $region29
  $region28: #{generator_forward.7} parent=0 // pred_region
    _
  $region29: #{generator_forward.7} parent=0 // pred_fallthru
    _

// kernel: generator_forward.8
$region0: #{generator_forward.8}
  #allocation0 [shape = 'u32[]', space=smem, size = 0x4, offset = 0x4, fixed_abs, tag = 'smem constant byte address 0x4 - core index']
  #allocation1 [shape = 'u32[144,128]{1,0:T(1,128)}', space=vmem, size = 0x12000, scoped, tag = 'internal scratch']
  %s0 = inlined_call_operand.vmem [shape: bf16[64,768], index: 0, kind: input, shape index: {}]
  %s1 = inlined_call_operand.vmem [shape: bf16[32,64], index: 1, kind: input, shape index: {}]
  %s2 = inlined_call_operand.vmem [shape: f32[4,768], index: 2, kind: input, shape index: {}]
  %s3 = inlined_call_operand.vmem [shape: f32[8,1], index: 3, kind: input, shape index: {}]
  %s4 = inlined_call_operand.vmem [shape: f32[8,1], index: 4, kind: input, shape index: {}]
  %s5 = inlined_call_operand.vmem [shape: bf16[32,768], index: 5, kind: output, shape index: {}]
  %s6 = sld [smem:[#allocation0]]
  $region30: #{generator_forward.8} parent=0
    _
  %s8 = ssub.s32 1, %s6
  %s9 = scalar_select 0, %s8, %s6
  // Predicated region
  $region2: #{generator_forward.8} parent=0 // pred_check
    _
  $region3: #{generator_forward.8} parent=0 // pred_check_branch
    %11 = sbr.rel (0) target = $region5
  $region4: #{generator_forward.8} parent=0 // pred_region
    _
  $region5: #{generator_forward.8} parent=0 // pred_fallthru
    _
  // Predicated region
  $region6: #{generator_forward.8} parent=0 // pred_check
    _
  $region7: #{generator_forward.8} parent=0 // pred_check_branch
    %13 = sbr.rel (0) target = $region9
  $region8: #{generator_forward.8} parent=0 // pred_region
    _
  $region9: #{generator_forward.8} parent=0 // pred_fallthru
    _
  // Predicated region
  $region10: #{generator_forward.8} parent=0 // pred_check
    _
  $region11: #{generator_forward.8} parent=0 // pred_check_branch
    %15 = sbr.rel (0) target = $region13
  $region12: #{generator_forward.8} parent=0 // pred_region
    _
  $region13: #{generator_forward.8} parent=0 // pred_fallthru
    _
  // Predicated region
  $region14: #{generator_forward.8} parent=0 // pred_check
    _
  $region15: #{generator_forward.8} parent=0 // pred_check_branch
    %17 = sbr.rel (0) target = $region17
  $region16: #{generator_forward.8} parent=0 // pred_region
    _
  $region17: #{generator_forward.8} parent=0 // pred_fallthru
    _
  // Predicated region
  $region18: #{generator_forward.8} parent=0 // pred_check
    _
  $region19: #{generator_forward.8} parent=0 // pred_check_branch
    %19 = sbr.rel (0) target = $region21
  $region20: #{generator_forward.8} parent=0 // pred_region
    _
  $region21: #{generator_forward.8} parent=0 // pred_fallthru
    _
  %v21 = vld [vmem:[%s1] sm:$0xf]
  %v22 = vld [vmem:[%s1 + $0x4] sm:$0xf]
  %v23 = vld [vmem:[%s1 + $0x8] sm:$0xf]
  %v24 = vld [vmem:[%s1 + $0xc] sm:$0xf]
  %v25 = vld [vmem:[%s0] sm:$0xff]
  %v26 = vld [vmem:[%s0 + $0x8] sm:$0xff]
  %v27 = vld [vmem:[%s0 + $0x10] sm:$0xff]
  %v28 = vld [vmem:[%s0 + $0x18] sm:$0xff]
  %v29 = vld [vmem:[%s0 + $0x20] sm:$0xff]
  %v30 = vld [vmem:[%s0 + $0x28] sm:$0xff]
  %v31 = vld [vmem:[%s0 + $0x30] sm:$0xff]
  %v32 = vld [vmem:[%s0 + $0x38] sm:$0xff]
  %v33 = vld [vmem:[%s0 + $0x40] sm:$0xff]
  %v34 = vld [vmem:[%s0 + $0x48] sm:$0xff]
  %v35 = vld [vmem:[%s0 + $0x50] sm:$0xff]
  %v36 = vld [vmem:[%s0 + $0x58] sm:$0xff]
  %v37 = vld [vmem:[%s0 + $0x60] sm:$0xff]
  %v38 = vld [vmem:[%s0 + $0x68] sm:$0xff]
  %v39 = vld [vmem:[%s0 + $0x70] sm:$0xff]
  %v40 = vld [vmem:[%s0 + $0x78] sm:$0xff]
  %v41 = vld [vmem:[%s0 + $0x80] sm:$0xff]
  %v42 = vld [vmem:[%s0 + $0x88] sm:$0xff]
  %v43 = vld [vmem:[%s0 + $0x90] sm:$0xff]
  %v44 = vld [vmem:[%s0 + $0x98] sm:$0xff]
  %v45 = vld [vmem:[%s0 + $0xa0] sm:$0xff]
  %v46 = vld [vmem:[%s0 + $0xa8] sm:$0xff]
  %v47 = vld [vmem:[%s0 + $0xb0] sm:$0xff]
  %v48 = vld [vmem:[%s0 + $0xb8] sm:$0xff]
  %v53 = vunpack.c.l.b16 %v21
  %v54 = vunpack.c.l.b16 %v22
  %v55 = vunpack.c.l.b16 %v23
  %v56 = vunpack.c.l.b16 %v24
  %v57 = vpack.c.b16 %v54, %v53
  %v58 = vpack.c.b16 %v56, %v55
  %v83 = vunpack.c.l.b16 %v25
  %v84 = vunpack.c.h.b16 %v25
  %v85 = vunpack.c.l.b16 %v26
  %v86 = vunpack.c.h.b16 %v26
  %v87 = vunpack.c.l.b16 %v27
  %v88 = vunpack.c.h.b16 %v27
  %v89 = vunpack.c.l.b16 %v28
  %v90 = vunpack.c.h.b16 %v28
  %v91 = vunpack.c.l.b16 %v29
  %v92 = vunpack.c.h.b16 %v29
  %v93 = vunpack.c.l.b16 %v30
  %v94 = vunpack.c.h.b16 %v30
  %v95 = vunpack.c.l.b16 %v31
  %v96 = vunpack.c.h.b16 %v31
  %v97 = vunpack.c.l.b16 %v32
  %v98 = vunpack.c.h.b16 %v32
  %v99 = vunpack.c.l.b16 %v33
  %v100 = vunpack.c.h.b16 %v33
  %v101 = vunpack.c.l.b16 %v34
  %v102 = vunpack.c.h.b16 %v34
  %v103 = vunpack.c.l.b16 %v35
  %v104 = vunpack.c.h.b16 %v35
  %v105 = vunpack.c.l.b16 %v36
  %v106 = vunpack.c.h.b16 %v36
  %v107 = vunpack.c.l.b16 %v37
  %v108 = vunpack.c.h.b16 %v37
  %v109 = vunpack.c.l.b16 %v38
  %v110 = vunpack.c.h.b16 %v38
  %v111 = vunpack.c.l.b16 %v39
  %v112 = vunpack.c.h.b16 %v39
  %v113 = vunpack.c.l.b16 %v40
  %v114 = vunpack.c.h.b16 %v40
  %v115 = vunpack.c.l.b16 %v41
  %v116 = vunpack.c.h.b16 %v41
  %v117 = vunpack.c.l.b16 %v42
  %v118 = vunpack.c.h.b16 %v42
  %v119 = vunpack.c.l.b16 %v43
  %v120 = vunpack.c.h.b16 %v43
  %v121 = vunpack.c.l.b16 %v44
  %v122 = vunpack.c.h.b16 %v44
  %v123 = vunpack.c.l.b16 %v45
  %v124 = vunpack.c.h.b16 %v45
  %v125 = vunpack.c.l.b16 %v46
  %v126 = vunpack.c.h.b16 %v46
  %v127 = vunpack.c.l.b16 %v47
  %v128 = vunpack.c.h.b16 %v47
  %v129 = vunpack.c.l.b16 %v48
  %v130 = vunpack.c.h.b16 %v48
  %v131 = vpack.c.b16 %v89, %v83
  %v132 = vpack.c.b16 %v90, %v84
  %v133 = vpack.c.b16 %v91, %v85
  %v134 = vpack.c.b16 %v92, %v86
  %v135 = vpack.c.b16 %v93, %v87
  %v136 = vpack.c.b16 %v94, %v88
  %v137 = vpack.c.b16 %v101, %v95
  %v138 = vpack.c.b16 %v102, %v96
  %v139 = vpack.c.b16 %v103, %v97
  %v140 = vpack.c.b16 %v104, %v98
  %v141 = vpack.c.b16 %v105, %v99
  %v142 = vpack.c.b16 %v106, %v100
  %v143 = vpack.c.b16 %v113, %v107
  %v144 = vpack.c.b16 %v114, %v108
  %v145 = vpack.c.b16 %v115, %v109
  %v146 = vpack.c.b16 %v116, %v110
  %v147 = vpack.c.b16 %v117, %v111
  %v148 = vpack.c.b16 %v118, %v112
  %v149 = vpack.c.b16 %v125, %v119
  %v150 = vpack.c.b16 %v126, %v120
  %v151 = vpack.c.b16 %v127, %v121
  %v152 = vpack.c.b16 %v128, %v122
  %v153 = vpack.c.b16 %v129, %v123
  %v154 = vpack.c.b16 %v130, %v124
  %vm179 = vcmask 523264
  %v181 = vsel %vm179, %v57, 0
  %v184 = vsel %vm179, %v58, 0
  %186 = vmatprep.subr.bf16.mxu0 %v132
  %187 = vmatpush1.bf16.msra.mxu0 %v131
  %188 = vmatprep.subr.bf16.mxu0 %v138
  %189 = vmatpush1.bf16.msra.mxu0 %v137
  %190 = vmatprep.subr.bf16.mxu0 %v144
  %191 = vmatpush1.bf16.msra.mxu0 %v143
  %192 = vmatprep.subr.bf16.mxu0 %v150
  %193 = vmatpush1.bf16.msra.mxu0 %v149
  %194 = vmatprep.subr.bf16.mxu0 0
  %195 = vmatpush1.bf16.msra.mxu0 0
  %196 = vmatprep.subr.bf16.mxu0 0
  %197 = vmatpush1.bf16.msra.mxu0 0
  %198 = vmatprep.subr.bf16.mxu0 0
  %199 = vmatpush1.bf16.msra.mxu0 0
  %200 = vmatprep.subr.bf16.mxu0 0
  %201 = vmatpush1.bf16.msra.mxu0 0
  %202 = vmatprep.subr.bf16.mxu0 0
  %203 = vmatpush1.bf16.msra.mxu0 0
  %204 = vmatprep.subr.bf16.mxu0 0
  %205 = vmatpush1.bf16.msra.mxu0 0
  %206 = vmatprep.subr.bf16.mxu0 0
  %207 = vmatpush1.bf16.msra.mxu0 0
  %208 = vmatprep.subr.bf16.mxu0 0
  %209 = vmatpush1.bf16.msra.mxu0 0
  %210 = vmatprep.subr.bf16.mxu0 0
  %211 = vmatpush1.bf16.msra.mxu0 0
  %212 = vmatprep.subr.bf16.mxu0 0
  %213 = vmatpush1.bf16.msra.mxu0 0
  %214 = vmatprep.subr.bf16.mxu0 0
  %215 = vmatpush1.bf16.msra.mxu0 0
  %216 = vmatprep.subr.bf16.mxu0 0
  %217 = vmatpush1.bf16.msra.mxu0 0
  %218 = vmatprep.mubr.bf16.mxu0 0
  %219 = vmatmul.mubr.bf16.gmra.mrb[0].mxu0 %v181
  %v220 = vpop.f32.mrb[0].mxu0
  %v221 = vadd.f32 0.0, %v220
  %v222 = vpop.f32.mrb[0].mxu0
  %v223 = vadd.f32 0.0, %v222
  %v224 = vpop.f32.mrb[0].mxu0
  %v225 = vadd.f32 0.0, %v224
  %v226 = vpop.f32.mrb[0].mxu0
  %v227 = vadd.f32 0.0, %v226
  %228 = vmatprep.mubr.bf16.mxu0 0
  %229 = vmatmul.mubr.bf16.gmra.mrb[0].mxu0 %v184
  %v230 = vpop.f32.mrb[0].mxu0
  %v231 = vadd.f32 0.0, %v230
  %v232 = vpop.f32.mrb[0].mxu0
  %v233 = vadd.f32 0.0, %v232
  %v234 = vpop.f32.mrb[0].mxu0
  %v235 = vadd.f32 0.0, %v234
  %v236 = vpop.f32.mrb[0].mxu0
  %v237 = vadd.f32 0.0, %v236
  %238 = vdwg.mxu0
  %239 = vmatprep.subr.bf16.mxu0 %v134
  %240 = vmatpush1.bf16.msra.mxu0 %v133
  %241 = vmatprep.subr.bf16.mxu0 %v140
  %242 = vmatpush1.bf16.msra.mxu0 %v139
  %243 = vmatprep.subr.bf16.mxu0 %v146
  %244 = vmatpush1.bf16.msra.mxu0 %v145
  %245 = vmatprep.subr.bf16.mxu0 %v152
  %246 = vmatpush1.bf16.msra.mxu0 %v151
  %247 = vmatprep.subr.bf16.mxu0 0
  %248 = vmatpush1.bf16.msra.mxu0 0
  %249 = vmatprep.subr.bf16.mxu0 0
  %250 = vmatpush1.bf16.msra.mxu0 0
  %251 = vmatprep.subr.bf16.mxu0 0
  %252 = vmatpush1.bf16.msra.mxu0 0
  %253 = vmatprep.subr.bf16.mxu0 0
  %254 = vmatpush1.bf16.msra.mxu0 0
  %255 = vmatprep.subr.bf16.mxu0 0
  %256 = vmatpush1.bf16.msra.mxu0 0
  %257 = vmatprep.subr.bf16.mxu0 0
  %258 = vmatpush1.bf16.msra.mxu0 0
  %259 = vmatprep.subr.bf16.mxu0 0
  %260 = vmatpush1.bf16.msra.mxu0 0
  %261 = vmatprep.subr.bf16.mxu0 0
  %262 = vmatpush1.bf16.msra.mxu0 0
  %263 = vmatprep.subr.bf16.mxu0 0
  %264 = vmatpush1.bf16.msra.mxu0 0
  %265 = vmatprep.subr.bf16.mxu0 0
  %266 = vmatpush1.bf16.msra.mxu0 0
  %267 = vmatprep.subr.bf16.mxu0 0
  %268 = vmatpush1.bf16.msra.mxu0 0
  %269 = vmatprep.subr.bf16.mxu0 0
  %270 = vmatpush1.bf16.msra.mxu0 0
  %271 = vmatprep.mubr.bf16.mxu0 0
  %272 = vmatmul.mubr.bf16.gmra.mrb[0].mxu0 %v181
  %v273 = vpop.f32.mrb[0].mxu0
  %v274 = vadd.f32 0.0, %v273
  %v275 = vpop.f32.mrb[0].mxu0
  %v276 = vadd.f32 0.0, %v275
  %v277 = vpop.f32.mrb[0].mxu0
  %v278 = vadd.f32 0.0, %v277
  %v279 = vpop.f32.mrb[0].mxu0
  %v280 = vadd.f32 0.0, %v279
  %281 = vmatprep.mubr.bf16.mxu0 0
  %282 = vmatmul.mubr.bf16.gmra.mrb[0].mxu0 %v184
  %v283 = vpop.f32.mrb[0].mxu0
  %v284 = vadd.f32 0.0, %v283
  %v285 = vpop.f32.mrb[0].mxu0
  %v286 = vadd.f32 0.0, %v285
  %v287 = vpop.f32.mrb[0].mxu0
  %v288 = vadd.f32 0.0, %v287
  %v289 = vpop.f32.mrb[0].mxu0
  %v290 = vadd.f32 0.0, %v289
  %291 = vdwg.mxu0
  %292 = vmatprep.subr.bf16.mxu0 %v136
  %293 = vmatpush1.bf16.msra.mxu0 %v135
  %294 = vmatprep.subr.bf16.mxu0 %v142
  %295 = vmatpush1.bf16.msra.mxu0 %v141
  %296 = vmatprep.subr.bf16.mxu0 %v148
  %297 = vmatpush1.bf16.msra.mxu0 %v147
  %298 = vmatprep.subr.bf16.mxu0 %v154
  %299 = vmatpush1.bf16.msra.mxu0 %v153
  %300 = vmatprep.subr.bf16.mxu0 0
  %301 = vmatpush1.bf16.msra.mxu0 0
  %302 = vmatprep.subr.bf16.mxu0 0
  %303 = vmatpush1.bf16.msra.mxu0 0
  %304 = vmatprep.subr.bf16.mxu0 0
  %305 = vmatpush1.bf16.msra.mxu0 0
  %306 = vmatprep.subr.bf16.mxu0 0
  %307 = vmatpush1.bf16.msra.mxu0 0
  %308 = vmatprep.subr.bf16.mxu0 0
  %309 = vmatpush1.bf16.msra.mxu0 0
  %310 = vmatprep.subr.bf16.mxu0 0
  %311 = vmatpush1.bf16.msra.mxu0 0
  %312 = vmatprep.subr.bf16.mxu0 0
  %313 = vmatpush1.bf16.msra.mxu0 0
  %314 = vmatprep.subr.bf16.mxu0 0
  %315 = vmatpush1.bf16.msra.mxu0 0
  %316 = vmatprep.subr.bf16.mxu0 0
  %317 = vmatpush1.bf16.msra.mxu0 0
  %318 = vmatprep.subr.bf16.mxu0 0
  %319 = vmatpush1.bf16.msra.mxu0 0
  %320 = vmatprep.subr.bf16.mxu0 0
  %321 = vmatpush1.bf16.msra.mxu0 0
  %322 = vmatprep.subr.bf16.mxu0 0
  %323 = vmatpush1.bf16.msra.mxu0 0
  %324 = vmatprep.mubr.bf16.mxu0 0
  %325 = vmatmul.mubr.bf16.gmra.mrb[0].mxu0 %v181
  %v326 = vpop.f32.mrb[0].mxu0
  %v327 = vadd.f32 0.0, %v326
  %v328 = vpop.f32.mrb[0].mxu0
  %v329 = vadd.f32 0.0, %v328
  %v330 = vpop.f32.mrb[0].mxu0
  %v331 = vadd.f32 0.0, %v330
  %v332 = vpop.f32.mrb[0].mxu0
  %v333 = vadd.f32 0.0, %v332
  %334 = vmatprep.mubr.bf16.mxu0 0
  %335 = vmatmul.mubr.bf16.gmra.mrb[0].mxu0 %v184
  %v336 = vpop.f32.mrb[0].mxu0
  %v337 = vadd.f32 0.0, %v336
  %v338 = vpop.f32.mrb[0].mxu0
  %v339 = vadd.f32 0.0, %v338
  %v340 = vpop.f32.mrb[0].mxu0
  %v341 = vadd.f32 0.0, %v340
  %v342 = vpop.f32.mrb[0].mxu0
  %v343 = vadd.f32 0.0, %v342
  %344 = vdwg.mxu0
  %v345 = vld [vmem:[%s2] sm:$0xff]
  %v346 = vld [vmem:[%s2 + $0x8] sm:$0xff]
  %v347 = vld [vmem:[%s2 + $0x10] sm:$0xff]
  %v351 = vlaneseq
  %v352 = vshrl.u32 %v351, 7
  %v353 = vsub.s32 0, %v352
  %v354 = vrot.slane %v345, %v353
  %v355 = vlaneseq
  %v356 = vshrl.u32 %v355, 7
  %v357 = vsub.s32 4, %v356
  %v358 = vrot.slane %v345, %v357
  %v359 = vlaneseq
  %v360 = vshrl.u32 %v359, 7
  %v361 = vsub.s32 0, %v360
  %v362 = vrot.slane %v346, %v361
  %v363 = vlaneseq
  %v364 = vshrl.u32 %v363, 7
  %v365 = vsub.s32 4, %v364
  %v366 = vrot.slane %v346, %v365
  %v367 = vlaneseq
  %v368 = vshrl.u32 %v367, 7
  %v369 = vsub.s32 0, %v368
  %v370 = vrot.slane %v347, %v369
  %v371 = vlaneseq
  %v372 = vshrl.u32 %v371, 7
  %v373 = vsub.s32 4, %v372
  %v374 = vrot.slane %v347, %v373
  %v381 = vlaneseq
  %v382 = vshrl.u32 %v381, 7
  %v383 = vsub.s32 0, %v382
  %v384 = vrot.slane %v354, %v383
  %v385 = vlaneseq
  %v386 = vshrl.u32 %v385, 7
  %v387 = vsub.s32 0, %v386
  %v388 = vrot.slane %v358, %v387
  %v389 = vlaneseq
  %v390 = vshrl.u32 %v389, 7
  %v391 = vsub.s32 0, %v390
  %v392 = vrot.slane %v362, %v391
  %v393 = vlaneseq
  %v394 = vshrl.u32 %v393, 7
  %v395 = vsub.s32 0, %v394
  %v396 = vrot.slane %v366, %v395
  %v397 = vlaneseq
  %v398 = vshrl.u32 %v397, 7
  %v399 = vsub.s32 0, %v398
  %v400 = vrot.slane %v370, %v399
  %v401 = vlaneseq
  %v402 = vshrl.u32 %v401, 7
  %v403 = vsub.s32 0, %v402
  %v404 = vrot.slane %v374, %v403
  %v405 = vmul.f32 %v221, %v384
  %v406 = vmul.f32 %v223, %v388
  %v407 = vmul.f32 %v274, %v392
  %v408 = vmul.f32 %v276, %v396
  %v409 = vmul.f32 %v327, %v400
  %v410 = vmul.f32 %v329, %v404
  %v411 = vadd.f32 %v405, %v406
  %v412 = vadd.f32 %v411, %v407
  %v413 = vadd.f32 %v412, %v408
  %v414 = vadd.f32 %v413, %v409
  %v415 = vadd.f32 %v414, %v410
  %416 = vadd.xlane.f32.xlu0 %v415
  %v417 = vpop.xlane.xlu0 %416
  %v418 = vadd.f32 %v417, 0.0
  %v419 = vmul.f32 %v405, %v221
  %v420 = vmul.f32 %v406, %v223
  %v421 = vmul.f32 %v407, %v274
  %v422 = vmul.f32 %v408, %v276
  %v423 = vmul.f32 %v409, %v327
  %v424 = vmul.f32 %v410, %v329
  %v425 = vadd.f32 %v419, %v420
  %v426 = vadd.f32 %v425, %v421
  %v427 = vadd.f32 %v426, %v422
  %v428 = vadd.f32 %v427, %v423
  %v429 = vadd.f32 %v428, %v424
  %430 = vadd.xlane.f32.xlu0 %v429
  %v431 = vpop.xlane.xlu0 %430
  %v432 = vadd.f32 %v431, 0.0
  %v433 = vlaneseq
  %v434 = vshrl.u32 %v433, 7
  %v435 = vsub.s32 1, %v434
  %v436 = vrot.slane %v345, %v435
  %v437 = vlaneseq
  %v438 = vshrl.u32 %v437, 7
  %v439 = vsub.s32 5, %v438
  %v440 = vrot.slane %v345, %v439
  %v441 = vlaneseq
  %v442 = vshrl.u32 %v441, 7
  %v443 = vsub.s32 1, %v442
  %v444 = vrot.slane %v346, %v443
  %v445 = vlaneseq
  %v446 = vshrl.u32 %v445, 7
  %v447 = vsub.s32 5, %v446
  %v448 = vrot.slane %v346, %v447
  %v449 = vlaneseq
  %v450 = vshrl.u32 %v449, 7
  %v451 = vsub.s32 1, %v450
  %v452 = vrot.slane %v347, %v451
  %v453 = vlaneseq
  %v454 = vshrl.u32 %v453, 7
  %v455 = vsub.s32 5, %v454
  %v456 = vrot.slane %v347, %v455
  %v463 = vlaneseq
  %v464 = vshrl.u32 %v463, 7
  %v465 = vsub.s32 1, %v464
  %v466 = vrot.slane %v436, %v465
  %v467 = vlaneseq
  %v468 = vshrl.u32 %v467, 7
  %v469 = vsub.s32 1, %v468
  %v470 = vrot.slane %v440, %v469
  %v471 = vlaneseq
  %v472 = vshrl.u32 %v471, 7
  %v473 = vsub.s32 1, %v472
  %v474 = vrot.slane %v444, %v473
  %v475 = vlaneseq
  %v476 = vshrl.u32 %v475, 7
  %v477 = vsub.s32 1, %v476
  %v478 = vrot.slane %v448, %v477
  %v479 = vlaneseq
  %v480 = vshrl.u32 %v479, 7
  %v481 = vsub.s32 1, %v480
  %v482 = vrot.slane %v452, %v481
  %v483 = vlaneseq
  %v484 = vshrl.u32 %v483, 7
  %v485 = vsub.s32 1, %v484
  %v486 = vrot.slane %v456, %v485
  %v487 = vmul.f32 %v225, %v466
  %v488 = vmul.f32 %v227, %v470
  %v489 = vmul.f32 %v278, %v474
  %v490 = vmul.f32 %v280, %v478
  %v491 = vmul.f32 %v331, %v482
  %v492 = vmul.f32 %v333, %v486
  %v493 = vadd.f32 %v487, %v488
  %v494 = vadd.f32 %v493, %v489
  %v495 = vadd.f32 %v494, %v490
  %v496 = vadd.f32 %v495, %v491
  %v497 = vadd.f32 %v496, %v492
  %498 = vadd.xlane.f32.xlu0 %v497
  %v499 = vpop.xlane.xlu0 %498
  %v500 = vadd.f32 %v418, %v499
  %v501 = vmul.f32 %v487, %v225
  %v502 = vmul.f32 %v488, %v227
  %v503 = vmul.f32 %v489, %v278
  %v504 = vmul.f32 %v490, %v280
  %v505 = vmul.f32 %v491, %v331
  %v506 = vmul.f32 %v492, %v333
  %v507 = vadd.f32 %v501, %v502
  %v508 = vadd.f32 %v507, %v503
  %v509 = vadd.f32 %v508, %v504
  %v510 = vadd.f32 %v509, %v505
  %v511 = vadd.f32 %v510, %v506
  %512 = vadd.xlane.f32.xlu0 %v511
  %v513 = vpop.xlane.xlu0 %512
  %v514 = vadd.f32 %v432, %v513
  %v515 = vlaneseq
  %v516 = vshrl.u32 %v515, 7
  %v517 = vsub.s32 2, %v516
  %v518 = vrot.slane %v345, %v517
  %v519 = vlaneseq
  %v520 = vshrl.u32 %v519, 7
  %v521 = vsub.s32 6, %v520
  %v522 = vrot.slane %v345, %v521
  %v523 = vlaneseq
  %v524 = vshrl.u32 %v523, 7
  %v525 = vsub.s32 2, %v524
  %v526 = vrot.slane %v346, %v525
  %v527 = vlaneseq
  %v528 = vshrl.u32 %v527, 7
  %v529 = vsub.s32 6, %v528
  %v530 = vrot.slane %v346, %v529
  %v531 = vlaneseq
  %v532 = vshrl.u32 %v531, 7
  %v533 = vsub.s32 2, %v532
  %v534 = vrot.slane %v347, %v533
  %v535 = vlaneseq
  %v536 = vshrl.u32 %v535, 7
  %v537 = vsub.s32 6, %v536
  %v538 = vrot.slane %v347, %v537
  %v545 = vlaneseq
  %v546 = vshrl.u32 %v545, 7
  %v547 = vsub.s32 2, %v546
  %v548 = vrot.slane %v518, %v547
  %v549 = vlaneseq
  %v550 = vshrl.u32 %v549, 7
  %v551 = vsub.s32 2, %v550
  %v552 = vrot.slane %v522, %v551
  %v553 = vlaneseq
  %v554 = vshrl.u32 %v553, 7
  %v555 = vsub.s32 2, %v554
  %v556 = vrot.slane %v526, %v555
  %v557 = vlaneseq
  %v558 = vshrl.u32 %v557, 7
  %v559 = vsub.s32 2, %v558
  %v560 = vrot.slane %v530, %v559
  %v561 = vlaneseq
  %v562 = vshrl.u32 %v561, 7
  %v563 = vsub.s32 2, %v562
  %v564 = vrot.slane %v534, %v563
  %v565 = vlaneseq
  %v566 = vshrl.u32 %v565, 7
  %v567 = vsub.s32 2, %v566
  %v568 = vrot.slane %v538, %v567
  %v569 = vmul.f32 %v231, %v548
  %v570 = vmul.f32 %v233, %v552
  %v571 = vmul.f32 %v284, %v556
  %v572 = vmul.f32 %v286, %v560
  %v573 = vmul.f32 %v337, %v564
  %v574 = vmul.f32 %v339, %v568
  %v575 = vadd.f32 %v569, %v570
  %v576 = vadd.f32 %v575, %v571
  %v577 = vadd.f32 %v576, %v572
  %v578 = vadd.f32 %v577, %v573
  %v579 = vadd.f32 %v578, %v574
  %580 = vadd.xlane.f32.xlu0 %v579
  %v581 = vpop.xlane.xlu0 %580
  %v582 = vadd.f32 %v500, %v581
  %v583 = vmul.f32 %v569, %v231
  %v584 = vmul.f32 %v570, %v233
  %v585 = vmul.f32 %v571, %v284
  %v586 = vmul.f32 %v572, %v286
  %v587 = vmul.f32 %v573, %v337
  %v588 = vmul.f32 %v574, %v339
  %v589 = vadd.f32 %v583, %v584
  %v590 = vadd.f32 %v589, %v585
  %v591 = vadd.f32 %v590, %v586
  %v592 = vadd.f32 %v591, %v587
  %v593 = vadd.f32 %v592, %v588
  %594 = vadd.xlane.f32.xlu0 %v593
  %v595 = vpop.xlane.xlu0 %594
  %v596 = vadd.f32 %v514, %v595
  %v597 = vlaneseq
  %v598 = vshrl.u32 %v597, 7
  %v599 = vsub.s32 3, %v598
  %v600 = vrot.slane %v345, %v599
  %v601 = vlaneseq
  %v602 = vshrl.u32 %v601, 7
  %v603 = vsub.s32 7, %v602
  %v604 = vrot.slane %v345, %v603
  %v605 = vlaneseq
  %v606 = vshrl.u32 %v605, 7
  %v607 = vsub.s32 3, %v606
  %v608 = vrot.slane %v346, %v607
  %v609 = vlaneseq
  %v610 = vshrl.u32 %v609, 7
  %v611 = vsub.s32 7, %v610
  %v612 = vrot.slane %v346, %v611
  %v613 = vlaneseq
  %v614 = vshrl.u32 %v613, 7
  %v615 = vsub.s32 3, %v614
  %v616 = vrot.slane %v347, %v615
  %v617 = vlaneseq
  %v618 = vshrl.u32 %v617, 7
  %v619 = vsub.s32 7, %v618
  %v620 = vrot.slane %v347, %v619
  %v627 = vlaneseq
  %v628 = vshrl.u32 %v627, 7
  %v629 = vsub.s32 3, %v628
  %v630 = vrot.slane %v600, %v629
  %v631 = vlaneseq
  %v632 = vshrl.u32 %v631, 7
  %v633 = vsub.s32 3, %v632
  %v634 = vrot.slane %v604, %v633
  %v635 = vlaneseq
  %v636 = vshrl.u32 %v635, 7
  %v637 = vsub.s32 3, %v636
  %v638 = vrot.slane %v608, %v637
  %v639 = vlaneseq
  %v640 = vshrl.u32 %v639, 7
  %v641 = vsub.s32 3, %v640
  %v642 = vrot.slane %v612, %v641
  %v643 = vlaneseq
  %v644 = vshrl.u32 %v643, 7
  %v645 = vsub.s32 3, %v644
  %v646 = vrot.slane %v616, %v645
  %v647 = vlaneseq
  %v648 = vshrl.u32 %v647, 7
  %v649 = vsub.s32 3, %v648
  %v650 = vrot.slane %v620, %v649
  %v651 = vmul.f32 %v235, %v630
  %v652 = vmul.f32 %v237, %v634
  %v653 = vmul.f32 %v288, %v638
  %v654 = vmul.f32 %v290, %v642
  %v655 = vmul.f32 %v341, %v646
  %v656 = vmul.f32 %v343, %v650
  %v657 = vadd.f32 %v651, %v652
  %v658 = vadd.f32 %v657, %v653
  %v659 = vadd.f32 %v658, %v654
  %v660 = vadd.f32 %v659, %v655
  %v661 = vadd.f32 %v660, %v656
  %662 = vadd.xlane.f32.xlu0 %v661
  %v663 = vpop.xlane.xlu0 %662
  %v664 = vadd.f32 %v582, %v663
  %v665 = vmul.f32 %v651, %v235
  %v666 = vmul.f32 %v652, %v237
  %v667 = vmul.f32 %v653, %v288
  %v668 = vmul.f32 %v654, %v290
  %v669 = vmul.f32 %v655, %v341
  %v670 = vmul.f32 %v656, %v343
  %v671 = vadd.f32 %v665, %v666
  %v672 = vadd.f32 %v671, %v667
  %v673 = vadd.f32 %v672, %v668
  %v674 = vadd.f32 %v673, %v669
  %v675 = vadd.f32 %v674, %v670
  %676 = vadd.xlane.f32.xlu0 %v675
  %v677 = vpop.xlane.xlu0 %676
  %v678 = vadd.f32 %v596, %v677
  %v679 = vmul.f32 %v664, 0.00048828125
  %v680 = vmul.f32 %v678, 0.00048828125
  %v681 = vmul.f32 %v679, %v679
  %v682 = vsub.f32 %v680, %v681
  %v683 = vmax.f32 %v682, 0.0
  %v684 = vadd.f32 %v683, 1e-05
  %v685 = vrsqrt.pop %v684
  %v686 = vld [vmem:[%s3] sm:$0xff]
  %v687 = vmul.f32 %v685, %v686
  %v688 = vld [vmem:[%s4] sm:$0xff]
  %v689 = vmul.f32 %v679, %v687
  %v690 = vsub.f32 %v688, %v689
  %692 = vset.pattern.permute.xlu0 0
  %693 = vperm.xlu0 %692, %v687
  %v694 = vpop.permute.xlu0 %693
  %v696 = vmul.f32 %v221, %v694
  %v697 = vmul.f32 %v223, %v694
  %v698 = vmul.f32 %v274, %v694
  %v699 = vmul.f32 %v276, %v694
  %v700 = vmul.f32 %v327, %v694
  %v701 = vmul.f32 %v329, %v694
  %703 = vset.pattern.permute.xlu0 0
  %704 = vperm.xlu0 %703, %v690
  %v705 = vpop.permute.xlu0 %704
  %v707 = vadd.f32 %v696, %v705
  %v708 = vadd.f32 %v697, %v705
  %v709 = vadd.f32 %v698, %v705
  %v710 = vadd.f32 %v699, %v705
  %v711 = vadd.f32 %v700, %v705
  %v712 = vadd.f32 %v701, %v705
  %v713 = vmax.f32 %v707, 0.0
  %v714 = vmax.f32 %v708, 0.0
  %v715 = vmax.f32 %v709, 0.0
  %v716 = vmax.f32 %v710, 0.0
  %v717 = vmax.f32 %v711, 0.0
  %v718 = vmax.f32 %v712, 0.0
  %v719 = vpack.c.bf16 %v713, %v713
  %v720 = vpack.c.bf16 %v714, %v714
  %v721 = vpack.c.bf16 %v715, %v715
  %v722 = vpack.c.bf16 %v716, %v716
  %v723 = vpack.c.bf16 %v717, %v717
  %v724 = vpack.c.bf16 %v718, %v718
  %v731 = vunpack.c.l.b16 %v719
  %v732 = vunpack.c.l.b16 %v720
  %v733 = vunpack.c.l.b16 %v721
  %v734 = vunpack.c.l.b16 %v722
  %v735 = vunpack.c.l.b16 %v723
  %v736 = vunpack.c.l.b16 %v724
  %v737 = vpack.c.b16 %v732, %v731
  %v738 = vpack.c.b16 %v734, %v733
  %v739 = vpack.c.b16 %v736, %v735
  %743 = vst [vmem:[%s5] sm:$0xff] %v737
  %744 = vst [vmem:[%s5 + $0x8] sm:$0xff] %v738
  %745 = vst [vmem:[%s5 + $0x10] sm:$0xff] %v739
  %v746 = vmul.f32 %v225, %v694
  %v747 = vmul.f32 %v227, %v694
  %v748 = vmul.f32 %v278, %v694
  %v749 = vmul.f32 %v280, %v694
  %v750 = vmul.f32 %v331, %v694
  %v751 = vmul.f32 %v333, %v694
  %v752 = vadd.f32 %v746, %v705
  %v753 = vadd.f32 %v747, %v705
  %v754 = vadd.f32 %v748, %v705
  %v755 = vadd.f32 %v749, %v705
  %v756 = vadd.f32 %v750, %v705
  %v757 = vadd.f32 %v751, %v705
  %v758 = vmax.f32 %v752, 0.0
  %v759 = vmax.f32 %v753, 0.0
  %v760 = vmax.f32 %v754, 0.0
  %v761 = vmax.f32 %v755, 0.0
  %v762 = vmax.f32 %v756, 0.0
  %v763 = vmax.f32 %v757, 0.0
  %v764 = vpack.c.bf16 %v758, %v758
  %v765 = vpack.c.bf16 %v759, %v759
  %v766 = vpack.c.bf16 %v760, %v760
  %v767 = vpack.c.bf16 %v761, %v761
  %v768 = vpack.c.bf16 %v762, %v762
  %v769 = vpack.c.bf16 %v763, %v763
  %v776 = vunpack.c.l.b16 %v764
  %v777 = vunpack.c.l.b16 %v765
  %v778 = vunpack.c.l.b16 %v766
  %v779 = vunpack.c.l.b16 %v767
  %v780 = vunpack.c.l.b16 %v768
  %v781 = vunpack.c.l.b16 %v769
  %v782 = vpack.c.b16 %v777, %v776
  %v783 = vpack.c.b16 %v779, %v778
  %v784 = vpack.c.b16 %v781, %v780
  %788 = vst [vmem:[%s5 + $0x18] sm:$0xff] %v782
  %789 = vst [vmem:[%s5 + $0x20] sm:$0xff] %v783
  %790 = vst [vmem:[%s5 + $0x28] sm:$0xff] %v784
  %v791 = vmul.f32 %v231, %v694
  %v792 = vmul.f32 %v233, %v694
  %v793 = vmul.f32 %v284, %v694
  %v794 = vmul.f32 %v286, %v694
  %v795 = vmul.f32 %v337, %v694
  %v796 = vmul.f32 %v339, %v694
  %v797 = vadd.f32 %v791, %v705
  %v798 = vadd.f32 %v792, %v705
  %v799 = vadd.f32 %v793, %v705
  %v800 = vadd.f32 %v794, %v705
  %v801 = vadd.f32 %v795, %v705
  %v802 = vadd.f32 %v796, %v705
  %v803 = vmax.f32 %v797, 0.0
  %v804 = vmax.f32 %v798, 0.0
  %v805 = vmax.f32 %v799, 0.0
  %v806 = vmax.f32 %v800, 0.0
  %v807 = vmax.f32 %v801, 0.0
  %v808 = vmax.f32 %v802, 0.0
  %v809 = vpack.c.bf16 %v803, %v803
  %v810 = vpack.c.bf16 %v804, %v804
  %v811 = vpack.c.bf16 %v805, %v805
  %v812 = vpack.c.bf16 %v806, %v806
  %v813 = vpack.c.bf16 %v807, %v807
  %v814 = vpack.c.bf16 %v808, %v808
  %v821 = vunpack.c.l.b16 %v809
  %v822 = vunpack.c.l.b16 %v810
  %v823 = vunpack.c.l.b16 %v811
  %v824 = vunpack.c.l.b16 %v812
  %v825 = vunpack.c.l.b16 %v813
  %v826 = vunpack.c.l.b16 %v814
  %v827 = vpack.c.b16 %v822, %v821
  %v828 = vpack.c.b16 %v824, %v823
  %v829 = vpack.c.b16 %v826, %v825
  %833 = vst [vmem:[%s5 + $0x30] sm:$0xff] %v827
  %834 = vst [vmem:[%s5 + $0x38] sm:$0xff] %v828
  %835 = vst [vmem:[%s5 + $0x40] sm:$0xff] %v829
  %v836 = vmul.f32 %v235, %v694
  %v837 = vmul.f32 %v237, %v694
  %v838 = vmul.f32 %v288, %v694
  %v839 = vmul.f32 %v290, %v694
  %v840 = vmul.f32 %v341, %v694
  %v841 = vmul.f32 %v343, %v694
  %v842 = vadd.f32 %v836, %v705
  %v843 = vadd.f32 %v837, %v705
  %v844 = vadd.f32 %v838, %v705
  %v845 = vadd.f32 %v839, %v705
  %v846 = vadd.f32 %v840, %v705
  %v847 = vadd.f32 %v841, %v705
  %v848 = vmax.f32 %v842, 0.0
  %v849 = vmax.f32 %v843, 0.0
  %v850 = vmax.f32 %v844, 0.0
  %v851 = vmax.f32 %v845, 0.0
  %v852 = vmax.f32 %v846, 0.0
  %v853 = vmax.f32 %v847, 0.0
  %v854 = vpack.c.bf16 %v848, %v848
  %v855 = vpack.c.bf16 %v849, %v849
  %v856 = vpack.c.bf16 %v850, %v850
  %v857 = vpack.c.bf16 %v851, %v851
  %v858 = vpack.c.bf16 %v852, %v852
  %v859 = vpack.c.bf16 %v853, %v853
  %v866 = vunpack.c.l.b16 %v854
  %v867 = vunpack.c.l.b16 %v855
  %v868 = vunpack.c.l.b16 %v856
  %v869 = vunpack.c.l.b16 %v857
  %v870 = vunpack.c.l.b16 %v858
  %v871 = vunpack.c.l.b16 %v859
  %v872 = vpack.c.b16 %v867, %v866
  %v873 = vpack.c.b16 %v869, %v868
  %v874 = vpack.c.b16 %v871, %v870
  %878 = vst [vmem:[%s5 + $0x48] sm:$0xff] %v872
  %879 = vst [vmem:[%s5 + $0x50] sm:$0xff] %v873
  %880 = vst [vmem:[%s5 + $0x58] sm:$0xff] %v874
  // Predicated region
  $region22: #{generator_forward.8} parent=0 // pred_check
    _
  $region23: #{generator_forward.8} parent=0 // pred_check_branch
    %882 = sbr.rel (0) target = $region25
  $region24: #{generator_forward.8} parent=0 // pred_region
    _
  $region25: #{generator_forward.8} parent=0 // pred_fallthru
    _
  // Predicated region
  $region26: #{generator_forward.8} parent=0 // pred_check
    _
  $region27: #{generator_forward.8} parent=0 // pred_check_branch
    %884 = sbr.rel (0) target = $region29
  $region28: #{generator_forward.8} parent=0 // pred_region
    _
  $region29: #{generator_forward.8} parent=0 // pred_fallthru
    _

// kernel: generator_forward.9
$region0: #{generator_forward.9}
  #allocation0 [shape = 'u32[]', space=smem, size = 0x4, offset = 0x4, fixed_abs, tag = 'smem constant byte address 0x4 - core index']
  #allocation1 [shape = 'u32[144,128]{1,0:T(1,128)}', space=vmem, size = 0x12000, scoped, tag = 'internal scratch']
  %s0 = inlined_call_operand.vmem [shape: bf16[32,2304], index: 0, kind: input, shape index: {}]
  %s1 = inlined_call_operand.vmem [shape: bf16[12,32], index: 1, kind: input, shape index: {}]
  %s2 = inlined_call_operand.vmem [shape: f32[12,1], index: 2, kind: input, shape index: {}]
  %s3 = inlined_call_operand.vmem [shape: f32[12,2304], index: 3, kind: output, shape index: {}]
  %s4 = sld [smem:[#allocation0]]
  $region22: #{generator_forward.9} parent=0
    _
  %s6 = ssub.s32 1, %s4
  %s7 = scalar_select 0, %s6, %s4
  // Predicated region
  $region2: #{generator_forward.9} parent=0 // pred_check
    _
  $region3: #{generator_forward.9} parent=0 // pred_check_branch
    %9 = sbr.rel (0) target = $region5
  $region4: #{generator_forward.9} parent=0 // pred_region
    _
  $region5: #{generator_forward.9} parent=0 // pred_fallthru
    _
  // Predicated region
  $region6: #{generator_forward.9} parent=0 // pred_check
    _
  $region7: #{generator_forward.9} parent=0 // pred_check_branch
    %11 = sbr.rel (0) target = $region9
  $region8: #{generator_forward.9} parent=0 // pred_region
    _
  $region9: #{generator_forward.9} parent=0 // pred_fallthru
    _
  // Predicated region
  $region10: #{generator_forward.9} parent=0 // pred_check
    _
  $region11: #{generator_forward.9} parent=0 // pred_check_branch
    %13 = sbr.rel (0) target = $region13
  $region12: #{generator_forward.9} parent=0 // pred_region
    _
  $region13: #{generator_forward.9} parent=0 // pred_fallthru
    _
  %v15 = vld [vmem:[%s1] sm:$0xf]
  %v16 = vld [vmem:[%s1 + $0x4] sm:$0x3]
  %v17 = vld [vmem:[%s0] sm:$0xff]
  %v18 = vld [vmem:[%s0 + $0x8] sm:$0xff]
  %v19 = vld [vmem:[%s0 + $0x10] sm:$0xff]
  %v20 = vld [vmem:[%s0 + $0x18] sm:$0xff]
  %v21 = vld [vmem:[%s0 + $0x20] sm:$0xff]
  %v22 = vld [vmem:[%s0 + $0x28] sm:$0xff]
  %v23 = vld [vmem:[%s0 + $0x30] sm:$0xff]
  %v24 = vld [vmem:[%s0 + $0x38] sm:$0xff]
  %v25 = vld [vmem:[%s0 + $0x40] sm:$0xff]
  %v26 = vld [vmem:[%s0 + $0x48] sm:$0xff]
  %v27 = vld [vmem:[%s0 + $0x50] sm:$0xff]
  %v28 = vld [vmem:[%s0 + $0x58] sm:$0xff]
  %v29 = vld [vmem:[%s0 + $0x60] sm:$0xff]
  %v30 = vld [vmem:[%s0 + $0x68] sm:$0xff]
  %v31 = vld [vmem:[%s0 + $0x70] sm:$0xff]
  %v32 = vld [vmem:[%s0 + $0x78] sm:$0xff]
  %v33 = vld [vmem:[%s0 + $0x80] sm:$0xff]
  %v34 = vld [vmem:[%s0 + $0x88] sm:$0xff]
  %v35 = vld [vmem:[%s0 + $0x90] sm:$0xff]
  %v36 = vld [vmem:[%s0 + $0x98] sm:$0xff]
  %v37 = vld [vmem:[%s0 + $0xa0] sm:$0xff]
  %v38 = vld [vmem:[%s0 + $0xa8] sm:$0xff]
  %v39 = vld [vmem:[%s0 + $0xb0] sm:$0xff]
  %v40 = vld [vmem:[%s0 + $0xb8] sm:$0xff]
  %v41 = vld [vmem:[%s0 + $0xc0] sm:$0xff]
  %v42 = vld [vmem:[%s0 + $0xc8] sm:$0xff]
  %v43 = vld [vmem:[%s0 + $0xd0] sm:$0xff]
  %v44 = vld [vmem:[%s0 + $0xd8] sm:$0xff]
  %v45 = vld [vmem:[%s0 + $0xe0] sm:$0xff]
  %v46 = vld [vmem:[%s0 + $0xe8] sm:$0xff]
  %v47 = vld [vmem:[%s0 + $0xf0] sm:$0xff]
  %v48 = vld [vmem:[%s0 + $0xf8] sm:$0xff]
  %v49 = vld [vmem:[%s0 + $0x100] sm:$0xff]
  %v50 = vld [vmem:[%s0 + $0x108] sm:$0xff]
  %v51 = vld [vmem:[%s0 + $0x110] sm:$0xff]
  %v52 = vld [vmem:[%s0 + $0x118] sm:$0xff]
  %v53 = vld [vmem:[%s2] sm:$0xff]
  %v54 = vld [vmem:[%s2 + $0x8] sm:$0xf]
  %56 = vset.pattern.permute.xlu0 0
  %57 = vperm.xlu0 %56, %v53
  %v58 = vpop.permute.xlu0 %57
  %61 = vset.pattern.permute.xlu0 0
  %62 = vperm.xlu0 %61, %v54
  %v63 = vpop.permute.xlu0 %62
  %v67 = vunpack.c.l.b16 %v15
  %v68 = vunpack.c.l.b16 %v16
  %v69 = vpack.c.b16 %v68, %v67
  %v106 = vunpack.c.l.b16 %v17
  %v107 = vunpack.c.h.b16 %v17
  %v108 = vunpack.c.l.b16 %v18
  %v109 = vunpack.c.h.b16 %v18
  %v110 = vunpack.c.l.b16 %v19
  %v111 = vunpack.c.h.b16 %v19
  %v112 = vunpack.c.l.b16 %v20
  %v113 = vunpack.c.h.b16 %v20
  %v114 = vunpack.c.l.b16 %v21
  %v115 = vunpack.c.h.b16 %v21
  %v116 = vunpack.c.l.b16 %v22
  %v117 = vunpack.c.h.b16 %v22
  %v118 = vunpack.c.l.b16 %v23
  %v119 = vunpack.c.h.b16 %v23
  %v120 = vunpack.c.l.b16 %v24
  %v121 = vunpack.c.h.b16 %v24
  %v122 = vunpack.c.l.b16 %v25
  %v123 = vunpack.c.h.b16 %v25
  %v124 = vunpack.c.l.b16 %v26
  %v125 = vunpack.c.h.b16 %v26
  %v126 = vunpack.c.l.b16 %v27
  %v127 = vunpack.c.h.b16 %v27
  %v128 = vunpack.c.l.b16 %v28
  %v129 = vunpack.c.h.b16 %v28
  %v130 = vunpack.c.l.b16 %v29
  %v131 = vunpack.c.h.b16 %v29
  %v132 = vunpack.c.l.b16 %v30
  %v133 = vunpack.c.h.b16 %v30
  %v134 = vunpack.c.l.b16 %v31
  %v135 = vunpack.c.h.b16 %v31
  %v136 = vunpack.c.l.b16 %v32
  %v137 = vunpack.c.h.b16 %v32
  %v138 = vunpack.c.l.b16 %v33
  %v139 = vunpack.c.h.b16 %v33
  %v140 = vunpack.c.l.b16 %v34
  %v141 = vunpack.c.h.b16 %v34
  %v142 = vunpack.c.l.b16 %v35
  %v143 = vunpack.c.h.b16 %v35
  %v144 = vunpack.c.l.b16 %v36
  %v145 = vunpack.c.h.b16 %v36
  %v146 = vunpack.c.l.b16 %v37
  %v147 = vunpack.c.h.b16 %v37
  %v148 = vunpack.c.l.b16 %v38
  %v149 = vunpack.c.h.b16 %v38
  %v150 = vunpack.c.l.b16 %v39
  %v151 = vunpack.c.h.b16 %v39
  %v152 = vunpack.c.l.b16 %v40
  %v153 = vunpack.c.h.b16 %v40
  %v154 = vunpack.c.l.b16 %v41
  %v155 = vunpack.c.h.b16 %v41
  %v156 = vunpack.c.l.b16 %v42
  %v157 = vunpack.c.h.b16 %v42
  %v158 = vunpack.c.l.b16 %v43
  %v159 = vunpack.c.h.b16 %v43
  %v160 = vunpack.c.l.b16 %v44
  %v161 = vunpack.c.h.b16 %v44
  %v162 = vunpack.c.l.b16 %v45
  %v163 = vunpack.c.h.b16 %v45
  %v164 = vunpack.c.l.b16 %v46
  %v165 = vunpack.c.h.b16 %v46
  %v166 = vunpack.c.l.b16 %v47
  %v167 = vunpack.c.h.b16 %v47
  %v168 = vunpack.c.l.b16 %v48
  %v169 = vunpack.c.h.b16 %v48
  %v170 = vunpack.c.l.b16 %v49
  %v171 = vunpack.c.h.b16 %v49
  %v172 = vunpack.c.l.b16 %v50
  %v173 = vunpack.c.h.b16 %v50
  %v174 = vunpack.c.l.b16 %v51
  %v175 = vunpack.c.h.b16 %v51
  %v176 = vunpack.c.l.b16 %v52
  %v177 = vunpack.c.h.b16 %v52
  %v178 = vpack.c.b16 %v124, %v106
  %v179 = vpack.c.b16 %v125, %v107
  %v180 = vpack.c.b16 %v126, %v108
  %v181 = vpack.c.b16 %v127, %v109
  %v182 = vpack.c.b16 %v128, %v110
  %v183 = vpack.c.b16 %v129, %v111
  %v184 = vpack.c.b16 %v130, %v112
  %v185 = vpack.c.b16 %v131, %v113
  %v186 = vpack.c.b16 %v132, %v114
  %v187 = vpack.c.b16 %v133, %v115
  %v188 = vpack.c.b16 %v134, %v116
  %v189 = vpack.c.b16 %v135, %v117
  %v190 = vpack.c.b16 %v136, %v118
  %v191 = vpack.c.b16 %v137, %v119
  %v192 = vpack.c.b16 %v138, %v120
  %v193 = vpack.c.b16 %v139, %v121
  %v194 = vpack.c.b16 %v140, %v122
  %v195 = vpack.c.b16 %v141, %v123
  %v196 = vpack.c.b16 %v160, %v142
  %v197 = vpack.c.b16 %v161, %v143
  %v198 = vpack.c.b16 %v162, %v144
  %v199 = vpack.c.b16 %v163, %v145
  %v200 = vpack.c.b16 %v164, %v146
  %v201 = vpack.c.b16 %v165, %v147
  %v202 = vpack.c.b16 %v166, %v148
  %v203 = vpack.c.b16 %v167, %v149
  %v204 = vpack.c.b16 %v168, %v150
  %v205 = vpack.c.b16 %v169, %v151
  %v206 = vpack.c.b16 %v170, %v152
  %v207 = vpack.c.b16 %v171, %v153
  %v208 = vpack.c.b16 %v172, %v154
  %v209 = vpack.c.b16 %v173, %v155
  %v210 = vpack.c.b16 %v174, %v156
  %v211 = vpack.c.b16 %v175, %v157
  %v212 = vpack.c.b16 %v176, %v158
  %v213 = vpack.c.b16 %v177, %v159
  %vm250 = vcmask 261120
  %v252 = vsel %vm250, %v69, 0
  %254 = vmatprep.subr.bf16.mxu0 %v179
  %255 = vmatpush1.bf16.msra.mxu0 %v178
  %256 = vmatprep.subr.bf16.mxu0 %v197
  %257 = vmatpush1.bf16.msra.mxu0 %v196
  %258 = vmatprep.subr.bf16.mxu0 0
  %259 = vmatpush1.bf16.msra.mxu0 0
  %260 = vmatprep.subr.bf16.mxu0 0
  %261 = vmatpush1.bf16.msra.mxu0 0
  %262 = vmatprep.subr.bf16.mxu0 0
  %263 = vmatpush1.bf16.msra.mxu0 0
  %264 = vmatprep.subr.bf16.mxu0 0
  %265 = vmatpush1.bf16.msra.mxu0 0
  %266 = vmatprep.subr.bf16.mxu0 0
  %267 = vmatpush1.bf16.msra.mxu0 0
  %268 = vmatprep.subr.bf16.mxu0 0
  %269 = vmatpush1.bf16.msra.mxu0 0
  %270 = vmatprep.subr.bf16.mxu0 0
  %271 = vmatpush1.bf16.msra.mxu0 0
  %272 = vmatprep.subr.bf16.mxu0 0
  %273 = vmatpush1.bf16.msra.mxu0 0
  %274 = vmatprep.subr.bf16.mxu0 0
  %275 = vmatpush1.bf16.msra.mxu0 0
  %276 = vmatprep.subr.bf16.mxu0 0
  %277 = vmatpush1.bf16.msra.mxu0 0
  %278 = vmatprep.subr.bf16.mxu0 0
  %279 = vmatpush1.bf16.msra.mxu0 0
  %280 = vmatprep.subr.bf16.mxu0 0
  %281 = vmatpush1.bf16.msra.mxu0 0
  %282 = vmatprep.subr.bf16.mxu0 0
  %283 = vmatpush1.bf16.msra.mxu0 0
  %284 = vmatprep.subr.bf16.mxu0 0
  %285 = vmatpush1.bf16.msra.mxu0 0
  %286 = vmatprep.mubr.bf16.mxu0 0
  %287 = vmatmul.mubr.bf16.gmra.mrb[0].mxu0 %v252
  %v288 = vpop.f32.mrb[0].mxu0
  %v289 = vadd.f32 %v58, %v288
  %v290 = vpop.f32.mrb[0].mxu0
  %v291 = vadd.f32 %v58, %v290
  %v292 = vpop.f32.mrb[0].mxu0
  %v293 = vadd.f32 %v63, %v292
  %v294 = vpop.f32.mrb[0].mxu0
  %v295 = vadd.f32 %v63, %v294
  %296 = vdwg.mxu0
  %297 = vmatprep.subr.bf16.mxu0 %v181
  %298 = vmatpush1.bf16.msra.mxu0 %v180
  %299 = vmatprep.subr.bf16.mxu0 %v199
  %300 = vmatpush1.bf16.msra.mxu0 %v198
  %301 = vmatprep.subr.bf16.mxu0 0
  %302 = vmatpush1.bf16.msra.mxu0 0
  %303 = vmatprep.subr.bf16.mxu0 0
  %304 = vmatpush1.bf16.msra.mxu0 0
  %305 = vmatprep.subr.bf16.mxu0 0
  %306 = vmatpush1.bf16.msra.mxu0 0
  %307 = vmatprep.subr.bf16.mxu0 0
  %308 = vmatpush1.bf16.msra.mxu0 0
  %309 = vmatprep.subr.bf16.mxu0 0
  %310 = vmatpush1.bf16.msra.mxu0 0
  %311 = vmatprep.subr.bf16.mxu0 0
  %312 = vmatpush1.bf16.msra.mxu0 0
  %313 = vmatprep.subr.bf16.mxu0 0
  %314 = vmatpush1.bf16.msra.mxu0 0
  %315 = vmatprep.subr.bf16.mxu0 0
  %316 = vmatpush1.bf16.msra.mxu0 0
  %317 = vmatprep.subr.bf16.mxu0 0
  %318 = vmatpush1.bf16.msra.mxu0 0
  %319 = vmatprep.subr.bf16.mxu0 0
  %320 = vmatpush1.bf16.msra.mxu0 0
  %321 = vmatprep.subr.bf16.mxu0 0
  %322 = vmatpush1.bf16.msra.mxu0 0
  %323 = vmatprep.subr.bf16.mxu0 0
  %324 = vmatpush1.bf16.msra.mxu0 0
  %325 = vmatprep.subr.bf16.mxu0 0
  %326 = vmatpush1.bf16.msra.mxu0 0
  %327 = vmatprep.subr.bf16.mxu0 0
  %328 = vmatpush1.bf16.msra.mxu0 0
  %329 = vmatprep.mubr.bf16.mxu0 0
  %330 = vmatmul.mubr.bf16.gmra.mrb[0].mxu0 %v252
  %v331 = vpop.f32.mrb[0].mxu0
  %v332 = vadd.f32 %v58, %v331
  %v333 = vpop.f32.mrb[0].mxu0
  %v334 = vadd.f32 %v58, %v333
  %v335 = vpop.f32.mrb[0].mxu0
  %v336 = vadd.f32 %v63, %v335
  %v337 = vpop.f32.mrb[0].mxu0
  %v338 = vadd.f32 %v63, %v337
  %339 = vdwg.mxu0
  %340 = vmatprep.subr.bf16.mxu0 %v183
  %341 = vmatpush1.bf16.msra.mxu0 %v182
  %342 = vmatprep.subr.bf16.mxu0 %v201
  %343 = vmatpush1.bf16.msra.mxu0 %v200
  %344 = vmatprep.subr.bf16.mxu0 0
  %345 = vmatpush1.bf16.msra.mxu0 0
  %346 = vmatprep.subr.bf16.mxu0 0
  %347 = vmatpush1.bf16.msra.mxu0 0
  %348 = vmatprep.subr.bf16.mxu0 0
  %349 = vmatpush1.bf16.msra.mxu0 0
  %350 = vmatprep.subr.bf16.mxu0 0
  %351 = vmatpush1.bf16.msra.mxu0 0
  %352 = vmatprep.subr.bf16.mxu0 0
  %353 = vmatpush1.bf16.msra.mxu0 0
  %354 = vmatprep.subr.bf16.mxu0 0
  %355 = vmatpush1.bf16.msra.mxu0 0
  %356 = vmatprep.subr.bf16.mxu0 0
  %357 = vmatpush1.bf16.msra.mxu0 0
  %358 = vmatprep.subr.bf16.mxu0 0
  %359 = vmatpush1.bf16.msra.mxu0 0
  %360 = vmatprep.subr.bf16.mxu0 0
  %361 = vmatpush1.bf16.msra.mxu0 0
  %362 = vmatprep.subr.bf16.mxu0 0
  %363 = vmatpush1.bf16.msra.mxu0 0
  %364 = vmatprep.subr.bf16.mxu0 0
  %365 = vmatpush1.bf16.msra.mxu0 0
  %366 = vmatprep.subr.bf16.mxu0 0
  %367 = vmatpush1.bf16.msra.mxu0 0
  %368 = vmatprep.subr.bf16.mxu0 0
  %369 = vmatpush1.bf16.msra.mxu0 0
  %370 = vmatprep.subr.bf16.mxu0 0
  %371 = vmatpush1.bf16.msra.mxu0 0
  %372 = vmatprep.mubr.bf16.mxu0 0
  %373 = vmatmul.mubr.bf16.gmra.mrb[0].mxu0 %v252
  %v374 = vpop.f32.mrb[0].mxu0
  %v375 = vadd.f32 %v58, %v374
  %v376 = vpop.f32.mrb[0].mxu0
  %v377 = vadd.f32 %v58, %v376
  %v378 = vpop.f32.mrb[0].mxu0
  %v379 = vadd.f32 %v63, %v378
  %v380 = vpop.f32.mrb[0].mxu0
  %v381 = vadd.f32 %v63, %v380
  %382 = vdwg.mxu0
  %383 = vmatprep.subr.bf16.mxu0 %v185
  %384 = vmatpush1.bf16.msra.mxu0 %v184
  %385 = vmatprep.subr.bf16.mxu0 %v203
  %386 = vmatpush1.bf16.msra.mxu0 %v202
  %387 = vmatprep.subr.bf16.mxu0 0
  %388 = vmatpush1.bf16.msra.mxu0 0
  %389 = vmatprep.subr.bf16.mxu0 0
  %390 = vmatpush1.bf16.msra.mxu0 0
  %391 = vmatprep.subr.bf16.mxu0 0
  %392 = vmatpush1.bf16.msra.mxu0 0
  %393 = vmatprep.subr.bf16.mxu0 0
  %394 = vmatpush1.bf16.msra.mxu0 0
  %395 = vmatprep.subr.bf16.mxu0 0
  %396 = vmatpush1.bf16.msra.mxu0 0
  %397 = vmatprep.subr.bf16.mxu0 0
  %398 = vmatpush1.bf16.msra.mxu0 0
  %399 = vmatprep.subr.bf16.mxu0 0
  %400 = vmatpush1.bf16.msra.mxu0 0
  %401 = vmatprep.subr.bf16.mxu0 0
  %402 = vmatpush1.bf16.msra.mxu0 0
  %403 = vmatprep.subr.bf16.mxu0 0
  %404 = vmatpush1.bf16.msra.mxu0 0
  %405 = vmatprep.subr.bf16.mxu0 0
  %406 = vmatpush1.bf16.msra.mxu0 0
  %407 = vmatprep.subr.bf16.mxu0 0
  %408 = vmatpush1.bf16.msra.mxu0 0
  %409 = vmatprep.subr.bf16.mxu0 0
  %410 = vmatpush1.bf16.msra.mxu0 0
  %411 = vmatprep.subr.bf16.mxu0 0
  %412 = vmatpush1.bf16.msra.mxu0 0
  %413 = vmatprep.subr.bf16.mxu0 0
  %414 = vmatpush1.bf16.msra.mxu0 0
  %415 = vmatprep.mubr.bf16.mxu0 0
  %416 = vmatmul.mubr.bf16.gmra.mrb[0].mxu0 %v252
  %v417 = vpop.f32.mrb[0].mxu0
  %v418 = vadd.f32 %v58, %v417
  %v419 = vpop.f32.mrb[0].mxu0
  %v420 = vadd.f32 %v58, %v419
  %v421 = vpop.f32.mrb[0].mxu0
  %v422 = vadd.f32 %v63, %v421
  %v423 = vpop.f32.mrb[0].mxu0
  %v424 = vadd.f32 %v63, %v423
  %425 = vdwg.mxu0
  %426 = vmatprep.subr.bf16.mxu0 %v187
  %427 = vmatpush1.bf16.msra.mxu0 %v186
  %428 = vmatprep.subr.bf16.mxu0 %v205
  %429 = vmatpush1.bf16.msra.mxu0 %v204
  %430 = vmatprep.subr.bf16.mxu0 0
  %431 = vmatpush1.bf16.msra.mxu0 0
  %432 = vmatprep.subr.bf16.mxu0 0
  %433 = vmatpush1.bf16.msra.mxu0 0
  %434 = vmatprep.subr.bf16.mxu0 0
  %435 = vmatpush1.bf16.msra.mxu0 0
  %436 = vmatprep.subr.bf16.mxu0 0
  %437 = vmatpush1.bf16.msra.mxu0 0
  %438 = vmatprep.subr.bf16.mxu0 0
  %439 = vmatpush1.bf16.msra.mxu0 0
  %440 = vmatprep.subr.bf16.mxu0 0
  %441 = vmatpush1.bf16.msra.mxu0 0
  %442 = vmatprep.subr.bf16.mxu0 0
  %443 = vmatpush1.bf16.msra.mxu0 0
  %444 = vmatprep.subr.bf16.mxu0 0
  %445 = vmatpush1.bf16.msra.mxu0 0
  %446 = vmatprep.subr.bf16.mxu0 0
  %447 = vmatpush1.bf16.msra.mxu0 0
  %448 = vmatprep.subr.bf16.mxu0 0
  %449 = vmatpush1.bf16.msra.mxu0 0
  %450 = vmatprep.subr.bf16.mxu0 0
  %451 = vmatpush1.bf16.msra.mxu0 0
  %452 = vmatprep.subr.bf16.mxu0 0
  %453 = vmatpush1.bf16.msra.mxu0 0
  %454 = vmatprep.subr.bf16.mxu0 0
  %455 = vmatpush1.bf16.msra.mxu0 0
  %456 = vmatprep.subr.bf16.mxu0 0
  %457 = vmatpush1.bf16.msra.mxu0 0
  %458 = vmatprep.mubr.bf16.mxu0 0
  %459 = vmatmul.mubr.bf16.gmra.mrb[0].mxu0 %v252
  %v460 = vpop.f32.mrb[0].mxu0
  %v461 = vadd.f32 %v58, %v460
  %v462 = vpop.f32.mrb[0].mxu0
  %v463 = vadd.f32 %v58, %v462
  %v464 = vpop.f32.mrb[0].mxu0
  %v465 = vadd.f32 %v63, %v464
  %v466 = vpop.f32.mrb[0].mxu0
  %v467 = vadd.f32 %v63, %v466
  %468 = vdwg.mxu0
  %469 = vmatprep.subr.bf16.mxu0 %v189
  %470 = vmatpush1.bf16.msra.mxu0 %v188
  %471 = vmatprep.subr.bf16.mxu0 %v207
  %472 = vmatpush1.bf16.msra.mxu0 %v206
  %473 = vmatprep.subr.bf16.mxu0 0
  %474 = vmatpush1.bf16.msra.mxu0 0
  %475 = vmatprep.subr.bf16.mxu0 0
  %476 = vmatpush1.bf16.msra.mxu0 0
  %477 = vmatprep.subr.bf16.mxu0 0
  %478 = vmatpush1.bf16.msra.mxu0 0
  %479 = vmatprep.subr.bf16.mxu0 0
  %480 = vmatpush1.bf16.msra.mxu0 0
  %481 = vmatprep.subr.bf16.mxu0 0
  %482 = vmatpush1.bf16.msra.mxu0 0
  %483 = vmatprep.subr.bf16.mxu0 0
  %484 = vmatpush1.bf16.msra.mxu0 0
  %485 = vmatprep.subr.bf16.mxu0 0
  %486 = vmatpush1.bf16.msra.mxu0 0
  %487 = vmatprep.subr.bf16.mxu0 0
  %488 = vmatpush1.bf16.msra.mxu0 0
  %489 = vmatprep.subr.bf16.mxu0 0
  %490 = vmatpush1.bf16.msra.mxu0 0
  %491 = vmatprep.subr.bf16.mxu0 0
  %492 = vmatpush1.bf16.msra.mxu0 0
  %493 = vmatprep.subr.bf16.mxu0 0
  %494 = vmatpush1.bf16.msra.mxu0 0
  %495 = vmatprep.subr.bf16.mxu0 0
  %496 = vmatpush1.bf16.msra.mxu0 0
  %497 = vmatprep.subr.bf16.mxu0 0
  %498 = vmatpush1.bf16.msra.mxu0 0
  %499 = vmatprep.subr.bf16.mxu0 0
  %500 = vmatpush1.bf16.msra.mxu0 0
  %501 = vmatprep.mubr.bf16.mxu0 0
  %502 = vmatmul.mubr.bf16.gmra.mrb[0].mxu0 %v252
  %v503 = vpop.f32.mrb[0].mxu0
  %v504 = vadd.f32 %v58, %v503
  %v505 = vpop.f32.mrb[0].mxu0
  %v506 = vadd.f32 %v58, %v505
  %v507 = vpop.f32.mrb[0].mxu0
  %v508 = vadd.f32 %v63, %v507
  %v509 = vpop.f32.mrb[0].mxu0
  %v510 = vadd.f32 %v63, %v509
  %511 = vdwg.mxu0
  %512 = vmatprep.subr.bf16.mxu0 %v191
  %513 = vmatpush1.bf16.msra.mxu0 %v190
  %514 = vmatprep.subr.bf16.mxu0 %v209
  %515 = vmatpush1.bf16.msra.mxu0 %v208
  %516 = vmatprep.subr.bf16.mxu0 0
  %517 = vmatpush1.bf16.msra.mxu0 0
  %518 = vmatprep.subr.bf16.mxu0 0
  %519 = vmatpush1.bf16.msra.mxu0 0
  %520 = vmatprep.subr.bf16.mxu0 0
  %521 = vmatpush1.bf16.msra.mxu0 0
  %522 = vmatprep.subr.bf16.mxu0 0
  %523 = vmatpush1.bf16.msra.mxu0 0
  %524 = vmatprep.subr.bf16.mxu0 0
  %525 = vmatpush1.bf16.msra.mxu0 0
  %526 = vmatprep.subr.bf16.mxu0 0
  %527 = vmatpush1.bf16.msra.mxu0 0
  %528 = vmatprep.subr.bf16.mxu0 0
  %529 = vmatpush1.bf16.msra.mxu0 0
  %530 = vmatprep.subr.bf16.mxu0 0
  %531 = vmatpush1.bf16.msra.mxu0 0
  %532 = vmatprep.subr.bf16.mxu0 0
  %533 = vmatpush1.bf16.msra.mxu0 0
  %534 = vmatprep.subr.bf16.mxu0 0
  %535 = vmatpush1.bf16.msra.mxu0 0
  %536 = vmatprep.subr.bf16.mxu0 0
  %537 = vmatpush1.bf16.msra.mxu0 0
  %538 = vmatprep.subr.bf16.mxu0 0
  %539 = vmatpush1.bf16.msra.mxu0 0
  %540 = vmatprep.subr.bf16.mxu0 0
  %541 = vmatpush1.bf16.msra.mxu0 0
  %542 = vmatprep.subr.bf16.mxu0 0
  %543 = vmatpush1.bf16.msra.mxu0 0
  %544 = vmatprep.mubr.bf16.mxu0 0
  %545 = vmatmul.mubr.bf16.gmra.mrb[0].mxu0 %v252
  %v546 = vpop.f32.mrb[0].mxu0
  %v547 = vadd.f32 %v58, %v546
  %v548 = vpop.f32.mrb[0].mxu0
  %v549 = vadd.f32 %v58, %v548
  %v550 = vpop.f32.mrb[0].mxu0
  %v551 = vadd.f32 %v63, %v550
  %v552 = vpop.f32.mrb[0].mxu0
  %v553 = vadd.f32 %v63, %v552
  %554 = vdwg.mxu0
  %555 = vmatprep.subr.bf16.mxu0 %v193
  %556 = vmatpush1.bf16.msra.mxu0 %v192
  %557 = vmatprep.subr.bf16.mxu0 %v211
  %558 = vmatpush1.bf16.msra.mxu0 %v210
  %559 = vmatprep.subr.bf16.mxu0 0
  %560 = vmatpush1.bf16.msra.mxu0 0
  %561 = vmatprep.subr.bf16.mxu0 0
  %562 = vmatpush1.bf16.msra.mxu0 0
  %563 = vmatprep.subr.bf16.mxu0 0
  %564 = vmatpush1.bf16.msra.mxu0 0
  %565 = vmatprep.subr.bf16.mxu0 0
  %566 = vmatpush1.bf16.msra.mxu0 0
  %567 = vmatprep.subr.bf16.mxu0 0
  %568 = vmatpush1.bf16.msra.mxu0 0
  %569 = vmatprep.subr.bf16.mxu0 0
  %570 = vmatpush1.bf16.msra.mxu0 0
  %571 = vmatprep.subr.bf16.mxu0 0
  %572 = vmatpush1.bf16.msra.mxu0 0
  %573 = vmatprep.subr.bf16.mxu0 0
  %574 = vmatpush1.bf16.msra.mxu0 0
  %575 = vmatprep.subr.bf16.mxu0 0
  %576 = vmatpush1.bf16.msra.mxu0 0
  %577 = vmatprep.subr.bf16.mxu0 0
  %578 = vmatpush1.bf16.msra.mxu0 0
  %579 = vmatprep.subr.bf16.mxu0 0
  %580 = vmatpush1.bf16.msra.mxu0 0
  %581 = vmatprep.subr.bf16.mxu0 0
  %582 = vmatpush1.bf16.msra.mxu0 0
  %583 = vmatprep.subr.bf16.mxu0 0
  %584 = vmatpush1.bf16.msra.mxu0 0
  %585 = vmatprep.subr.bf16.mxu0 0
  %586 = vmatpush1.bf16.msra.mxu0 0
  %587 = vmatprep.mubr.bf16.mxu0 0
  %588 = vmatmul.mubr.bf16.gmra.mrb[0].mxu0 %v252
  %v589 = vpop.f32.mrb[0].mxu0
  %v590 = vadd.f32 %v58, %v589
  %v591 = vpop.f32.mrb[0].mxu0
  %v592 = vadd.f32 %v58, %v591
  %v593 = vpop.f32.mrb[0].mxu0
  %v594 = vadd.f32 %v63, %v593
  %v595 = vpop.f32.mrb[0].mxu0
  %v596 = vadd.f32 %v63, %v595
  %597 = vdwg.mxu0
  %598 = vmatprep.subr.bf16.mxu0 %v195
  %599 = vmatpush1.bf16.msra.mxu0 %v194
  %600 = vmatprep.subr.bf16.mxu0 %v213
  %601 = vmatpush1.bf16.msra.mxu0 %v212
  %602 = vmatprep.subr.bf16.mxu0 0
  %603 = vmatpush1.bf16.msra.mxu0 0
  %604 = vmatprep.subr.bf16.mxu0 0
  %605 = vmatpush1.bf16.msra.mxu0 0
  %606 = vmatprep.subr.bf16.mxu0 0
  %607 = vmatpush1.bf16.msra.mxu0 0
  %608 = vmatprep.subr.bf16.mxu0 0
  %609 = vmatpush1.bf16.msra.mxu0 0
  %610 = vmatprep.subr.bf16.mxu0 0
  %611 = vmatpush1.bf16.msra.mxu0 0
  %612 = vmatprep.subr.bf16.mxu0 0
  %613 = vmatpush1.bf16.msra.mxu0 0
  %614 = vmatprep.subr.bf16.mxu0 0
  %615 = vmatpush1.bf16.msra.mxu0 0
  %616 = vmatprep.subr.bf16.mxu0 0
  %617 = vmatpush1.bf16.msra.mxu0 0
  %618 = vmatprep.subr.bf16.mxu0 0
  %619 = vmatpush1.bf16.msra.mxu0 0
  %620 = vmatprep.subr.bf16.mxu0 0
  %621 = vmatpush1.bf16.msra.mxu0 0
  %622 = vmatprep.subr.bf16.mxu0 0
  %623 = vmatpush1.bf16.msra.mxu0 0
  %624 = vmatprep.subr.bf16.mxu0 0
  %625 = vmatpush1.bf16.msra.mxu0 0
  %626 = vmatprep.subr.bf16.mxu0 0
  %627 = vmatpush1.bf16.msra.mxu0 0
  %628 = vmatprep.subr.bf16.mxu0 0
  %629 = vmatpush1.bf16.msra.mxu0 0
  %630 = vmatprep.mubr.bf16.mxu0 0
  %631 = vmatmul.mubr.bf16.gmra.mrb[0].mxu0 %v252
  %v632 = vpop.f32.mrb[0].mxu0
  %v633 = vadd.f32 %v58, %v632
  %v634 = vpop.f32.mrb[0].mxu0
  %v635 = vadd.f32 %v58, %v634
  %v636 = vpop.f32.mrb[0].mxu0
  %v637 = vadd.f32 %v63, %v636
  %v638 = vpop.f32.mrb[0].mxu0
  %v639 = vadd.f32 %v63, %v638
  %640 = vdwg.mxu0
  %v641 = vtanh.pop %v289
  %v642 = vtanh.pop %v291
  %v643 = vtanh.pop %v332
  %v644 = vtanh.pop %v334
  %v645 = vtanh.pop %v375
  %v646 = vtanh.pop %v377
  %v647 = vtanh.pop %v418
  %v648 = vtanh.pop %v420
  %v649 = vtanh.pop %v461
  %v650 = vtanh.pop %v463
  %v651 = vtanh.pop %v504
  %v652 = vtanh.pop %v506
  %v653 = vtanh.pop %v547
  %v654 = vtanh.pop %v549
  %v655 = vtanh.pop %v590
  %v656 = vtanh.pop %v592
  %v657 = vtanh.pop %v633
  %v658 = vtanh.pop %v635
  %v659 = vtanh.pop %v293
  %v660 = vtanh.pop %v295
  %v661 = vtanh.pop %v336
  %v662 = vtanh.pop %v338
  %v663 = vtanh.pop %v379
  %v664 = vtanh.pop %v381
  %v665 = vtanh.pop %v422
  %v666 = vtanh.pop %v424
  %v667 = vtanh.pop %v465
  %v668 = vtanh.pop %v467
  %v669 = vtanh.pop %v508
  %v670 = vtanh.pop %v510
  %v671 = vtanh.pop %v551
  %v672 = vtanh.pop %v553
  %v673 = vtanh.pop %v594
  %v674 = vtanh.pop %v596
  %v675 = vtanh.pop %v637
  %v676 = vtanh.pop %v639
  %677 = vst [vmem:[%s3] sm:$0xff] %v641
  %678 = vst [vmem:[%s3 + $0x8] sm:$0xff] %v642
  %679 = vst [vmem:[%s3 + $0x10] sm:$0xff] %v643
  %680 = vst [vmem:[%s3 + $0x18] sm:$0xff] %v644
  %681 = vst [vmem:[%s3 + $0x20] sm:$0xff] %v645
  %682 = vst [vmem:[%s3 + $0x28] sm:$0xff] %v646
  %683 = vst [vmem:[%s3 + $0x30] sm:$0xff] %v647
  %684 = vst [vmem:[%s3 + $0x38] sm:$0xff] %v648
  %685 = vst [vmem:[%s3 + $0x40] sm:$0xff] %v649
  %686 = vst [vmem:[%s3 + $0x48] sm:$0xff] %v650
  %687 = vst [vmem:[%s3 + $0x50] sm:$0xff] %v651
  %688 = vst [vmem:[%s3 + $0x58] sm:$0xff] %v652
  %689 = vst [vmem:[%s3 + $0x60] sm:$0xff] %v653
  %690 = vst [vmem:[%s3 + $0x68] sm:$0xff] %v654
  %691 = vst [vmem:[%s3 + $0x70] sm:$0xff] %v655
  %692 = vst [vmem:[%s3 + $0x78] sm:$0xff] %v656
  %693 = vst [vmem:[%s3 + $0x80] sm:$0xff] %v657
  %694 = vst [vmem:[%s3 + $0x88] sm:$0xff] %v658
  %695 = vst [vmem:[%s3 + $0x90] sm:$0xf] %v659
  %696 = vst [vmem:[%s3 + $0x98] sm:$0xf] %v660
  %697 = vst [vmem:[%s3 + $0xa0] sm:$0xf] %v661
  %698 = vst [vmem:[%s3 + $0xa8] sm:$0xf] %v662
  %699 = vst [vmem:[%s3 + $0xb0] sm:$0xf] %v663
  %700 = vst [vmem:[%s3 + $0xb8] sm:$0xf] %v664
  %701 = vst [vmem:[%s3 + $0xc0] sm:$0xf] %v665
  %702 = vst [vmem:[%s3 + $0xc8] sm:$0xf] %v666
  %703 = vst [vmem:[%s3 + $0xd0] sm:$0xf] %v667
  %704 = vst [vmem:[%s3 + $0xd8] sm:$0xf] %v668
  %705 = vst [vmem:[%s3 + $0xe0] sm:$0xf] %v669
  %706 = vst [vmem:[%s3 + $0xe8] sm:$0xf] %v670
  %707 = vst [vmem:[%s3 + $0xf0] sm:$0xf] %v671
  %708 = vst [vmem:[%s3 + $0xf8] sm:$0xf] %v672
  %709 = vst [vmem:[%s3 + $0x100] sm:$0xf] %v673
  %710 = vst [vmem:[%s3 + $0x108] sm:$0xf] %v674
  %711 = vst [vmem:[%s3 + $0x110] sm:$0xf] %v675
  %712 = vst [vmem:[%s3 + $0x118] sm:$0xf] %v676
  // Predicated region
  $region14: #{generator_forward.9} parent=0 // pred_check
    _
  $region15: #{generator_forward.9} parent=0 // pred_check_branch
    %714 = sbr.rel (0) target = $region17
  $region16: #{generator_forward.9} parent=0 // pred_region
    _
  $region17: #{generator_forward.9} parent=0 // pred_fallthru
    _
  // Predicated region
  $region18: #{generator_forward.9} parent=0 // pred_check
    _
  $region19: #{generator_forward.9} parent=0 // pred_check_branch
    %716 = sbr.rel (0) target = $region21
  $region20: #{generator_forward.9} parent=0 // pred_region
    _
  $region21: #{generator_forward.9} parent=0 // pred_fallthru
    _

</llo_original>
